<compile_context>
chip_gen: v5e
topology: v5e:2x2
jax: 0.10.0
libtpu: 0.0.40
codegen_flags: <defaults>
</compile_context>

<pallas_src>
import functools

import jax
import jax.numpy as jnp
from jax.experimental import pallas as pl
from jax.experimental.pallas import tpu as pltpu


def _round_up(n, m):
    return (n + m - 1) // m * m


def _fused_mlp_kernel(x_ref, *refs, num_blocks):
    # refs layout: w_0..w_{L-1}, shift_0..shift_{L-1}, head_w, head_b, scores_ref, emb_ref
    w_refs = refs[:num_blocks]
    s_refs = refs[num_blocks:2 * num_blocks]
    hw_ref = refs[2 * num_blocks]
    hb_ref = refs[2 * num_blocks + 1]
    scores_ref = refs[2 * num_blocks + 2]
    emb_ref = refs[2 * num_blocks + 3]

    h = x_ref[...].astype(jnp.float32)
    for i in range(num_blocks):
        # MXU: bf16 x bf16 -> f32 accumulate; BN scale is already folded into the weights.
        y = jnp.dot(h.astype(jnp.bfloat16), w_refs[i][...],
                    preferred_element_type=jnp.float32)
        y = y + s_refs[i][...]            # f32 epilogue: BN shift
        if i < num_blocks - 1:            # last encoder block uses Identity (no ReLU)
            y = jnp.maximum(y, 0.0)
        h = y

    emb_ref[...] = h                      # embedding output (f32)

    # Classification head into a lane-dense padded slab (num_classes zero-padded to 128).
    scores = jnp.dot(h.astype(jnp.bfloat16), hw_ref[...],
                     preferred_element_type=jnp.float32) + hb_ref[...]
    scores_ref[...] = scores


def init_params(key, input_size, emb_size, num_classes):
    """Raw parameters mirroring the PyTorch module (eval mode)."""
    features = [input_size, 1024, 512, 256, emb_size]
    blocks = []
    for i in range(len(features) - 1):
        fin, fout = features[i], features[i + 1]
        key, kw, kg, kb, km, kv = jax.random.split(key, 6)
        blocks.append({
            # PyTorch Linear weight is (out, in); stored here as (in, out) for x @ W.
            "w": jax.random.normal(kw, (fin, fout), jnp.float32) / jnp.sqrt(fin),
            "gamma": jax.random.uniform(kg, (fout,), jnp.float32, 0.5, 1.5),
            "beta": jax.random.normal(kb, (fout,), jnp.float32) * 0.1,
            "running_mean": jax.random.normal(km, (fout,), jnp.float32) * 0.1,
            "running_var": jax.random.uniform(kv, (fout,), jnp.float32, 0.5, 1.5),
        })
    key, kw, kb = jax.random.split(key, 3)
    head_w = jax.random.normal(kw, (emb_size, num_classes), jnp.float32) / jnp.sqrt(emb_size)
    head_b = jax.random.normal(kb, (num_classes,), jnp.float32) * 0.1
    return {"blocks": blocks, "head_w": head_w, "head_b": head_b}


def fold_params(params, *, eps=1e-5):
    """Fold eval-mode BatchNorm into (bf16 weight, f32 shift); lane-pad the head to 128."""
    folded_w, folded_s = [], []
    for i, blk in enumerate(params["blocks"]):
        inv_std = 1.0 / jnp.sqrt(blk["running_var"] + eps)
        scale = blk["gamma"] * inv_std
        shift = blk["beta"] - blk["running_mean"] * scale
        w = blk["w"] * scale[None, :]
        if i == 0:  # pad input feature dim to a multiple of 128 (zero rows are harmless)
            din = w.shape[0]
            din_pad = _round_up(din, 128)
            if din_pad != din:
                w = jnp.pad(w, ((0, din_pad - din), (0, 0)))
        folded_w.append(w.astype(jnp.bfloat16))
        folded_s.append(shift.reshape(1, -1).astype(jnp.float32))

    emb_size, num_classes = params["head_w"].shape
    n_pad = _round_up(max(num_classes, 128), 128)
    head_w = jnp.zeros((emb_size, n_pad), jnp.float32).at[:, :num_classes].set(params["head_w"])
    head_b = jnp.zeros((1, n_pad), jnp.float32).at[:, :num_classes].set(params["head_b"])
    return {
        "w": tuple(folded_w),
        "shift": tuple(folded_s),
        "head_w": head_w.astype(jnp.bfloat16),
        "head_b": head_b,
    }


def mlp_forward(folded, x, *, num_classes, tile_m=128):
    """scores, emb = MLP(x) — single fused Pallas call, gridded over batch."""
    x = x.astype(jnp.float32)                 # x.float() in the reference
    B, D = x.shape
    num_blocks = len(folded["w"])
    din_pad = folded["w"][0].shape[0]
    emb_size = folded["w"][-1].shape[1]
    n_pad = folded["head_w"].shape[1]

    tm = min(tile_m, _round_up(B, 8))         # batch tile (multiple of 8 sublanes)
    b_pad = _round_up(B, tm)
    if din_pad != D or b_pad != B:
        x = jnp.pad(x, ((0, b_pad - B), (0, din_pad - D)))

    grid = (b_pad // tm,)

    in_specs = [pl.BlockSpec((tm, din_pad), lambda i: (i, 0))]
    # Weights / shifts: whole array as a single block with constant index_map
    # -> loaded once, VMEM-resident across batch tiles.
    for w in folded["w"]:
        in_specs.append(pl.BlockSpec(w.shape, lambda i: (0, 0)))
    for s in folded["shift"]:
        in_specs.append(pl.BlockSpec(s.shape, lambda i: (0, 0)))
    in_specs.append(pl.BlockSpec(folded["head_w"].shape, lambda i: (0, 0)))
    in_specs.append(pl.BlockSpec(folded["head_b"].shape, lambda i: (0, 0)))

    out_shapes = (
        jax.ShapeDtypeStruct((b_pad, n_pad), jnp.float32),     # lane-dense padded scores
        jax.ShapeDtypeStruct((b_pad, emb_size), jnp.float32),  # embedding
    )
    out_specs = (
        pl.BlockSpec((tm, n_pad), lambda i: (i, 0)),
        pl.BlockSpec((tm, emb_size), lambda i: (i, 0)),
    )

    kernel = functools.partial(_fused_mlp_kernel, num_blocks=num_blocks)
    scores_pad, emb_pad = pl.pallas_call(
        kernel,
        grid=grid,
        in_specs=in_specs,
        out_specs=out_specs,
        out_shape=out_shapes,
        compiler_params=pltpu.CompilerParams(dimension_semantics=("parallel",)),
    )(x, *folded["w"], *folded["shift"], folded["head_w"], folded["head_b"])

    return scores_pad[:B, :num_classes], emb_pad[:B]


def mlp_reference(params, x, *, eps=1e-5):
    """Pure-JAX f32 reference of the PyTorch module in eval mode."""
    h = x.astype(jnp.float32)
    n = len(params["blocks"])
    for i, blk in enumerate(params["blocks"]):
        h = h @ blk["w"]
        inv_std = 1.0 / jnp.sqrt(blk["running_var"] + eps)
        h = (h - blk["running_mean"]) * inv_std * blk["gamma"] + blk["beta"]
        if i < n - 1:
            h = jnp.maximum(h, 0.0)
    emb = h
    scores = emb @ params["head_w"] + params["head_b"]
    return scores, emb


if __name__ == "__main__":
    INPUT_SIZE = 256   # stand-in for config.INPUT_SIZE
    EMB_SIZE = 128
    NUM_CLASSES = 10
    BATCH = 8

    key = jax.random.PRNGKey(0)
    key, kparams, kx = jax.random.split(key, 3)
    params = init_params(kparams, INPUT_SIZE, EMB_SIZE, NUM_CLASSES)
    x = jax.random.normal(kx, (BATCH, INPUT_SIZE), jnp.float32)

    folded = fold_params(params)                                  # one-time, outside jit
    fwd = jax.jit(functools.partial(mlp_forward, num_classes=NUM_CLASSES))
    scores, emb = fwd(folded, x)
    jax.block_until_ready((scores, emb))

    assert scores.shape == (BATCH, NUM_CLASSES)
    assert emb.shape == (BATCH, EMB_SIZE)
    assert bool(jnp.all(jnp.isfinite(scores))) and bool(jnp.all(jnp.isfinite(emb)))

    # Loose-tolerance check vs. the f32 reference (kernel matmuls run in bf16 / f32 acc).
    scores_ref, emb_ref = mlp_reference(params, x)
    assert jnp.allclose(scores, scores_ref, atol=0.25, rtol=0.05), \
        float(jnp.max(jnp.abs(scores - scores_ref)))
    assert jnp.allclose(emb, emb_ref, atol=0.25, rtol=0.05), \
        float(jnp.max(jnp.abs(emb - emb_ref)))

    print("KERNEL_OK")
</pallas_src>

<mosaic_0001>
module attributes {stable_mosaic.version = 11 : i64} {
  func.func @_fused_mlp_kernel(%arg0: i32, %arg1: memref<8x256xf32, #tpu.memory_space<vmem>>, %arg2: memref<256x1024xbf16, #tpu.memory_space<vmem>>, %arg3: memref<1024x512xbf16, #tpu.memory_space<vmem>>, %arg4: memref<512x256xbf16, #tpu.memory_space<vmem>>, %arg5: memref<256x128xbf16, #tpu.memory_space<vmem>>, %arg6: memref<1x1024xf32, #tpu.memory_space<vmem>>, %arg7: memref<1x512xf32, #tpu.memory_space<vmem>>, %arg8: memref<1x256xf32, #tpu.memory_space<vmem>>, %arg9: memref<1x128xf32, #tpu.memory_space<vmem>>, %arg10: memref<128x128xbf16, #tpu.memory_space<vmem>>, %arg11: memref<1x128xf32, #tpu.memory_space<vmem>>, %arg12: memref<8x128xf32, #tpu.memory_space<vmem>>, %arg13: memref<8x128xf32, #tpu.memory_space<vmem>>) attributes {dimension_semantics = [#tpu.dimension_semantics<parallel>], iteration_bounds = array<i64: 1>, scalar_prefetch = 0 : i64, scratch_operands = 0 : i64, tpu.core_type = #tpu.core_type<tc>, window_params = [{transform_indices = @transform_0, window_bounds = array<i64: 8, 256>}, {pipeline_mode = #tpu.pipeline_mode<synchronous>, transform_indices = @transform_1, window_bounds = array<i64: 256, 1024>}, {pipeline_mode = #tpu.pipeline_mode<synchronous>, transform_indices = @transform_2, window_bounds = array<i64: 1024, 512>}, {pipeline_mode = #tpu.pipeline_mode<synchronous>, transform_indices = @transform_3, window_bounds = array<i64: 512, 256>}, {pipeline_mode = #tpu.pipeline_mode<synchronous>, transform_indices = @transform_4, window_bounds = array<i64: 256, 128>}, {pipeline_mode = #tpu.pipeline_mode<synchronous>, transform_indices = @transform_5, window_bounds = array<i64: 1, 1024>}, {pipeline_mode = #tpu.pipeline_mode<synchronous>, transform_indices = @transform_6, window_bounds = array<i64: 1, 512>}, {pipeline_mode = #tpu.pipeline_mode<synchronous>, transform_indices = @transform_7, window_bounds = array<i64: 1, 256>}, {pipeline_mode = #tpu.pipeline_mode<synchronous>, transform_indices = @transform_8, window_bounds = array<i64: 1, 128>}, {pipeline_mode = #tpu.pipeline_mode<synchronous>, transform_indices = @transform_9, window_bounds = array<i64: 128, 128>}, {pipeline_mode = #tpu.pipeline_mode<synchronous>, transform_indices = @transform_10, window_bounds = array<i64: 1, 128>}, {transform_indices = @transform_11, window_bounds = array<i64: 8, 128>}, {transform_indices = @transform_12, window_bounds = array<i64: 8, 128>}]} {
    %c0 = arith.constant 0 : index
    %c0_0 = arith.constant 0 : index
    %0 = vector.load %arg1[%c0, %c0_0] : memref<8x256xf32, #tpu.memory_space<vmem>>, vector<8x256xf32>
    %1 = arith.truncf %0 : vector<8x256xf32> to vector<8x256xbf16>
    %c0_1 = arith.constant 0 : index
    %c0_2 = arith.constant 0 : index
    %2 = vector.load %arg2[%c0_1, %c0_2] : memref<256x1024xbf16, #tpu.memory_space<vmem>>, vector<256x1024xbf16>
    %cst = arith.constant dense<0.000000e+00> : vector<8x1024xf32>
    %3 = tpu.matmul %1, %2, %cst {dimension_numbers = #tpu.dot_dimension_numbers<[1], [0], [0], [1], [0, 0, 1, 1], [], []>} : vector<8x256xbf16>, vector<256x1024xbf16>, vector<8x1024xf32> -> vector<8x1024xf32>
    %c0_3 = arith.constant 0 : index
    %c0_4 = arith.constant 0 : index
    %4 = vector.load %arg6[%c0_3, %c0_4] : memref<1x1024xf32, #tpu.memory_space<vmem>>, vector<1x1024xf32>
    %5 = vector.broadcast %4 : vector<1x1024xf32> to vector<8x1024xf32>
    %6 = arith.addf %3, %5 : vector<8x1024xf32>
    %cst_5 = arith.constant 0.000000e+00 : f32
    %7 = vector.broadcast %cst_5 : f32 to vector<8x1024xf32>
    %8 = arith.maximumf %6, %7 : vector<8x1024xf32>
    %9 = arith.truncf %8 : vector<8x1024xf32> to vector<8x1024xbf16>
    %c0_6 = arith.constant 0 : index
    %c0_7 = arith.constant 0 : index
    %10 = vector.load %arg3[%c0_6, %c0_7] : memref<1024x512xbf16, #tpu.memory_space<vmem>>, vector<1024x512xbf16>
    %cst_8 = arith.constant dense<0.000000e+00> : vector<8x512xf32>
    %11 = tpu.matmul %9, %10, %cst_8 {dimension_numbers = #tpu.dot_dimension_numbers<[1], [0], [0], [1], [0, 0, 1, 1], [], []>} : vector<8x1024xbf16>, vector<1024x512xbf16>, vector<8x512xf32> -> vector<8x512xf32>
    %c0_9 = arith.constant 0 : index
    %c0_10 = arith.constant 0 : index
    %12 = vector.load %arg7[%c0_9, %c0_10] : memref<1x512xf32, #tpu.memory_space<vmem>>, vector<1x512xf32>
    %13 = vector.broadcast %12 : vector<1x512xf32> to vector<8x512xf32>
    %14 = arith.addf %11, %13 : vector<8x512xf32>
    %cst_11 = arith.constant 0.000000e+00 : f32
    %15 = vector.broadcast %cst_11 : f32 to vector<8x512xf32>
    %16 = arith.maximumf %14, %15 : vector<8x512xf32>
    %17 = arith.truncf %16 : vector<8x512xf32> to vector<8x512xbf16>
    %c0_12 = arith.constant 0 : index
    %c0_13 = arith.constant 0 : index
    %18 = vector.load %arg4[%c0_12, %c0_13] : memref<512x256xbf16, #tpu.memory_space<vmem>>, vector<512x256xbf16>
    %cst_14 = arith.constant dense<0.000000e+00> : vector<8x256xf32>
    %19 = tpu.matmul %17, %18, %cst_14 {dimension_numbers = #tpu.dot_dimension_numbers<[1], [0], [0], [1], [0, 0, 1, 1], [], []>} : vector<8x512xbf16>, vector<512x256xbf16>, vector<8x256xf32> -> vector<8x256xf32>
    %c0_15 = arith.constant 0 : index
    %c0_16 = arith.constant 0 : index
    %20 = vector.load %arg8[%c0_15, %c0_16] : memref<1x256xf32, #tpu.memory_space<vmem>>, vector<1x256xf32>
    %21 = vector.broadcast %20 : vector<1x256xf32> to vector<8x256xf32>
    %22 = arith.addf %19, %21 : vector<8x256xf32>
    %cst_17 = arith.constant 0.000000e+00 : f32
    %23 = vector.broadcast %cst_17 : f32 to vector<8x256xf32>
    %24 = arith.maximumf %22, %23 : vector<8x256xf32>
    %25 = arith.truncf %24 : vector<8x256xf32> to vector<8x256xbf16>
    %c0_18 = arith.constant 0 : index
    %c0_19 = arith.constant 0 : index
    %26 = vector.load %arg5[%c0_18, %c0_19] : memref<256x128xbf16, #tpu.memory_space<vmem>>, vector<256x128xbf16>
    %cst_20 = arith.constant dense<0.000000e+00> : vector<8x128xf32>
    %27 = tpu.matmul %25, %26, %cst_20 {dimension_numbers = #tpu.dot_dimension_numbers<[1], [0], [0], [1], [0, 0, 1, 1], [], []>} : vector<8x256xbf16>, vector<256x128xbf16>, vector<8x128xf32> -> vector<8x128xf32>
    %c0_21 = arith.constant 0 : index
    %c0_22 = arith.constant 0 : index
    %28 = vector.load %arg9[%c0_21, %c0_22] : memref<1x128xf32, #tpu.memory_space<vmem>>, vector<1x128xf32>
    %29 = vector.broadcast %28 : vector<1x128xf32> to vector<8x128xf32>
    %30 = arith.addf %27, %29 : vector<8x128xf32>
    %c0_23 = arith.constant 0 : index
    %c0_24 = arith.constant 0 : index
    %31 = vector.load %arg13[%c0_23, %c0_24] : memref<8x128xf32, #tpu.memory_space<vmem>>, vector<8x128xf32>
    tpu.vector_store %arg13[%c0_23, %c0_24], %30 {strides = array<i32>} : memref<8x128xf32, #tpu.memory_space<vmem>>, vector<8x128xf32>,
    %32 = arith.truncf %30 : vector<8x128xf32> to vector<8x128xbf16>
    %c0_25 = arith.constant 0 : index
    %c0_26 = arith.constant 0 : index
    %33 = vector.load %arg10[%c0_25, %c0_26] : memref<128x128xbf16, #tpu.memory_space<vmem>>, vector<128x128xbf16>
    %cst_27 = arith.constant dense<0.000000e+00> : vector<8x128xf32>
    %34 = tpu.matmul %32, %33, %cst_27 {dimension_numbers = #tpu.dot_dimension_numbers<[1], [0], [0], [1], [0, 0, 1, 1], [], []>} : vector<8x128xbf16>, vector<128x128xbf16>, vector<8x128xf32> -> vector<8x128xf32>
    %c0_28 = arith.constant 0 : index
    %c0_29 = arith.constant 0 : index
    %35 = vector.load %arg11[%c0_28, %c0_29] : memref<1x128xf32, #tpu.memory_space<vmem>>, vector<1x128xf32>
    %36 = vector.broadcast %35 : vector<1x128xf32> to vector<8x128xf32>
    %37 = arith.addf %34, %36 : vector<8x128xf32>
    %c0_30 = arith.constant 0 : index
    %c0_31 = arith.constant 0 : index
    %38 = vector.load %arg12[%c0_30, %c0_31] : memref<8x128xf32, #tpu.memory_space<vmem>>, vector<8x128xf32>
    tpu.vector_store %arg12[%c0_30, %c0_31], %37 {strides = array<i32>} : memref<8x128xf32, #tpu.memory_space<vmem>>, vector<8x128xf32>,
    return
  }
  func.func @transform_0(%arg0: i32) -> (i32, i32) {
    %c0_i32 = arith.constant 0 : i32
    %c0_i32_0 = arith.constant 0 : i32
    return %arg0, %c0_i32 : i32, i32
  }
  func.func @transform_1(%arg0: i32) -> (i32, i32) {
    %c0_i32 = arith.constant 0 : i32
    %c0_i32_0 = arith.constant 0 : i32
    %c0_i32_1 = arith.constant 0 : i32
    return %c0_i32, %c0_i32_0 : i32, i32
  }
  func.func @transform_2(%arg0: i32) -> (i32, i32) {
    %c0_i32 = arith.constant 0 : i32
    %c0_i32_0 = arith.constant 0 : i32
    %c0_i32_1 = arith.constant 0 : i32
    return %c0_i32, %c0_i32_0 : i32, i32
  }
  func.func @transform_3(%arg0: i32) -> (i32, i32) {
    %c0_i32 = arith.constant 0 : i32
    %c0_i32_0 = arith.constant 0 : i32
    %c0_i32_1 = arith.constant 0 : i32
    return %c0_i32, %c0_i32_0 : i32, i32
  }
  func.func @transform_4(%arg0: i32) -> (i32, i32) {
    %c0_i32 = arith.constant 0 : i32
    %c0_i32_0 = arith.constant 0 : i32
    %c0_i32_1 = arith.constant 0 : i32
    return %c0_i32, %c0_i32_0 : i32, i32
  }
  func.func @transform_5(%arg0: i32) -> (i32, i32) {
    %c0_i32 = arith.constant 0 : i32
    %c0_i32_0 = arith.constant 0 : i32
    %c0_i32_1 = arith.constant 0 : i32
    return %c0_i32, %c0_i32_0 : i32, i32
  }
  func.func @transform_6(%arg0: i32) -> (i32, i32) {
    %c0_i32 = arith.constant 0 : i32
    %c0_i32_0 = arith.constant 0 : i32
    %c0_i32_1 = arith.constant 0 : i32
    return %c0_i32, %c0_i32_0 : i32, i32
  }
  func.func @transform_7(%arg0: i32) -> (i32, i32) {
    %c0_i32 = arith.constant 0 : i32
    %c0_i32_0 = arith.constant 0 : i32
    %c0_i32_1 = arith.constant 0 : i32
    return %c0_i32, %c0_i32_0 : i32, i32
  }
  func.func @transform_8(%arg0: i32) -> (i32, i32) {
    %c0_i32 = arith.constant 0 : i32
    %c0_i32_0 = arith.constant 0 : i32
    %c0_i32_1 = arith.constant 0 : i32
    return %c0_i32, %c0_i32_0 : i32, i32
  }
  func.func @transform_9(%arg0: i32) -> (i32, i32) {
    %c0_i32 = arith.constant 0 : i32
    %c0_i32_0 = arith.constant 0 : i32
    %c0_i32_1 = arith.constant 0 : i32
    return %c0_i32, %c0_i32_0 : i32, i32
  }
  func.func @transform_10(%arg0: i32) -> (i32, i32) {
    %c0_i32 = arith.constant 0 : i32
    %c0_i32_0 = arith.constant 0 : i32
    %c0_i32_1 = arith.constant 0 : i32
    return %c0_i32, %c0_i32_0 : i32, i32
  }
  func.func @transform_11(%arg0: i32) -> (i32, i32) {
    %c0_i32 = arith.constant 0 : i32
    %c0_i32_0 = arith.constant 0 : i32
    return %arg0, %c0_i32 : i32, i32
  }
  func.func @transform_12(%arg0: i32) -> (i32, i32) {
    %c0_i32 = arith.constant 0 : i32
    %c0_i32_0 = arith.constant 0 : i32
    return %arg0, %c0_i32 : i32, i32
  }
}

</mosaic_0001>

<llo_original>
// kernel: mlp_forward.1
$region0: #{mlp_forward.1}
  #allocation0 [shape = 'u32[]', space=smem, size = 0x4, offset = 0x4, fixed_abs, tag = 'smem constant byte address 0x4 - core index']
  #allocation1 [shape = 'u32[72,128]{1,0:T(1,128)}', space=vmem, size = 0x9000, scoped, tag = 'internal scratch']
  %s0 = inlined_call_operand.hbm [shape: f32[8,256], index: 0, kind: input, shape index: {}]
  %s1 = inlined_call_operand.hbm [shape: bf16[256,1024], index: 1, kind: input, shape index: {}]
  %s2 = inlined_call_operand.hbm [shape: bf16[1024,512], index: 2, kind: input, shape index: {}]
  %s3 = inlined_call_operand.hbm [shape: bf16[512,256], index: 3, kind: input, shape index: {}]
  %s4 = inlined_call_operand.hbm [shape: bf16[256,128], index: 4, kind: input, shape index: {}]
  %s5 = inlined_call_operand.hbm [shape: f32[1,1024], index: 5, kind: input, shape index: {}]
  %s6 = inlined_call_operand.hbm [shape: f32[1,512], index: 6, kind: input, shape index: {}]
  %s7 = inlined_call_operand.vmem [shape: f32[1,256], index: 7, kind: input, shape index: {}]
  %s8 = inlined_call_operand.vmem [shape: f32[1,128], index: 8, kind: input, shape index: {}]
  %s9 = inlined_call_operand.hbm [shape: bf16[128,128], index: 9, kind: input, shape index: {}]
  %s10 = inlined_call_operand.hbm [shape: f32[1,128], index: 10, kind: input, shape index: {}]
  %s11 = inlined_call_operand.hbm [shape: f32[8,128], index: 11, kind: output, shape index: {0}]
  %s12 = inlined_call_operand.hbm [shape: f32[8,128], index: 12, kind: output, shape index: {1}]
  %13 = xla_tuple %s11, %s12
  %s14 = sld [smem:[#allocation0]]
  $region98: #{mlp_forward.1} parent=0
    _
  %s16 = ssub.s32 1, %s14
  %s17 = scalar_select 0, %s16, %s14
  $region1: #{mlp_forward.1} parent=0
    #allocation2 [shape = 'u8[8192]{0}', space=vmem, size = 0x2000, scoped, tag = 'input window, operand 0, single buffered']
    #allocation3 [shape = 's32[1]{0}', space=sflag, size = 0x4, scoped, tag = 'scoped memory for mlp_forward.1']
    #allocation4 [shape = 's32[1]{0}', space=sflag, size = 0x4, scoped, tag = 'scoped memory for mlp_forward.1']
    #allocation5 [shape = 'u8[524288]{0}', space=vmem, size = 0x80000, scoped, tag = 'input window, operand 1, single buffered']
    #allocation6 [shape = 's32[1]{0}', space=sflag, size = 0x4, scoped, tag = 'scoped memory for mlp_forward.1']
    #allocation7 [shape = 'u8[1048576]{0}', space=vmem, size = 0x100000, scoped, tag = 'input window, operand 2, single buffered']
    #allocation8 [shape = 'u8[262144]{0}', space=vmem, size = 0x40000, scoped, tag = 'input window, operand 3, single buffered']
    #allocation9 [shape = 's32[1]{0}', space=sflag, size = 0x4, scoped, tag = 'scoped memory for mlp_forward.1']
    #allocation10 [shape = 'u8[65536]{0}', space=vmem, size = 0x10000, scoped, tag = 'input window, operand 4, single buffered']
    #allocation11 [shape = 'u8[4096]{0}', space=vmem, size = 0x1000, scoped, tag = 'input window, operand 5, single buffered']
    #allocation12 [shape = 's32[1]{0}', space=sflag, size = 0x4, scoped, tag = 'scoped memory for mlp_forward.1']
    #allocation13 [shape = 'u8[2048]{0}', space=vmem, size = 0x800, scoped, tag = 'input window, operand 6, single buffered']
    #allocation14 [shape = 'u8[32768]{0}', space=vmem, size = 0x8000, scoped, tag = 'input window, operand 9, single buffered']
    #allocation15 [shape = 's32[1]{0}', space=sflag, size = 0x4, scoped, tag = 'scoped memory for mlp_forward.1']
    #allocation16 [shape = 'u8[512]{0}', space=vmem, size = 0x400, scoped, tag = 'input window, operand 10, single buffered']
    #allocation17 [shape = 'u8[4096]{0}', space=vmem, size = 0x1000, scoped, tag = 'output window, operand 0, single buffered']
    #allocation18 [shape = 'u8[4096]{0}', space=vmem, size = 0x1000, scoped, tag = 'output window, operand 1, single buffered']
    #allocation19 [shape = 's32[1]{0}', space=sflag, size = 0x4, scoped, tag = 'scoped memory for mlp_forward.1']
    %18 = vsyncpa [#allocation3], 0
    %19 = vsyncpa [#allocation6], 0
    %20 = vsyncpa [#allocation9], 0
    %21 = vsyncpa [#allocation12], 0
    %22 = vsyncpa [#allocation15], 0
    %23 = vsyncpa [#allocation4], 0
    %24 = vsyncpa [#allocation19], 0
    // Predicated region
    $region2: #{mlp_forward.1} parent=1 // pred_check
      _
    $region3: #{mlp_forward.1} parent=1 // pred_check_branch
      %26 = sbr.rel (0) target = $region5
    $region4: #{mlp_forward.1} parent=1 // pred_region
      %28 = vsyncadd [#allocation3], 0
      %s30 = sshll.u32 %s0, 4
      %s31 = int_to_ptr.hbm [resolvable:$true] %s30
      %s32 = sshll.u32 [#allocation2], 4
      %s33 = int_to_ptr.vmem [resolvable:$true] %s32
      %35 = dma.hbm_to_vmem [thread:$0]  %s31, 256, %s33, [#allocation3]
    $region5: #{mlp_forward.1} parent=1 // pred_fallthru
      _
    // Predicated region
    $region6: #{mlp_forward.1} parent=1 // pred_check
      _
    $region7: #{mlp_forward.1} parent=1 // pred_check_branch
      %37 = sbr.rel (0) target = $region9
    $region8: #{mlp_forward.1} parent=1 // pred_region
      %39 = vsyncadd [#allocation6], 0
      %s40 = sshll.u32 %s1, 4
      %s41 = int_to_ptr.hbm [resolvable:$true] %s40
      %s42 = sshll.u32 [#allocation5], 4
      %s43 = int_to_ptr.vmem [resolvable:$true] %s42
      %48 = dma.hbm_to_vmem [thread:$0]  %s41, 16384, %s43, [#allocation6], 512, 512, 32
    $region9: #{mlp_forward.1} parent=1 // pred_fallthru
      _
    // Predicated region
    $region10: #{mlp_forward.1} parent=1 // pred_check
      _
    $region11: #{mlp_forward.1} parent=1 // pred_check_branch
      %50 = sbr.rel (0) target = $region13
    $region12: #{mlp_forward.1} parent=1 // pred_region
      %52 = vsyncadd [#allocation6], 0
      %s53 = sshll.u32 %s2, 4
      %s54 = int_to_ptr.hbm [resolvable:$true] %s53
      %s55 = sshll.u32 [#allocation7], 4
      %s56 = int_to_ptr.vmem [resolvable:$true] %s55
      %61 = dma.hbm_to_vmem [thread:$0]  %s54, 32768, %s56, [#allocation6], 256, 256, 16
    $region13: #{mlp_forward.1} parent=1 // pred_fallthru
      _
    // Predicated region
    $region14: #{mlp_forward.1} parent=1 // pred_check
      _
    $region15: #{mlp_forward.1} parent=1 // pred_check_branch
      %63 = sbr.rel (0) target = $region17
    $region16: #{mlp_forward.1} parent=1 // pred_region
      %65 = vsyncadd [#allocation9], 0
      %s66 = sshll.u32 %s3, 4
      %s67 = int_to_ptr.hbm [resolvable:$true] %s66
      %s68 = sshll.u32 [#allocation8], 4
      %s69 = int_to_ptr.vmem [resolvable:$true] %s68
      %74 = dma.hbm_to_vmem [thread:$0]  %s67, 8192, %s69, [#allocation9], 128, 128, 8
    $region17: #{mlp_forward.1} parent=1 // pred_fallthru
      _
    // Predicated region
    $region18: #{mlp_forward.1} parent=1 // pred_check
      _
    $region19: #{mlp_forward.1} parent=1 // pred_check_branch
      %76 = sbr.rel (0) target = $region21
    $region20: #{mlp_forward.1} parent=1 // pred_region
      %78 = vsyncadd [#allocation9], 0
      %s79 = sshll.u32 %s4, 4
      %s80 = int_to_ptr.hbm [resolvable:$true] %s79
      %s81 = sshll.u32 [#allocation10], 4
      %s82 = int_to_ptr.vmem [resolvable:$true] %s81
      %87 = dma.hbm_to_vmem [thread:$0]  %s80, 2048, %s82, [#allocation9], 64, 64, 4
    $region21: #{mlp_forward.1} parent=1 // pred_fallthru
      _
    // Predicated region
    $region22: #{mlp_forward.1} parent=1 // pred_check
      _
    $region23: #{mlp_forward.1} parent=1 // pred_check_branch
      %89 = sbr.rel (0) target = $region25
    $region24: #{mlp_forward.1} parent=1 // pred_region
      %91 = vsyncadd [#allocation12], 0
      %s93 = sshll.u32 %s5, 4
      %s94 = int_to_ptr.hbm [resolvable:$true] %s93
      %s95 = sshll.u32 [#allocation11], 4
      %s96 = int_to_ptr.vmem [resolvable:$true] %s95
      %98 = dma.hbm_to_vmem [thread:$0]  %s94, 128, %s96, [#allocation12]
    $region25: #{mlp_forward.1} parent=1 // pred_fallthru
      _
    // Predicated region
    $region26: #{mlp_forward.1} parent=1 // pred_check
      _
    $region27: #{mlp_forward.1} parent=1 // pred_check_branch
      %100 = sbr.rel (0) target = $region29
    $region28: #{mlp_forward.1} parent=1 // pred_region
      %102 = vsyncadd [#allocation12], 0
      %s104 = sshll.u32 %s6, 4
      %s105 = int_to_ptr.hbm [resolvable:$true] %s104
      %s106 = sshll.u32 [#allocation13], 4
      %s107 = int_to_ptr.vmem [resolvable:$true] %s106
      %109 = dma.hbm_to_vmem [thread:$0]  %s105, 64, %s107, [#allocation12]
    $region29: #{mlp_forward.1} parent=1 // pred_fallthru
      _
    // Predicated region
    $region30: #{mlp_forward.1} parent=1 // pred_check
      _
    $region31: #{mlp_forward.1} parent=1 // pred_check_branch
      %111 = sbr.rel (0) target = $region33
    $region32: #{mlp_forward.1} parent=1 // pred_region
      _
    $region33: #{mlp_forward.1} parent=1 // pred_fallthru
      _
    // Predicated region
    $region34: #{mlp_forward.1} parent=1 // pred_check
      _
    $region35: #{mlp_forward.1} parent=1 // pred_check_branch
      %113 = sbr.rel (0) target = $region37
    $region36: #{mlp_forward.1} parent=1 // pred_region
      _
    $region37: #{mlp_forward.1} parent=1 // pred_fallthru
      _
    // Predicated region
    $region38: #{mlp_forward.1} parent=1 // pred_check
      _
    $region39: #{mlp_forward.1} parent=1 // pred_check_branch
      %115 = sbr.rel (0) target = $region41
    $region40: #{mlp_forward.1} parent=1 // pred_region
      %117 = vsyncadd [#allocation15], 0
      %s118 = sshll.u32 %s9, 4
      %s119 = int_to_ptr.hbm [resolvable:$true] %s118
      %s120 = sshll.u32 [#allocation14], 4
      %s121 = int_to_ptr.vmem [resolvable:$true] %s120
      %126 = dma.hbm_to_vmem [thread:$0]  %s119, 1024, %s121, [#allocation15], 64, 64, 4
    $region41: #{mlp_forward.1} parent=1 // pred_fallthru
      _
    // Predicated region
    $region42: #{mlp_forward.1} parent=1 // pred_check
      _
    $region43: #{mlp_forward.1} parent=1 // pred_check_branch
      %128 = sbr.rel (0) target = $region45
    $region44: #{mlp_forward.1} parent=1 // pred_region
      %130 = vsyncadd [#allocation15], 0
      %s132 = sshll.u32 %s10, 4
      %s133 = int_to_ptr.hbm [resolvable:$true] %s132
      %s134 = sshll.u32 [#allocation16], 4
      %s135 = int_to_ptr.vmem [resolvable:$true] %s134
      %137 = dma.hbm_to_vmem [thread:$0]  %s133, 16, %s135, [#allocation15]
    $region45: #{mlp_forward.1} parent=1 // pred_fallthru
      _
    // Predicated region
    $region46: #{mlp_forward.1} parent=1 // pred_check
      _
    $region47: #{mlp_forward.1} parent=1 // pred_check_branch
      %139 = sbr.rel (0) target = $region49
    $region48: #{mlp_forward.1} parent=1 // pred_region
      %141 = dma.done [#allocation3], 256
    $region49: #{mlp_forward.1} parent=1 // pred_fallthru
      _
    // Predicated region
    $region50: #{mlp_forward.1} parent=1 // pred_check
      _
    $region51: #{mlp_forward.1} parent=1 // pred_check_branch
      %143 = sbr.rel (0) target = $region53
    $region52: #{mlp_forward.1} parent=1 // pred_region
      %145 = dma.done [#allocation6], 16384
    $region53: #{mlp_forward.1} parent=1 // pred_fallthru
      _
    // Predicated region
    $region54: #{mlp_forward.1} parent=1 // pred_check
      _
    $region55: #{mlp_forward.1} parent=1 // pred_check_branch
      %147 = sbr.rel (0) target = $region57
    $region56: #{mlp_forward.1} parent=1 // pred_region
      %149 = dma.done [#allocation6], 32768
    $region57: #{mlp_forward.1} parent=1 // pred_fallthru
      _
    // Predicated region
    $region58: #{mlp_forward.1} parent=1 // pred_check
      _
    $region59: #{mlp_forward.1} parent=1 // pred_check_branch
      %151 = sbr.rel (0) target = $region61
    $region60: #{mlp_forward.1} parent=1 // pred_region
      %153 = dma.done [#allocation9], 8192
    $region61: #{mlp_forward.1} parent=1 // pred_fallthru
      _
    // Predicated region
    $region62: #{mlp_forward.1} parent=1 // pred_check
      _
    $region63: #{mlp_forward.1} parent=1 // pred_check_branch
      %155 = sbr.rel (0) target = $region65
    $region64: #{mlp_forward.1} parent=1 // pred_region
      %157 = dma.done [#allocation9], 2048
    $region65: #{mlp_forward.1} parent=1 // pred_fallthru
      _
    // Predicated region
    $region66: #{mlp_forward.1} parent=1 // pred_check
      _
    $region67: #{mlp_forward.1} parent=1 // pred_check_branch
      %159 = sbr.rel (0) target = $region69
    $region68: #{mlp_forward.1} parent=1 // pred_region
      %161 = dma.done [#allocation12], 128
    $region69: #{mlp_forward.1} parent=1 // pred_fallthru
      _
    // Predicated region
    $region70: #{mlp_forward.1} parent=1 // pred_check
      _
    $region71: #{mlp_forward.1} parent=1 // pred_check_branch
      %163 = sbr.rel (0) target = $region73
    $region72: #{mlp_forward.1} parent=1 // pred_region
      %165 = dma.done [#allocation12], 64
    $region73: #{mlp_forward.1} parent=1 // pred_fallthru
      _
    // Predicated region
    $region74: #{mlp_forward.1} parent=1 // pred_check
      _
    $region75: #{mlp_forward.1} parent=1 // pred_check_branch
      %167 = sbr.rel (0) target = $region77
    $region76: #{mlp_forward.1} parent=1 // pred_region
      %169 = dma.done [#allocation15], 1024
    $region77: #{mlp_forward.1} parent=1 // pred_fallthru
      _
    // Predicated region
    $region78: #{mlp_forward.1} parent=1 // pred_check
      _
    $region79: #{mlp_forward.1} parent=1 // pred_check_branch
      %171 = sbr.rel (0) target = $region81
    $region80: #{mlp_forward.1} parent=1 // pred_region
      %173 = dma.done [#allocation15], 16
    $region81: #{mlp_forward.1} parent=1 // pred_fallthru
      _
    %v174 = vld [vmem:[#allocation2] sm:$0xff]
    %v175 = vld [vmem:[#allocation2 + $0x8] sm:$0xff]
    %v176 = vpack.c.bf16 %v174, %v174
    %v177 = vpack.c.bf16 %v175, %v175
    %v178 = vld [vmem:[#allocation5] sm:$0xff]
    %v179 = vld [vmem:[#allocation5 + $0x8] sm:$0xff]
    %v180 = vld [vmem:[#allocation5 + $0x10] sm:$0xff]
    %v181 = vld [vmem:[#allocation5 + $0x18] sm:$0xff]
    %v182 = vld [vmem:[#allocation5 + $0x20] sm:$0xff]
    %v183 = vld [vmem:[#allocation5 + $0x28] sm:$0xff]
    %v184 = vld [vmem:[#allocation5 + $0x30] sm:$0xff]
    %v185 = vld [vmem:[#allocation5 + $0x38] sm:$0xff]
    %v186 = vld [vmem:[#allocation5 + $0x40] sm:$0xff]
    %v187 = vld [vmem:[#allocation5 + $0x48] sm:$0xff]
    %v188 = vld [vmem:[#allocation5 + $0x50] sm:$0xff]
    %v189 = vld [vmem:[#allocation5 + $0x58] sm:$0xff]
    %v190 = vld [vmem:[#allocation5 + $0x60] sm:$0xff]
    %v191 = vld [vmem:[#allocation5 + $0x68] sm:$0xff]
    %v192 = vld [vmem:[#allocation5 + $0x70] sm:$0xff]
    %v193 = vld [vmem:[#allocation5 + $0x78] sm:$0xff]
    %v194 = vld [vmem:[#allocation5 + $0x80] sm:$0xff]
    %v195 = vld [vmem:[#allocation5 + $0x88] sm:$0xff]
    %v196 = vld [vmem:[#allocation5 + $0x90] sm:$0xff]
    %v197 = vld [vmem:[#allocation5 + $0x98] sm:$0xff]
    %v198 = vld [vmem:[#allocation5 + $0xa0] sm:$0xff]
    %v199 = vld [vmem:[#allocation5 + $0xa8] sm:$0xff]
    %v200 = vld [vmem:[#allocation5 + $0xb0] sm:$0xff]
    %v201 = vld [vmem:[#allocation5 + $0xb8] sm:$0xff]
    %v202 = vld [vmem:[#allocation5 + $0xc0] sm:$0xff]
    %v203 = vld [vmem:[#allocation5 + $0xc8] sm:$0xff]
    %v204 = vld [vmem:[#allocation5 + $0xd0] sm:$0xff]
    %v205 = vld [vmem:[#allocation5 + $0xd8] sm:$0xff]
    %v206 = vld [vmem:[#allocation5 + $0xe0] sm:$0xff]
    %v207 = vld [vmem:[#allocation5 + $0xe8] sm:$0xff]
    %v208 = vld [vmem:[#allocation5 + $0xf0] sm:$0xff]
    %v209 = vld [vmem:[#allocation5 + $0xf8] sm:$0xff]
    %v210 = vld [vmem:[#allocation5 + $0x100] sm:$0xff]
    %v211 = vld [vmem:[#allocation5 + $0x108] sm:$0xff]
    %v212 = vld [vmem:[#allocation5 + $0x110] sm:$0xff]
    %v213 = vld [vmem:[#allocation5 + $0x118] sm:$0xff]
    %v214 = vld [vmem:[#allocation5 + $0x120] sm:$0xff]
    %v215 = vld [vmem:[#allocation5 + $0x128] sm:$0xff]
    %v216 = vld [vmem:[#allocation5 + $0x130] sm:$0xff]
    %v217 = vld [vmem:[#allocation5 + $0x138] sm:$0xff]
    %v218 = vld [vmem:[#allocation5 + $0x140] sm:$0xff]
    %v219 = vld [vmem:[#allocation5 + $0x148] sm:$0xff]
    %v220 = vld [vmem:[#allocation5 + $0x150] sm:$0xff]
    %v221 = vld [vmem:[#allocation5 + $0x158] sm:$0xff]
    %v222 = vld [vmem:[#allocation5 + $0x160] sm:$0xff]
    %v223 = vld [vmem:[#allocation5 + $0x168] sm:$0xff]
    %v224 = vld [vmem:[#allocation5 + $0x170] sm:$0xff]
    %v225 = vld [vmem:[#allocation5 + $0x178] sm:$0xff]
    %v226 = vld [vmem:[#allocation5 + $0x180] sm:$0xff]
    %v227 = vld [vmem:[#allocation5 + $0x188] sm:$0xff]
    %v228 = vld [vmem:[#allocation5 + $0x190] sm:$0xff]
    %v229 = vld [vmem:[#allocation5 + $0x198] sm:$0xff]
    %v230 = vld [vmem:[#allocation5 + $0x1a0] sm:$0xff]
    %v231 = vld [vmem:[#allocation5 + $0x1a8] sm:$0xff]
    %v232 = vld [vmem:[#allocation5 + $0x1b0] sm:$0xff]
    %v233 = vld [vmem:[#allocation5 + $0x1b8] sm:$0xff]
    %v234 = vld [vmem:[#allocation5 + $0x1c0] sm:$0xff]
    %v235 = vld [vmem:[#allocation5 + $0x1c8] sm:$0xff]
    %v236 = vld [vmem:[#allocation5 + $0x1d0] sm:$0xff]
    %v237 = vld [vmem:[#allocation5 + $0x1d8] sm:$0xff]
    %v238 = vld [vmem:[#allocation5 + $0x1e0] sm:$0xff]
    %v239 = vld [vmem:[#allocation5 + $0x1e8] sm:$0xff]
    %v240 = vld [vmem:[#allocation5 + $0x1f0] sm:$0xff]
    %v241 = vld [vmem:[#allocation5 + $0x1f8] sm:$0xff]
    %v242 = vld [vmem:[#allocation5 + $0x200] sm:$0xff]
    %v243 = vld [vmem:[#allocation5 + $0x208] sm:$0xff]
    %v244 = vld [vmem:[#allocation5 + $0x210] sm:$0xff]
    %v245 = vld [vmem:[#allocation5 + $0x218] sm:$0xff]
    %v246 = vld [vmem:[#allocation5 + $0x220] sm:$0xff]
    %v247 = vld [vmem:[#allocation5 + $0x228] sm:$0xff]
    %v248 = vld [vmem:[#allocation5 + $0x230] sm:$0xff]
    %v249 = vld [vmem:[#allocation5 + $0x238] sm:$0xff]
    %v250 = vld [vmem:[#allocation5 + $0x240] sm:$0xff]
    %v251 = vld [vmem:[#allocation5 + $0x248] sm:$0xff]
    %v252 = vld [vmem:[#allocation5 + $0x250] sm:$0xff]
    %v253 = vld [vmem:[#allocation5 + $0x258] sm:$0xff]
    %v254 = vld [vmem:[#allocation5 + $0x260] sm:$0xff]
    %v255 = vld [vmem:[#allocation5 + $0x268] sm:$0xff]
    %v256 = vld [vmem:[#allocation5 + $0x270] sm:$0xff]
    %v257 = vld [vmem:[#allocation5 + $0x278] sm:$0xff]
    %v258 = vld [vmem:[#allocation5 + $0x280] sm:$0xff]
    %v259 = vld [vmem:[#allocation5 + $0x288] sm:$0xff]
    %v260 = vld [vmem:[#allocation5 + $0x290] sm:$0xff]
    %v261 = vld [vmem:[#allocation5 + $0x298] sm:$0xff]
    %v262 = vld [vmem:[#allocation5 + $0x2a0] sm:$0xff]
    %v263 = vld [vmem:[#allocation5 + $0x2a8] sm:$0xff]
    %v264 = vld [vmem:[#allocation5 + $0x2b0] sm:$0xff]
    %v265 = vld [vmem:[#allocation5 + $0x2b8] sm:$0xff]
    %v266 = vld [vmem:[#allocation5 + $0x2c0] sm:$0xff]
    %v267 = vld [vmem:[#allocation5 + $0x2c8] sm:$0xff]
    %v268 = vld [vmem:[#allocation5 + $0x2d0] sm:$0xff]
    %v269 = vld [vmem:[#allocation5 + $0x2d8] sm:$0xff]
    %v270 = vld [vmem:[#allocation5 + $0x2e0] sm:$0xff]
    %v271 = vld [vmem:[#allocation5 + $0x2e8] sm:$0xff]
    %v272 = vld [vmem:[#allocation5 + $0x2f0] sm:$0xff]
    %v273 = vld [vmem:[#allocation5 + $0x2f8] sm:$0xff]
    %v274 = vld [vmem:[#allocation5 + $0x300] sm:$0xff]
    %v275 = vld [vmem:[#allocation5 + $0x308] sm:$0xff]
    %v276 = vld [vmem:[#allocation5 + $0x310] sm:$0xff]
    %v277 = vld [vmem:[#allocation5 + $0x318] sm:$0xff]
    %v278 = vld [vmem:[#allocation5 + $0x320] sm:$0xff]
    %v279 = vld [vmem:[#allocation5 + $0x328] sm:$0xff]
    %v280 = vld [vmem:[#allocation5 + $0x330] sm:$0xff]
    %v281 = vld [vmem:[#allocation5 + $0x338] sm:$0xff]
    %v282 = vld [vmem:[#allocation5 + $0x340] sm:$0xff]
    %v283 = vld [vmem:[#allocation5 + $0x348] sm:$0xff]
    %v284 = vld [vmem:[#allocation5 + $0x350] sm:$0xff]
    %v285 = vld [vmem:[#allocation5 + $0x358] sm:$0xff]
    %v286 = vld [vmem:[#allocation5 + $0x360] sm:$0xff]
    %v287 = vld [vmem:[#allocation5 + $0x368] sm:$0xff]
    %v288 = vld [vmem:[#allocation5 + $0x370] sm:$0xff]
    %v289 = vld [vmem:[#allocation5 + $0x378] sm:$0xff]
    %v290 = vld [vmem:[#allocation5 + $0x380] sm:$0xff]
    %v291 = vld [vmem:[#allocation5 + $0x388] sm:$0xff]
    %v292 = vld [vmem:[#allocation5 + $0x390] sm:$0xff]
    %v293 = vld [vmem:[#allocation5 + $0x398] sm:$0xff]
    %v294 = vld [vmem:[#allocation5 + $0x3a0] sm:$0xff]
    %v295 = vld [vmem:[#allocation5 + $0x3a8] sm:$0xff]
    %v296 = vld [vmem:[#allocation5 + $0x3b0] sm:$0xff]
    %v297 = vld [vmem:[#allocation5 + $0x3b8] sm:$0xff]
    %v298 = vld [vmem:[#allocation5 + $0x3c0] sm:$0xff]
    %v299 = vld [vmem:[#allocation5 + $0x3c8] sm:$0xff]
    %v300 = vld [vmem:[#allocation5 + $0x3d0] sm:$0xff]
    %v301 = vld [vmem:[#allocation5 + $0x3d8] sm:$0xff]
    %v302 = vld [vmem:[#allocation5 + $0x3e0] sm:$0xff]
    %v303 = vld [vmem:[#allocation5 + $0x3e8] sm:$0xff]
    %v304 = vld [vmem:[#allocation5 + $0x3f0] sm:$0xff]
    %v305 = vld [vmem:[#allocation5 + $0x3f8] sm:$0xff]
    %v306 = vld [vmem:[#allocation11] sm:$0xff]
    %v308 = vperm.slane %v306, 0
    %v309 = vperm.slane %v306, 1
    %v310 = vperm.slane %v306, 2
    %v311 = vperm.slane %v306, 3
    %v312 = vperm.slane %v306, 4
    %v313 = vperm.slane %v306, 5
    %v314 = vperm.slane %v306, 6
    %v315 = vperm.slane %v306, 7
    %v452 = vunpack.c.l.b16 %v178
    %v453 = vunpack.c.h.b16 %v178
    %v454 = vunpack.c.l.b16 %v179
    %v455 = vunpack.c.h.b16 %v179
    %v456 = vunpack.c.l.b16 %v180
    %v457 = vunpack.c.h.b16 %v180
    %v458 = vunpack.c.l.b16 %v181
    %v459 = vunpack.c.h.b16 %v181
    %v460 = vunpack.c.l.b16 %v182
    %v461 = vunpack.c.h.b16 %v182
    %v462 = vunpack.c.l.b16 %v183
    %v463 = vunpack.c.h.b16 %v183
    %v464 = vunpack.c.l.b16 %v184
    %v465 = vunpack.c.h.b16 %v184
    %v466 = vunpack.c.l.b16 %v185
    %v467 = vunpack.c.h.b16 %v185
    %v468 = vunpack.c.l.b16 %v186
    %v469 = vunpack.c.h.b16 %v186
    %v470 = vunpack.c.l.b16 %v187
    %v471 = vunpack.c.h.b16 %v187
    %v472 = vunpack.c.l.b16 %v188
    %v473 = vunpack.c.h.b16 %v188
    %v474 = vunpack.c.l.b16 %v189
    %v475 = vunpack.c.h.b16 %v189
    %v476 = vunpack.c.l.b16 %v190
    %v477 = vunpack.c.h.b16 %v190
    %v478 = vunpack.c.l.b16 %v191
    %v479 = vunpack.c.h.b16 %v191
    %v480 = vunpack.c.l.b16 %v192
    %v481 = vunpack.c.h.b16 %v192
    %v482 = vunpack.c.l.b16 %v193
    %v483 = vunpack.c.h.b16 %v193
    %v484 = vunpack.c.l.b16 %v194
    %v485 = vunpack.c.h.b16 %v194
    %v486 = vunpack.c.l.b16 %v195
    %v487 = vunpack.c.h.b16 %v195
    %v488 = vunpack.c.l.b16 %v196
    %v489 = vunpack.c.h.b16 %v196
    %v490 = vunpack.c.l.b16 %v197
    %v491 = vunpack.c.h.b16 %v197
    %v492 = vunpack.c.l.b16 %v198
    %v493 = vunpack.c.h.b16 %v198
    %v494 = vunpack.c.l.b16 %v199
    %v495 = vunpack.c.h.b16 %v199
    %v496 = vunpack.c.l.b16 %v200
    %v497 = vunpack.c.h.b16 %v200
    %v498 = vunpack.c.l.b16 %v201
    %v499 = vunpack.c.h.b16 %v201
    %v500 = vunpack.c.l.b16 %v202
    %v501 = vunpack.c.h.b16 %v202
    %v502 = vunpack.c.l.b16 %v203
    %v503 = vunpack.c.h.b16 %v203
    %v504 = vunpack.c.l.b16 %v204
    %v505 = vunpack.c.h.b16 %v204
    %v506 = vunpack.c.l.b16 %v205
    %v507 = vunpack.c.h.b16 %v205
    %v508 = vunpack.c.l.b16 %v206
    %v509 = vunpack.c.h.b16 %v206
    %v510 = vunpack.c.l.b16 %v207
    %v511 = vunpack.c.h.b16 %v207
    %v512 = vunpack.c.l.b16 %v208
    %v513 = vunpack.c.h.b16 %v208
    %v514 = vunpack.c.l.b16 %v209
    %v515 = vunpack.c.h.b16 %v209
    %v516 = vunpack.c.l.b16 %v210
    %v517 = vunpack.c.h.b16 %v210
    %v518 = vunpack.c.l.b16 %v211
    %v519 = vunpack.c.h.b16 %v211
    %v520 = vunpack.c.l.b16 %v212
    %v521 = vunpack.c.h.b16 %v212
    %v522 = vunpack.c.l.b16 %v213
    %v523 = vunpack.c.h.b16 %v213
    %v524 = vunpack.c.l.b16 %v214
    %v525 = vunpack.c.h.b16 %v214
    %v526 = vunpack.c.l.b16 %v215
    %v527 = vunpack.c.h.b16 %v215
    %v528 = vunpack.c.l.b16 %v216
    %v529 = vunpack.c.h.b16 %v216
    %v530 = vunpack.c.l.b16 %v217
    %v531 = vunpack.c.h.b16 %v217
    %v532 = vunpack.c.l.b16 %v218
    %v533 = vunpack.c.h.b16 %v218
    %v534 = vunpack.c.l.b16 %v219
    %v535 = vunpack.c.h.b16 %v219
    %v536 = vunpack.c.l.b16 %v220
    %v537 = vunpack.c.h.b16 %v220
    %v538 = vunpack.c.l.b16 %v221
    %v539 = vunpack.c.h.b16 %v221
    %v540 = vunpack.c.l.b16 %v222
    %v541 = vunpack.c.h.b16 %v222
    %v542 = vunpack.c.l.b16 %v223
    %v543 = vunpack.c.h.b16 %v223
    %v544 = vunpack.c.l.b16 %v224
    %v545 = vunpack.c.h.b16 %v224
    %v546 = vunpack.c.l.b16 %v225
    %v547 = vunpack.c.h.b16 %v225
    %v548 = vunpack.c.l.b16 %v226
    %v549 = vunpack.c.h.b16 %v226
    %v550 = vunpack.c.l.b16 %v227
    %v551 = vunpack.c.h.b16 %v227
    %v552 = vunpack.c.l.b16 %v228
    %v553 = vunpack.c.h.b16 %v228
    %v554 = vunpack.c.l.b16 %v229
    %v555 = vunpack.c.h.b16 %v229
    %v556 = vunpack.c.l.b16 %v230
    %v557 = vunpack.c.h.b16 %v230
    %v558 = vunpack.c.l.b16 %v231
    %v559 = vunpack.c.h.b16 %v231
    %v560 = vunpack.c.l.b16 %v232
    %v561 = vunpack.c.h.b16 %v232
    %v562 = vunpack.c.l.b16 %v233
    %v563 = vunpack.c.h.b16 %v233
    %v564 = vunpack.c.l.b16 %v234
    %v565 = vunpack.c.h.b16 %v234
    %v566 = vunpack.c.l.b16 %v235
    %v567 = vunpack.c.h.b16 %v235
    %v568 = vunpack.c.l.b16 %v236
    %v569 = vunpack.c.h.b16 %v236
    %v570 = vunpack.c.l.b16 %v237
    %v571 = vunpack.c.h.b16 %v237
    %v572 = vunpack.c.l.b16 %v238
    %v573 = vunpack.c.h.b16 %v238
    %v574 = vunpack.c.l.b16 %v239
    %v575 = vunpack.c.h.b16 %v239
    %v576 = vunpack.c.l.b16 %v240
    %v577 = vunpack.c.h.b16 %v240
    %v578 = vunpack.c.l.b16 %v241
    %v579 = vunpack.c.h.b16 %v241
    %v580 = vunpack.c.l.b16 %v242
    %v581 = vunpack.c.h.b16 %v242
    %v582 = vunpack.c.l.b16 %v243
    %v583 = vunpack.c.h.b16 %v243
    %v584 = vunpack.c.l.b16 %v244
    %v585 = vunpack.c.h.b16 %v244
    %v586 = vunpack.c.l.b16 %v245
    %v587 = vunpack.c.h.b16 %v245
    %v588 = vunpack.c.l.b16 %v246
    %v589 = vunpack.c.h.b16 %v246
    %v590 = vunpack.c.l.b16 %v247
    %v591 = vunpack.c.h.b16 %v247
    %v592 = vunpack.c.l.b16 %v248
    %v593 = vunpack.c.h.b16 %v248
    %v594 = vunpack.c.l.b16 %v249
    %v595 = vunpack.c.h.b16 %v249
    %v596 = vunpack.c.l.b16 %v250
    %v597 = vunpack.c.h.b16 %v250
    %v598 = vunpack.c.l.b16 %v251
    %v599 = vunpack.c.h.b16 %v251
    %v600 = vunpack.c.l.b16 %v252
    %v601 = vunpack.c.h.b16 %v252
    %v602 = vunpack.c.l.b16 %v253
    %v603 = vunpack.c.h.b16 %v253
    %v604 = vunpack.c.l.b16 %v254
    %v605 = vunpack.c.h.b16 %v254
    %v606 = vunpack.c.l.b16 %v255
    %v607 = vunpack.c.h.b16 %v255
    %v608 = vunpack.c.l.b16 %v256
    %v609 = vunpack.c.h.b16 %v256
    %v610 = vunpack.c.l.b16 %v257
    %v611 = vunpack.c.h.b16 %v257
    %v612 = vunpack.c.l.b16 %v258
    %v613 = vunpack.c.h.b16 %v258
    %v614 = vunpack.c.l.b16 %v259
    %v615 = vunpack.c.h.b16 %v259
    %v616 = vunpack.c.l.b16 %v260
    %v617 = vunpack.c.h.b16 %v260
    %v618 = vunpack.c.l.b16 %v261
    %v619 = vunpack.c.h.b16 %v261
    %v620 = vunpack.c.l.b16 %v262
    %v621 = vunpack.c.h.b16 %v262
    %v622 = vunpack.c.l.b16 %v263
    %v623 = vunpack.c.h.b16 %v263
    %v624 = vunpack.c.l.b16 %v264
    %v625 = vunpack.c.h.b16 %v264
    %v626 = vunpack.c.l.b16 %v265
    %v627 = vunpack.c.h.b16 %v265
    %v628 = vunpack.c.l.b16 %v266
    %v629 = vunpack.c.h.b16 %v266
    %v630 = vunpack.c.l.b16 %v267
    %v631 = vunpack.c.h.b16 %v267
    %v632 = vunpack.c.l.b16 %v268
    %v633 = vunpack.c.h.b16 %v268
    %v634 = vunpack.c.l.b16 %v269
    %v635 = vunpack.c.h.b16 %v269
    %v636 = vunpack.c.l.b16 %v270
    %v637 = vunpack.c.h.b16 %v270
    %v638 = vunpack.c.l.b16 %v271
    %v639 = vunpack.c.h.b16 %v271
    %v640 = vunpack.c.l.b16 %v272
    %v641 = vunpack.c.h.b16 %v272
    %v642 = vunpack.c.l.b16 %v273
    %v643 = vunpack.c.h.b16 %v273
    %v644 = vunpack.c.l.b16 %v274
    %v645 = vunpack.c.h.b16 %v274
    %v646 = vunpack.c.l.b16 %v275
    %v647 = vunpack.c.h.b16 %v275
    %v648 = vunpack.c.l.b16 %v276
    %v649 = vunpack.c.h.b16 %v276
    %v650 = vunpack.c.l.b16 %v277
    %v651 = vunpack.c.h.b16 %v277
    %v652 = vunpack.c.l.b16 %v278
    %v653 = vunpack.c.h.b16 %v278
    %v654 = vunpack.c.l.b16 %v279
    %v655 = vunpack.c.h.b16 %v279
    %v656 = vunpack.c.l.b16 %v280
    %v657 = vunpack.c.h.b16 %v280
    %v658 = vunpack.c.l.b16 %v281
    %v659 = vunpack.c.h.b16 %v281
    %v660 = vunpack.c.l.b16 %v282
    %v661 = vunpack.c.h.b16 %v282
    %v662 = vunpack.c.l.b16 %v283
    %v663 = vunpack.c.h.b16 %v283
    %v664 = vunpack.c.l.b16 %v284
    %v665 = vunpack.c.h.b16 %v284
    %v666 = vunpack.c.l.b16 %v285
    %v667 = vunpack.c.h.b16 %v285
    %v668 = vunpack.c.l.b16 %v286
    %v669 = vunpack.c.h.b16 %v286
    %v670 = vunpack.c.l.b16 %v287
    %v671 = vunpack.c.h.b16 %v287
    %v672 = vunpack.c.l.b16 %v288
    %v673 = vunpack.c.h.b16 %v288
    %v674 = vunpack.c.l.b16 %v289
    %v675 = vunpack.c.h.b16 %v289
    %v676 = vunpack.c.l.b16 %v290
    %v677 = vunpack.c.h.b16 %v290
    %v678 = vunpack.c.l.b16 %v291
    %v679 = vunpack.c.h.b16 %v291
    %v680 = vunpack.c.l.b16 %v292
    %v681 = vunpack.c.h.b16 %v292
    %v682 = vunpack.c.l.b16 %v293
    %v683 = vunpack.c.h.b16 %v293
    %v684 = vunpack.c.l.b16 %v294
    %v685 = vunpack.c.h.b16 %v294
    %v686 = vunpack.c.l.b16 %v295
    %v687 = vunpack.c.h.b16 %v295
    %v688 = vunpack.c.l.b16 %v296
    %v689 = vunpack.c.h.b16 %v296
    %v690 = vunpack.c.l.b16 %v297
    %v691 = vunpack.c.h.b16 %v297
    %v692 = vunpack.c.l.b16 %v298
    %v693 = vunpack.c.h.b16 %v298
    %v694 = vunpack.c.l.b16 %v299
    %v695 = vunpack.c.h.b16 %v299
    %v696 = vunpack.c.l.b16 %v300
    %v697 = vunpack.c.h.b16 %v300
    %v698 = vunpack.c.l.b16 %v301
    %v699 = vunpack.c.h.b16 %v301
    %v700 = vunpack.c.l.b16 %v302
    %v701 = vunpack.c.h.b16 %v302
    %v702 = vunpack.c.l.b16 %v303
    %v703 = vunpack.c.h.b16 %v303
    %v704 = vunpack.c.l.b16 %v304
    %v705 = vunpack.c.h.b16 %v304
    %v706 = vunpack.c.l.b16 %v305
    %v707 = vunpack.c.h.b16 %v305
    %v708 = vpack.c.b16 %v460, %v452
    %v709 = vpack.c.b16 %v461, %v453
    %v710 = vpack.c.b16 %v462, %v454
    %v711 = vpack.c.b16 %v463, %v455
    %v712 = vpack.c.b16 %v464, %v456
    %v713 = vpack.c.b16 %v465, %v457
    %v714 = vpack.c.b16 %v466, %v458
    %v715 = vpack.c.b16 %v467, %v459
    %v716 = vpack.c.b16 %v476, %v468
    %v717 = vpack.c.b16 %v477, %v469
    %v718 = vpack.c.b16 %v478, %v470
    %v719 = vpack.c.b16 %v479, %v471
    %v720 = vpack.c.b16 %v480, %v472
    %v721 = vpack.c.b16 %v481, %v473
    %v722 = vpack.c.b16 %v482, %v474
    %v723 = vpack.c.b16 %v483, %v475
    %v724 = vpack.c.b16 %v492, %v484
    %v725 = vpack.c.b16 %v493, %v485
    %v726 = vpack.c.b16 %v494, %v486
    %v727 = vpack.c.b16 %v495, %v487
    %v728 = vpack.c.b16 %v496, %v488
    %v729 = vpack.c.b16 %v497, %v489
    %v730 = vpack.c.b16 %v498, %v490
    %v731 = vpack.c.b16 %v499, %v491
    %v732 = vpack.c.b16 %v508, %v500
    %v733 = vpack.c.b16 %v509, %v501
    %v734 = vpack.c.b16 %v510, %v502
    %v735 = vpack.c.b16 %v511, %v503
    %v736 = vpack.c.b16 %v512, %v504
    %v737 = vpack.c.b16 %v513, %v505
    %v738 = vpack.c.b16 %v514, %v506
    %v739 = vpack.c.b16 %v515, %v507
    %v740 = vpack.c.b16 %v524, %v516
    %v741 = vpack.c.b16 %v525, %v517
    %v742 = vpack.c.b16 %v526, %v518
    %v743 = vpack.c.b16 %v527, %v519
    %v744 = vpack.c.b16 %v528, %v520
    %v745 = vpack.c.b16 %v529, %v521
    %v746 = vpack.c.b16 %v530, %v522
    %v747 = vpack.c.b16 %v531, %v523
    %v748 = vpack.c.b16 %v540, %v532
    %v749 = vpack.c.b16 %v541, %v533
    %v750 = vpack.c.b16 %v542, %v534
    %v751 = vpack.c.b16 %v543, %v535
    %v752 = vpack.c.b16 %v544, %v536
    %v753 = vpack.c.b16 %v545, %v537
    %v754 = vpack.c.b16 %v546, %v538
    %v755 = vpack.c.b16 %v547, %v539
    %v756 = vpack.c.b16 %v556, %v548
    %v757 = vpack.c.b16 %v557, %v549
    %v758 = vpack.c.b16 %v558, %v550
    %v759 = vpack.c.b16 %v559, %v551
    %v760 = vpack.c.b16 %v560, %v552
    %v761 = vpack.c.b16 %v561, %v553
    %v762 = vpack.c.b16 %v562, %v554
    %v763 = vpack.c.b16 %v563, %v555
    %v764 = vpack.c.b16 %v572, %v564
    %v765 = vpack.c.b16 %v573, %v565
    %v766 = vpack.c.b16 %v574, %v566
    %v767 = vpack.c.b16 %v575, %v567
    %v768 = vpack.c.b16 %v576, %v568
    %v769 = vpack.c.b16 %v577, %v569
    %v770 = vpack.c.b16 %v578, %v570
    %v771 = vpack.c.b16 %v579, %v571
    %v772 = vpack.c.b16 %v588, %v580
    %v773 = vpack.c.b16 %v589, %v581
    %v774 = vpack.c.b16 %v590, %v582
    %v775 = vpack.c.b16 %v591, %v583
    %v776 = vpack.c.b16 %v592, %v584
    %v777 = vpack.c.b16 %v593, %v585
    %v778 = vpack.c.b16 %v594, %v586
    %v779 = vpack.c.b16 %v595, %v587
    %v780 = vpack.c.b16 %v604, %v596
    %v781 = vpack.c.b16 %v605, %v597
    %v782 = vpack.c.b16 %v606, %v598
    %v783 = vpack.c.b16 %v607, %v599
    %v784 = vpack.c.b16 %v608, %v600
    %v785 = vpack.c.b16 %v609, %v601
    %v786 = vpack.c.b16 %v610, %v602
    %v787 = vpack.c.b16 %v611, %v603
    %v788 = vpack.c.b16 %v620, %v612
    %v789 = vpack.c.b16 %v621, %v613
    %v790 = vpack.c.b16 %v622, %v614
    %v791 = vpack.c.b16 %v623, %v615
    %v792 = vpack.c.b16 %v624, %v616
    %v793 = vpack.c.b16 %v625, %v617
    %v794 = vpack.c.b16 %v626, %v618
    %v795 = vpack.c.b16 %v627, %v619
    %v796 = vpack.c.b16 %v636, %v628
    %v797 = vpack.c.b16 %v637, %v629
    %v798 = vpack.c.b16 %v638, %v630
    %v799 = vpack.c.b16 %v639, %v631
    %v800 = vpack.c.b16 %v640, %v632
    %v801 = vpack.c.b16 %v641, %v633
    %v802 = vpack.c.b16 %v642, %v634
    %v803 = vpack.c.b16 %v643, %v635
    %v804 = vpack.c.b16 %v652, %v644
    %v805 = vpack.c.b16 %v653, %v645
    %v806 = vpack.c.b16 %v654, %v646
    %v807 = vpack.c.b16 %v655, %v647
    %v808 = vpack.c.b16 %v656, %v648
    %v809 = vpack.c.b16 %v657, %v649
    %v810 = vpack.c.b16 %v658, %v650
    %v811 = vpack.c.b16 %v659, %v651
    %v812 = vpack.c.b16 %v668, %v660
    %v813 = vpack.c.b16 %v669, %v661
    %v814 = vpack.c.b16 %v670, %v662
    %v815 = vpack.c.b16 %v671, %v663
    %v816 = vpack.c.b16 %v672, %v664
    %v817 = vpack.c.b16 %v673, %v665
    %v818 = vpack.c.b16 %v674, %v666
    %v819 = vpack.c.b16 %v675, %v667
    %v820 = vpack.c.b16 %v684, %v676
    %v821 = vpack.c.b16 %v685, %v677
    %v822 = vpack.c.b16 %v686, %v678
    %v823 = vpack.c.b16 %v687, %v679
    %v824 = vpack.c.b16 %v688, %v680
    %v825 = vpack.c.b16 %v689, %v681
    %v826 = vpack.c.b16 %v690, %v682
    %v827 = vpack.c.b16 %v691, %v683
    %v828 = vpack.c.b16 %v700, %v692
    %v829 = vpack.c.b16 %v701, %v693
    %v830 = vpack.c.b16 %v702, %v694
    %v831 = vpack.c.b16 %v703, %v695
    %v832 = vpack.c.b16 %v704, %v696
    %v833 = vpack.c.b16 %v705, %v697
    %v834 = vpack.c.b16 %v706, %v698
    %v835 = vpack.c.b16 %v707, %v699
    %964 = vmatpush.bf16.msra.mxu0 %v764
    %965 = vmatpush.bf16.msra.mxu0 %v756
    %966 = vmatpush.bf16.msra.mxu0 %v748
    %967 = vmatpush.bf16.msra.mxu0 %v740
    %968 = vmatpush.bf16.msra.mxu0 %v732
    %969 = vmatpush.bf16.msra.mxu0 %v724
    %970 = vmatpush.bf16.msra.mxu0 %v716
    %971 = vmatpush.bf16.msra.mxu0 %v708
    %972 = vmatmul.bf16.gmra.mxu0 %v176
    %v973 = vpop.f32.mrf.mxu0
    %v974 = vadd.f32 %v308, %v973
    %v975 = vpop.f32.mrf.mxu0
    %976 = vdwg.mxu0
    %977 = vmatpush.bf16.msra.mxu0 %v828
    %978 = vmatpush.bf16.msra.mxu0 %v820
    %979 = vmatpush.bf16.msra.mxu0 %v812
    %980 = vmatpush.bf16.msra.mxu0 %v804
    %981 = vmatpush.bf16.msra.mxu0 %v796
    %982 = vmatpush.bf16.msra.mxu0 %v788
    %983 = vmatpush.bf16.msra.mxu0 %v780
    %984 = vmatpush.bf16.msra.mxu0 %v772
    %985 = vmatmul.bf16.gmra.mxu0 %v177
    %v986 = vpop.f32.mrf.mxu0
    %v987 = vadd.f32 %v974, %v986
    %v988 = vpop.f32.mrf.mxu0
    %989 = vdwg.mxu0
    %990 = vmatpush.bf16.msra.mxu0 %v765
    %991 = vmatpush.bf16.msra.mxu0 %v757
    %992 = vmatpush.bf16.msra.mxu0 %v749
    %993 = vmatpush.bf16.msra.mxu0 %v741
    %994 = vmatpush.bf16.msra.mxu0 %v733
    %995 = vmatpush.bf16.msra.mxu0 %v725
    %996 = vmatpush.bf16.msra.mxu0 %v717
    %997 = vmatpush.bf16.msra.mxu0 %v709
    %998 = vmatmul.bf16.gmra.mxu0 %v176
    %v999 = vpop.f32.mrf.mxu0
    %v1000 = vadd.f32 %v309, %v999
    %v1001 = vpop.f32.mrf.mxu0
    %1002 = vdwg.mxu0
    %1003 = vmatpush.bf16.msra.mxu0 %v829
    %1004 = vmatpush.bf16.msra.mxu0 %v821
    %1005 = vmatpush.bf16.msra.mxu0 %v813
    %1006 = vmatpush.bf16.msra.mxu0 %v805
    %1007 = vmatpush.bf16.msra.mxu0 %v797
    %1008 = vmatpush.bf16.msra.mxu0 %v789
    %1009 = vmatpush.bf16.msra.mxu0 %v781
    %1010 = vmatpush.bf16.msra.mxu0 %v773
    %1011 = vmatmul.bf16.gmra.mxu0 %v177
    %v1012 = vpop.f32.mrf.mxu0
    %v1013 = vadd.f32 %v1000, %v1012
    %v1014 = vpop.f32.mrf.mxu0
    %1015 = vdwg.mxu0
    %1016 = vmatpush.bf16.msra.mxu0 %v766
    %1017 = vmatpush.bf16.msra.mxu0 %v758
    %1018 = vmatpush.bf16.msra.mxu0 %v750
    %1019 = vmatpush.bf16.msra.mxu0 %v742
    %1020 = vmatpush.bf16.msra.mxu0 %v734
    %1021 = vmatpush.bf16.msra.mxu0 %v726
    %1022 = vmatpush.bf16.msra.mxu0 %v718
    %1023 = vmatpush.bf16.msra.mxu0 %v710
    %1024 = vmatmul.bf16.gmra.mxu0 %v176
    %v1025 = vpop.f32.mrf.mxu0
    %v1026 = vadd.f32 %v310, %v1025
    %v1027 = vpop.f32.mrf.mxu0
    %1028 = vdwg.mxu0
    %1029 = vmatpush.bf16.msra.mxu0 %v830
    %1030 = vmatpush.bf16.msra.mxu0 %v822
    %1031 = vmatpush.bf16.msra.mxu0 %v814
    %1032 = vmatpush.bf16.msra.mxu0 %v806
    %1033 = vmatpush.bf16.msra.mxu0 %v798
    %1034 = vmatpush.bf16.msra.mxu0 %v790
    %1035 = vmatpush.bf16.msra.mxu0 %v782
    %1036 = vmatpush.bf16.msra.mxu0 %v774
    %1037 = vmatmul.bf16.gmra.mxu0 %v177
    %v1038 = vpop.f32.mrf.mxu0
    %v1039 = vadd.f32 %v1026, %v1038
    %v1040 = vpop.f32.mrf.mxu0
    %1041 = vdwg.mxu0
    %1042 = vmatpush.bf16.msra.mxu0 %v767
    %1043 = vmatpush.bf16.msra.mxu0 %v759
    %1044 = vmatpush.bf16.msra.mxu0 %v751
    %1045 = vmatpush.bf16.msra.mxu0 %v743
    %1046 = vmatpush.bf16.msra.mxu0 %v735
    %1047 = vmatpush.bf16.msra.mxu0 %v727
    %1048 = vmatpush.bf16.msra.mxu0 %v719
    %1049 = vmatpush.bf16.msra.mxu0 %v711
    %1050 = vmatmul.bf16.gmra.mxu0 %v176
    %v1051 = vpop.f32.mrf.mxu0
    %v1052 = vadd.f32 %v311, %v1051
    %v1053 = vpop.f32.mrf.mxu0
    %1054 = vdwg.mxu0
    %1055 = vmatpush.bf16.msra.mxu0 %v831
    %1056 = vmatpush.bf16.msra.mxu0 %v823
    %1057 = vmatpush.bf16.msra.mxu0 %v815
    %1058 = vmatpush.bf16.msra.mxu0 %v807
    %1059 = vmatpush.bf16.msra.mxu0 %v799
    %1060 = vmatpush.bf16.msra.mxu0 %v791
    %1061 = vmatpush.bf16.msra.mxu0 %v783
    %1062 = vmatpush.bf16.msra.mxu0 %v775
    %1063 = vmatmul.bf16.gmra.mxu0 %v177
    %v1064 = vpop.f32.mrf.mxu0
    %v1065 = vadd.f32 %v1052, %v1064
    %v1066 = vpop.f32.mrf.mxu0
    %1067 = vdwg.mxu0
    %1068 = vmatpush.bf16.msra.mxu0 %v768
    %1069 = vmatpush.bf16.msra.mxu0 %v760
    %1070 = vmatpush.bf16.msra.mxu0 %v752
    %1071 = vmatpush.bf16.msra.mxu0 %v744
    %1072 = vmatpush.bf16.msra.mxu0 %v736
    %1073 = vmatpush.bf16.msra.mxu0 %v728
    %1074 = vmatpush.bf16.msra.mxu0 %v720
    %1075 = vmatpush.bf16.msra.mxu0 %v712
    %1076 = vmatmul.bf16.gmra.mxu0 %v176
    %v1077 = vpop.f32.mrf.mxu0
    %v1078 = vadd.f32 %v312, %v1077
    %v1079 = vpop.f32.mrf.mxu0
    %1080 = vdwg.mxu0
    %1081 = vmatpush.bf16.msra.mxu0 %v832
    %1082 = vmatpush.bf16.msra.mxu0 %v824
    %1083 = vmatpush.bf16.msra.mxu0 %v816
    %1084 = vmatpush.bf16.msra.mxu0 %v808
    %1085 = vmatpush.bf16.msra.mxu0 %v800
    %1086 = vmatpush.bf16.msra.mxu0 %v792
    %1087 = vmatpush.bf16.msra.mxu0 %v784
    %1088 = vmatpush.bf16.msra.mxu0 %v776
    %1089 = vmatmul.bf16.gmra.mxu0 %v177
    %v1090 = vpop.f32.mrf.mxu0
    %v1091 = vadd.f32 %v1078, %v1090
    %v1092 = vpop.f32.mrf.mxu0
    %1093 = vdwg.mxu0
    %1094 = vmatpush.bf16.msra.mxu0 %v769
    %1095 = vmatpush.bf16.msra.mxu0 %v761
    %1096 = vmatpush.bf16.msra.mxu0 %v753
    %1097 = vmatpush.bf16.msra.mxu0 %v745
    %1098 = vmatpush.bf16.msra.mxu0 %v737
    %1099 = vmatpush.bf16.msra.mxu0 %v729
    %1100 = vmatpush.bf16.msra.mxu0 %v721
    %1101 = vmatpush.bf16.msra.mxu0 %v713
    %1102 = vmatmul.bf16.gmra.mxu0 %v176
    %v1103 = vpop.f32.mrf.mxu0
    %v1104 = vadd.f32 %v313, %v1103
    %v1105 = vpop.f32.mrf.mxu0
    %1106 = vdwg.mxu0
    %1107 = vmatpush.bf16.msra.mxu0 %v833
    %1108 = vmatpush.bf16.msra.mxu0 %v825
    %1109 = vmatpush.bf16.msra.mxu0 %v817
    %1110 = vmatpush.bf16.msra.mxu0 %v809
    %1111 = vmatpush.bf16.msra.mxu0 %v801
    %1112 = vmatpush.bf16.msra.mxu0 %v793
    %1113 = vmatpush.bf16.msra.mxu0 %v785
    %1114 = vmatpush.bf16.msra.mxu0 %v777
    %1115 = vmatmul.bf16.gmra.mxu0 %v177
    %v1116 = vpop.f32.mrf.mxu0
    %v1117 = vadd.f32 %v1104, %v1116
    %v1118 = vpop.f32.mrf.mxu0
    %1119 = vdwg.mxu0
    %1120 = vmatpush.bf16.msra.mxu0 %v770
    %1121 = vmatpush.bf16.msra.mxu0 %v762
    %1122 = vmatpush.bf16.msra.mxu0 %v754
    %1123 = vmatpush.bf16.msra.mxu0 %v746
    %1124 = vmatpush.bf16.msra.mxu0 %v738
    %1125 = vmatpush.bf16.msra.mxu0 %v730
    %1126 = vmatpush.bf16.msra.mxu0 %v722
    %1127 = vmatpush.bf16.msra.mxu0 %v714
    %1128 = vmatmul.bf16.gmra.mxu0 %v176
    %v1129 = vpop.f32.mrf.mxu0
    %v1130 = vadd.f32 %v314, %v1129
    %v1131 = vpop.f32.mrf.mxu0
    %1132 = vdwg.mxu0
    %1133 = vmatpush.bf16.msra.mxu0 %v834
    %1134 = vmatpush.bf16.msra.mxu0 %v826
    %1135 = vmatpush.bf16.msra.mxu0 %v818
    %1136 = vmatpush.bf16.msra.mxu0 %v810
    %1137 = vmatpush.bf16.msra.mxu0 %v802
    %1138 = vmatpush.bf16.msra.mxu0 %v794
    %1139 = vmatpush.bf16.msra.mxu0 %v786
    %1140 = vmatpush.bf16.msra.mxu0 %v778
    %1141 = vmatmul.bf16.gmra.mxu0 %v177
    %v1142 = vpop.f32.mrf.mxu0
    %v1143 = vadd.f32 %v1130, %v1142
    %v1144 = vpop.f32.mrf.mxu0
    %1145 = vdwg.mxu0
    %1146 = vmatpush.bf16.msra.mxu0 %v771
    %1147 = vmatpush.bf16.msra.mxu0 %v763
    %1148 = vmatpush.bf16.msra.mxu0 %v755
    %1149 = vmatpush.bf16.msra.mxu0 %v747
    %1150 = vmatpush.bf16.msra.mxu0 %v739
    %1151 = vmatpush.bf16.msra.mxu0 %v731
    %1152 = vmatpush.bf16.msra.mxu0 %v723
    %1153 = vmatpush.bf16.msra.mxu0 %v715
    %1154 = vmatmul.bf16.gmra.mxu0 %v176
    %v1155 = vpop.f32.mrf.mxu0
    %v1156 = vadd.f32 %v315, %v1155
    %v1157 = vpop.f32.mrf.mxu0
    %1158 = vdwg.mxu0
    %1159 = vmatpush.bf16.msra.mxu0 %v835
    %1160 = vmatpush.bf16.msra.mxu0 %v827
    %1161 = vmatpush.bf16.msra.mxu0 %v819
    %1162 = vmatpush.bf16.msra.mxu0 %v811
    %1163 = vmatpush.bf16.msra.mxu0 %v803
    %1164 = vmatpush.bf16.msra.mxu0 %v795
    %1165 = vmatpush.bf16.msra.mxu0 %v787
    %1166 = vmatpush.bf16.msra.mxu0 %v779
    %1167 = vmatmul.bf16.gmra.mxu0 %v177
    %v1168 = vpop.f32.mrf.mxu0
    %v1169 = vadd.f32 %v1156, %v1168
    %v1170 = vpop.f32.mrf.mxu0
    %1171 = vdwg.mxu0
    %v1172 = vmax.f32 %v987, 0.0
    %v1173 = vmax.f32 %v1013, 0.0
    %v1174 = vmax.f32 %v1039, 0.0
    %v1175 = vmax.f32 %v1065, 0.0
    %v1176 = vmax.f32 %v1091, 0.0
    %v1177 = vmax.f32 %v1117, 0.0
    %v1178 = vmax.f32 %v1143, 0.0
    %v1179 = vmax.f32 %v1169, 0.0
    %v1180 = vpack.c.bf16 %v1172, %v1172
    %v1181 = vpack.c.bf16 %v1173, %v1173
    %v1182 = vpack.c.bf16 %v1174, %v1174
    %v1183 = vpack.c.bf16 %v1175, %v1175
    %v1184 = vpack.c.bf16 %v1176, %v1176
    %v1185 = vpack.c.bf16 %v1177, %v1177
    %v1186 = vpack.c.bf16 %v1178, %v1178
    %v1187 = vpack.c.bf16 %v1179, %v1179
    %v1188 = vld [vmem:[#allocation7] sm:$0xff]
    %v1189 = vld [vmem:[#allocation7 + $0x8] sm:$0xff]
    %v1190 = vld [vmem:[#allocation7 + $0x10] sm:$0xff]
    %v1191 = vld [vmem:[#allocation7 + $0x18] sm:$0xff]
    %v1192 = vld [vmem:[#allocation7 + $0x20] sm:$0xff]
    %v1193 = vld [vmem:[#allocation7 + $0x28] sm:$0xff]
    %v1194 = vld [vmem:[#allocation7 + $0x30] sm:$0xff]
    %v1195 = vld [vmem:[#allocation7 + $0x38] sm:$0xff]
    %v1196 = vld [vmem:[#allocation7 + $0x40] sm:$0xff]
    %v1197 = vld [vmem:[#allocation7 + $0x48] sm:$0xff]
    %v1198 = vld [vmem:[#allocation7 + $0x50] sm:$0xff]
    %v1199 = vld [vmem:[#allocation7 + $0x58] sm:$0xff]
    %v1200 = vld [vmem:[#allocation7 + $0x60] sm:$0xff]
    %v1201 = vld [vmem:[#allocation7 + $0x68] sm:$0xff]
    %v1202 = vld [vmem:[#allocation7 + $0x70] sm:$0xff]
    %v1203 = vld [vmem:[#allocation7 + $0x78] sm:$0xff]
    %v1204 = vld [vmem:[#allocation7 + $0x80] sm:$0xff]
    %v1205 = vld [vmem:[#allocation7 + $0x88] sm:$0xff]
    %v1206 = vld [vmem:[#allocation7 + $0x90] sm:$0xff]
    %v1207 = vld [vmem:[#allocation7 + $0x98] sm:$0xff]
    %v1208 = vld [vmem:[#allocation7 + $0xa0] sm:$0xff]
    %v1209 = vld [vmem:[#allocation7 + $0xa8] sm:$0xff]
    %v1210 = vld [vmem:[#allocation7 + $0xb0] sm:$0xff]
    %v1211 = vld [vmem:[#allocation7 + $0xb8] sm:$0xff]
    %v1212 = vld [vmem:[#allocation7 + $0xc0] sm:$0xff]
    %v1213 = vld [vmem:[#allocation7 + $0xc8] sm:$0xff]
    %v1214 = vld [vmem:[#allocation7 + $0xd0] sm:$0xff]
    %v1215 = vld [vmem:[#allocation7 + $0xd8] sm:$0xff]
    %v1216 = vld [vmem:[#allocation7 + $0xe0] sm:$0xff]
    %v1217 = vld [vmem:[#allocation7 + $0xe8] sm:$0xff]
    %v1218 = vld [vmem:[#allocation7 + $0xf0] sm:$0xff]
    %v1219 = vld [vmem:[#allocation7 + $0xf8] sm:$0xff]
    %v1220 = vld [vmem:[#allocation7 + $0x100] sm:$0xff]
    %v1221 = vld [vmem:[#allocation7 + $0x108] sm:$0xff]
    %v1222 = vld [vmem:[#allocation7 + $0x110] sm:$0xff]
    %v1223 = vld [vmem:[#allocation7 + $0x118] sm:$0xff]
    %v1224 = vld [vmem:[#allocation7 + $0x120] sm:$0xff]
    %v1225 = vld [vmem:[#allocation7 + $0x128] sm:$0xff]
    %v1226 = vld [vmem:[#allocation7 + $0x130] sm:$0xff]
    %v1227 = vld [vmem:[#allocation7 + $0x138] sm:$0xff]
    %v1228 = vld [vmem:[#allocation7 + $0x140] sm:$0xff]
    %v1229 = vld [vmem:[#allocation7 + $0x148] sm:$0xff]
    %v1230 = vld [vmem:[#allocation7 + $0x150] sm:$0xff]
    %v1231 = vld [vmem:[#allocation7 + $0x158] sm:$0xff]
    %v1232 = vld [vmem:[#allocation7 + $0x160] sm:$0xff]
    %v1233 = vld [vmem:[#allocation7 + $0x168] sm:$0xff]
    %v1234 = vld [vmem:[#allocation7 + $0x170] sm:$0xff]
    %v1235 = vld [vmem:[#allocation7 + $0x178] sm:$0xff]
    %v1236 = vld [vmem:[#allocation7 + $0x180] sm:$0xff]
    %v1237 = vld [vmem:[#allocation7 + $0x188] sm:$0xff]
    %v1238 = vld [vmem:[#allocation7 + $0x190] sm:$0xff]
    %v1239 = vld [vmem:[#allocation7 + $0x198] sm:$0xff]
    %v1240 = vld [vmem:[#allocation7 + $0x1a0] sm:$0xff]
    %v1241 = vld [vmem:[#allocation7 + $0x1a8] sm:$0xff]
    %v1242 = vld [vmem:[#allocation7 + $0x1b0] sm:$0xff]
    %v1243 = vld [vmem:[#allocation7 + $0x1b8] sm:$0xff]
    %v1244 = vld [vmem:[#allocation7 + $0x1c0] sm:$0xff]
    %v1245 = vld [vmem:[#allocation7 + $0x1c8] sm:$0xff]
    %v1246 = vld [vmem:[#allocation7 + $0x1d0] sm:$0xff]
    %v1247 = vld [vmem:[#allocation7 + $0x1d8] sm:$0xff]
    %v1248 = vld [vmem:[#allocation7 + $0x1e0] sm:$0xff]
    %v1249 = vld [vmem:[#allocation7 + $0x1e8] sm:$0xff]
    %v1250 = vld [vmem:[#allocation7 + $0x1f0] sm:$0xff]
    %v1251 = vld [vmem:[#allocation7 + $0x1f8] sm:$0xff]
    %v1252 = vld [vmem:[#allocation7 + $0x200] sm:$0xff]
    %v1253 = vld [vmem:[#allocation7 + $0x208] sm:$0xff]
    %v1254 = vld [vmem:[#allocation7 + $0x210] sm:$0xff]
    %v1255 = vld [vmem:[#allocation7 + $0x218] sm:$0xff]
    %v1256 = vld [vmem:[#allocation7 + $0x220] sm:$0xff]
    %v1257 = vld [vmem:[#allocation7 + $0x228] sm:$0xff]
    %v1258 = vld [vmem:[#allocation7 + $0x230] sm:$0xff]
    %v1259 = vld [vmem:[#allocation7 + $0x238] sm:$0xff]
    %v1260 = vld [vmem:[#allocation7 + $0x240] sm:$0xff]
    %v1261 = vld [vmem:[#allocation7 + $0x248] sm:$0xff]
    %v1262 = vld [vmem:[#allocation7 + $0x250] sm:$0xff]
    %v1263 = vld [vmem:[#allocation7 + $0x258] sm:$0xff]
    %v1264 = vld [vmem:[#allocation7 + $0x260] sm:$0xff]
    %v1265 = vld [vmem:[#allocation7 + $0x268] sm:$0xff]
    %v1266 = vld [vmem:[#allocation7 + $0x270] sm:$0xff]
    %v1267 = vld [vmem:[#allocation7 + $0x278] sm:$0xff]
    %v1268 = vld [vmem:[#allocation7 + $0x280] sm:$0xff]
    %v1269 = vld [vmem:[#allocation7 + $0x288] sm:$0xff]
    %v1270 = vld [vmem:[#allocation7 + $0x290] sm:$0xff]
    %v1271 = vld [vmem:[#allocation7 + $0x298] sm:$0xff]
    %v1272 = vld [vmem:[#allocation7 + $0x2a0] sm:$0xff]
    %v1273 = vld [vmem:[#allocation7 + $0x2a8] sm:$0xff]
    %v1274 = vld [vmem:[#allocation7 + $0x2b0] sm:$0xff]
    %v1275 = vld [vmem:[#allocation7 + $0x2b8] sm:$0xff]
    %v1276 = vld [vmem:[#allocation7 + $0x2c0] sm:$0xff]
    %v1277 = vld [vmem:[#allocation7 + $0x2c8] sm:$0xff]
    %v1278 = vld [vmem:[#allocation7 + $0x2d0] sm:$0xff]
    %v1279 = vld [vmem:[#allocation7 + $0x2d8] sm:$0xff]
    %v1280 = vld [vmem:[#allocation7 + $0x2e0] sm:$0xff]
    %v1281 = vld [vmem:[#allocation7 + $0x2e8] sm:$0xff]
    %v1282 = vld [vmem:[#allocation7 + $0x2f0] sm:$0xff]
    %v1283 = vld [vmem:[#allocation7 + $0x2f8] sm:$0xff]
    %v1284 = vld [vmem:[#allocation7 + $0x300] sm:$0xff]
    %v1285 = vld [vmem:[#allocation7 + $0x308] sm:$0xff]
    %v1286 = vld [vmem:[#allocation7 + $0x310] sm:$0xff]
    %v1287 = vld [vmem:[#allocation7 + $0x318] sm:$0xff]
    %v1288 = vld [vmem:[#allocation7 + $0x320] sm:$0xff]
    %v1289 = vld [vmem:[#allocation7 + $0x328] sm:$0xff]
    %v1290 = vld [vmem:[#allocation7 + $0x330] sm:$0xff]
    %v1291 = vld [vmem:[#allocation7 + $0x338] sm:$0xff]
    %v1292 = vld [vmem:[#allocation7 + $0x340] sm:$0xff]
    %v1293 = vld [vmem:[#allocation7 + $0x348] sm:$0xff]
    %v1294 = vld [vmem:[#allocation7 + $0x350] sm:$0xff]
    %v1295 = vld [vmem:[#allocation7 + $0x358] sm:$0xff]
    %v1296 = vld [vmem:[#allocation7 + $0x360] sm:$0xff]
    %v1297 = vld [vmem:[#allocation7 + $0x368] sm:$0xff]
    %v1298 = vld [vmem:[#allocation7 + $0x370] sm:$0xff]
    %v1299 = vld [vmem:[#allocation7 + $0x378] sm:$0xff]
    %v1300 = vld [vmem:[#allocation7 + $0x380] sm:$0xff]
    %v1301 = vld [vmem:[#allocation7 + $0x388] sm:$0xff]
    %v1302 = vld [vmem:[#allocation7 + $0x390] sm:$0xff]
    %v1303 = vld [vmem:[#allocation7 + $0x398] sm:$0xff]
    %v1304 = vld [vmem:[#allocation7 + $0x3a0] sm:$0xff]
    %v1305 = vld [vmem:[#allocation7 + $0x3a8] sm:$0xff]
    %v1306 = vld [vmem:[#allocation7 + $0x3b0] sm:$0xff]
    %v1307 = vld [vmem:[#allocation7 + $0x3b8] sm:$0xff]
    %v1308 = vld [vmem:[#allocation7 + $0x3c0] sm:$0xff]
    %v1309 = vld [vmem:[#allocation7 + $0x3c8] sm:$0xff]
    %v1310 = vld [vmem:[#allocation7 + $0x3d0] sm:$0xff]
    %v1311 = vld [vmem:[#allocation7 + $0x3d8] sm:$0xff]
    %v1312 = vld [vmem:[#allocation7 + $0x3e0] sm:$0xff]
    %v1313 = vld [vmem:[#allocation7 + $0x3e8] sm:$0xff]
    %v1314 = vld [vmem:[#allocation7 + $0x3f0] sm:$0xff]
    %v1315 = vld [vmem:[#allocation7 + $0x3f8] sm:$0xff]
    %v1316 = vld [vmem:[#allocation7 + $0x400] sm:$0xff]
    %v1317 = vld [vmem:[#allocation7 + $0x408] sm:$0xff]
    %v1318 = vld [vmem:[#allocation7 + $0x410] sm:$0xff]
    %v1319 = vld [vmem:[#allocation7 + $0x418] sm:$0xff]
    %v1320 = vld [vmem:[#allocation7 + $0x420] sm:$0xff]
    %v1321 = vld [vmem:[#allocation7 + $0x428] sm:$0xff]
    %v1322 = vld [vmem:[#allocation7 + $0x430] sm:$0xff]
    %v1323 = vld [vmem:[#allocation7 + $0x438] sm:$0xff]
    %v1324 = vld [vmem:[#allocation7 + $0x440] sm:$0xff]
    %v1325 = vld [vmem:[#allocation7 + $0x448] sm:$0xff]
    %v1326 = vld [vmem:[#allocation7 + $0x450] sm:$0xff]
    %v1327 = vld [vmem:[#allocation7 + $0x458] sm:$0xff]
    %v1328 = vld [vmem:[#allocation7 + $0x460] sm:$0xff]
    %v1329 = vld [vmem:[#allocation7 + $0x468] sm:$0xff]
    %v1330 = vld [vmem:[#allocation7 + $0x470] sm:$0xff]
    %v1331 = vld [vmem:[#allocation7 + $0x478] sm:$0xff]
    %v1332 = vld [vmem:[#allocation7 + $0x480] sm:$0xff]
    %v1333 = vld [vmem:[#allocation7 + $0x488] sm:$0xff]
    %v1334 = vld [vmem:[#allocation7 + $0x490] sm:$0xff]
    %v1335 = vld [vmem:[#allocation7 + $0x498] sm:$0xff]
    %v1336 = vld [vmem:[#allocation7 + $0x4a0] sm:$0xff]
    %v1337 = vld [vmem:[#allocation7 + $0x4a8] sm:$0xff]
    %v1338 = vld [vmem:[#allocation7 + $0x4b0] sm:$0xff]
    %v1339 = vld [vmem:[#allocation7 + $0x4b8] sm:$0xff]
    %v1340 = vld [vmem:[#allocation7 + $0x4c0] sm:$0xff]
    %v1341 = vld [vmem:[#allocation7 + $0x4c8] sm:$0xff]
    %v1342 = vld [vmem:[#allocation7 + $0x4d0] sm:$0xff]
    %v1343 = vld [vmem:[#allocation7 + $0x4d8] sm:$0xff]
    %v1344 = vld [vmem:[#allocation7 + $0x4e0] sm:$0xff]
    %v1345 = vld [vmem:[#allocation7 + $0x4e8] sm:$0xff]
    %v1346 = vld [vmem:[#allocation7 + $0x4f0] sm:$0xff]
    %v1347 = vld [vmem:[#allocation7 + $0x4f8] sm:$0xff]
    %v1348 = vld [vmem:[#allocation7 + $0x500] sm:$0xff]
    %v1349 = vld [vmem:[#allocation7 + $0x508] sm:$0xff]
    %v1350 = vld [vmem:[#allocation7 + $0x510] sm:$0xff]
    %v1351 = vld [vmem:[#allocation7 + $0x518] sm:$0xff]
    %v1352 = vld [vmem:[#allocation7 + $0x520] sm:$0xff]
    %v1353 = vld [vmem:[#allocation7 + $0x528] sm:$0xff]
    %v1354 = vld [vmem:[#allocation7 + $0x530] sm:$0xff]
    %v1355 = vld [vmem:[#allocation7 + $0x538] sm:$0xff]
    %v1356 = vld [vmem:[#allocation7 + $0x540] sm:$0xff]
    %v1357 = vld [vmem:[#allocation7 + $0x548] sm:$0xff]
    %v1358 = vld [vmem:[#allocation7 + $0x550] sm:$0xff]
    %v1359 = vld [vmem:[#allocation7 + $0x558] sm:$0xff]
    %v1360 = vld [vmem:[#allocation7 + $0x560] sm:$0xff]
    %v1361 = vld [vmem:[#allocation7 + $0x568] sm:$0xff]
    %v1362 = vld [vmem:[#allocation7 + $0x570] sm:$0xff]
    %v1363 = vld [vmem:[#allocation7 + $0x578] sm:$0xff]
    %v1364 = vld [vmem:[#allocation7 + $0x580] sm:$0xff]
    %v1365 = vld [vmem:[#allocation7 + $0x588] sm:$0xff]
    %v1366 = vld [vmem:[#allocation7 + $0x590] sm:$0xff]
    %v1367 = vld [vmem:[#allocation7 + $0x598] sm:$0xff]
    %v1368 = vld [vmem:[#allocation7 + $0x5a0] sm:$0xff]
    %v1369 = vld [vmem:[#allocation7 + $0x5a8] sm:$0xff]
    %v1370 = vld [vmem:[#allocation7 + $0x5b0] sm:$0xff]
    %v1371 = vld [vmem:[#allocation7 + $0x5b8] sm:$0xff]
    %v1372 = vld [vmem:[#allocation7 + $0x5c0] sm:$0xff]
    %v1373 = vld [vmem:[#allocation7 + $0x5c8] sm:$0xff]
    %v1374 = vld [vmem:[#allocation7 + $0x5d0] sm:$0xff]
    %v1375 = vld [vmem:[#allocation7 + $0x5d8] sm:$0xff]
    %v1376 = vld [vmem:[#allocation7 + $0x5e0] sm:$0xff]
    %v1377 = vld [vmem:[#allocation7 + $0x5e8] sm:$0xff]
    %v1378 = vld [vmem:[#allocation7 + $0x5f0] sm:$0xff]
    %v1379 = vld [vmem:[#allocation7 + $0x5f8] sm:$0xff]
    %v1380 = vld [vmem:[#allocation7 + $0x600] sm:$0xff]
    %v1381 = vld [vmem:[#allocation7 + $0x608] sm:$0xff]
    %v1382 = vld [vmem:[#allocation7 + $0x610] sm:$0xff]
    %v1383 = vld [vmem:[#allocation7 + $0x618] sm:$0xff]
    %v1384 = vld [vmem:[#allocation7 + $0x620] sm:$0xff]
    %v1385 = vld [vmem:[#allocation7 + $0x628] sm:$0xff]
    %v1386 = vld [vmem:[#allocation7 + $0x630] sm:$0xff]
    %v1387 = vld [vmem:[#allocation7 + $0x638] sm:$0xff]
    %v1388 = vld [vmem:[#allocation7 + $0x640] sm:$0xff]
    %v1389 = vld [vmem:[#allocation7 + $0x648] sm:$0xff]
    %v1390 = vld [vmem:[#allocation7 + $0x650] sm:$0xff]
    %v1391 = vld [vmem:[#allocation7 + $0x658] sm:$0xff]
    %v1392 = vld [vmem:[#allocation7 + $0x660] sm:$0xff]
    %v1393 = vld [vmem:[#allocation7 + $0x668] sm:$0xff]
    %v1394 = vld [vmem:[#allocation7 + $0x670] sm:$0xff]
    %v1395 = vld [vmem:[#allocation7 + $0x678] sm:$0xff]
    %v1396 = vld [vmem:[#allocation7 + $0x680] sm:$0xff]
    %v1397 = vld [vmem:[#allocation7 + $0x688] sm:$0xff]
    %v1398 = vld [vmem:[#allocation7 + $0x690] sm:$0xff]
    %v1399 = vld [vmem:[#allocation7 + $0x698] sm:$0xff]
    %v1400 = vld [vmem:[#allocation7 + $0x6a0] sm:$0xff]
    %v1401 = vld [vmem:[#allocation7 + $0x6a8] sm:$0xff]
    %v1402 = vld [vmem:[#allocation7 + $0x6b0] sm:$0xff]
    %v1403 = vld [vmem:[#allocation7 + $0x6b8] sm:$0xff]
    %v1404 = vld [vmem:[#allocation7 + $0x6c0] sm:$0xff]
    %v1405 = vld [vmem:[#allocation7 + $0x6c8] sm:$0xff]
    %v1406 = vld [vmem:[#allocation7 + $0x6d0] sm:$0xff]
    %v1407 = vld [vmem:[#allocation7 + $0x6d8] sm:$0xff]
    %v1408 = vld [vmem:[#allocation7 + $0x6e0] sm:$0xff]
    %v1409 = vld [vmem:[#allocation7 + $0x6e8] sm:$0xff]
    %v1410 = vld [vmem:[#allocation7 + $0x6f0] sm:$0xff]
    %v1411 = vld [vmem:[#allocation7 + $0x6f8] sm:$0xff]
    %v1412 = vld [vmem:[#allocation7 + $0x700] sm:$0xff]
    %v1413 = vld [vmem:[#allocation7 + $0x708] sm:$0xff]
    %v1414 = vld [vmem:[#allocation7 + $0x710] sm:$0xff]
    %v1415 = vld [vmem:[#allocation7 + $0x718] sm:$0xff]
    %v1416 = vld [vmem:[#allocation7 + $0x720] sm:$0xff]
    %v1417 = vld [vmem:[#allocation7 + $0x728] sm:$0xff]
    %v1418 = vld [vmem:[#allocation7 + $0x730] sm:$0xff]
    %v1419 = vld [vmem:[#allocation7 + $0x738] sm:$0xff]
    %v1420 = vld [vmem:[#allocation7 + $0x740] sm:$0xff]
    %v1421 = vld [vmem:[#allocation7 + $0x748] sm:$0xff]
    %v1422 = vld [vmem:[#allocation7 + $0x750] sm:$0xff]
    %v1423 = vld [vmem:[#allocation7 + $0x758] sm:$0xff]
    %v1424 = vld [vmem:[#allocation7 + $0x760] sm:$0xff]
    %v1425 = vld [vmem:[#allocation7 + $0x768] sm:$0xff]
    %v1426 = vld [vmem:[#allocation7 + $0x770] sm:$0xff]
    %v1427 = vld [vmem:[#allocation7 + $0x778] sm:$0xff]
    %v1428 = vld [vmem:[#allocation7 + $0x780] sm:$0xff]
    %v1429 = vld [vmem:[#allocation7 + $0x788] sm:$0xff]
    %v1430 = vld [vmem:[#allocation7 + $0x790] sm:$0xff]
    %v1431 = vld [vmem:[#allocation7 + $0x798] sm:$0xff]
    %v1432 = vld [vmem:[#allocation7 + $0x7a0] sm:$0xff]
    %v1433 = vld [vmem:[#allocation7 + $0x7a8] sm:$0xff]
    %v1434 = vld [vmem:[#allocation7 + $0x7b0] sm:$0xff]
    %v1435 = vld [vmem:[#allocation7 + $0x7b8] sm:$0xff]
    %v1436 = vld [vmem:[#allocation7 + $0x7c0] sm:$0xff]
    %v1437 = vld [vmem:[#allocation7 + $0x7c8] sm:$0xff]
    %v1438 = vld [vmem:[#allocation7 + $0x7d0] sm:$0xff]
    %v1439 = vld [vmem:[#allocation7 + $0x7d8] sm:$0xff]
    %v1440 = vld [vmem:[#allocation7 + $0x7e0] sm:$0xff]
    %v1441 = vld [vmem:[#allocation7 + $0x7e8] sm:$0xff]
    %v1442 = vld [vmem:[#allocation7 + $0x7f0] sm:$0xff]
    %v1443 = vld [vmem:[#allocation7 + $0x7f8] sm:$0xff]
    %v1444 = vld [vmem:[#allocation13] sm:$0xf]
    %v1446 = vperm.slane %v1444, 0
    %v1447 = vperm.slane %v1444, 1
    %v1448 = vperm.slane %v1444, 2
    %v1449 = vperm.slane %v1444, 3
    %v1710 = vunpack.c.l.b16 %v1188
    %v1711 = vunpack.c.h.b16 %v1188
    %v1712 = vunpack.c.l.b16 %v1189
    %v1713 = vunpack.c.h.b16 %v1189
    %v1714 = vunpack.c.l.b16 %v1190
    %v1715 = vunpack.c.h.b16 %v1190
    %v1716 = vunpack.c.l.b16 %v1191
    %v1717 = vunpack.c.h.b16 %v1191
    %v1718 = vunpack.c.l.b16 %v1192
    %v1719 = vunpack.c.h.b16 %v1192
    %v1720 = vunpack.c.l.b16 %v1193
    %v1721 = vunpack.c.h.b16 %v1193
    %v1722 = vunpack.c.l.b16 %v1194
    %v1723 = vunpack.c.h.b16 %v1194
    %v1724 = vunpack.c.l.b16 %v1195
    %v1725 = vunpack.c.h.b16 %v1195
    %v1726 = vunpack.c.l.b16 %v1196
    %v1727 = vunpack.c.h.b16 %v1196
    %v1728 = vunpack.c.l.b16 %v1197
    %v1729 = vunpack.c.h.b16 %v1197
    %v1730 = vunpack.c.l.b16 %v1198
    %v1731 = vunpack.c.h.b16 %v1198
    %v1732 = vunpack.c.l.b16 %v1199
    %v1733 = vunpack.c.h.b16 %v1199
    %v1734 = vunpack.c.l.b16 %v1200
    %v1735 = vunpack.c.h.b16 %v1200
    %v1736 = vunpack.c.l.b16 %v1201
    %v1737 = vunpack.c.h.b16 %v1201
    %v1738 = vunpack.c.l.b16 %v1202
    %v1739 = vunpack.c.h.b16 %v1202
    %v1740 = vunpack.c.l.b16 %v1203
    %v1741 = vunpack.c.h.b16 %v1203
    %v1742 = vunpack.c.l.b16 %v1204
    %v1743 = vunpack.c.h.b16 %v1204
    %v1744 = vunpack.c.l.b16 %v1205
    %v1745 = vunpack.c.h.b16 %v1205
    %v1746 = vunpack.c.l.b16 %v1206
    %v1747 = vunpack.c.h.b16 %v1206
    %v1748 = vunpack.c.l.b16 %v1207
    %v1749 = vunpack.c.h.b16 %v1207
    %v1750 = vunpack.c.l.b16 %v1208
    %v1751 = vunpack.c.h.b16 %v1208
    %v1752 = vunpack.c.l.b16 %v1209
    %v1753 = vunpack.c.h.b16 %v1209
    %v1754 = vunpack.c.l.b16 %v1210
    %v1755 = vunpack.c.h.b16 %v1210
    %v1756 = vunpack.c.l.b16 %v1211
    %v1757 = vunpack.c.h.b16 %v1211
    %v1758 = vunpack.c.l.b16 %v1212
    %v1759 = vunpack.c.h.b16 %v1212
    %v1760 = vunpack.c.l.b16 %v1213
    %v1761 = vunpack.c.h.b16 %v1213
    %v1762 = vunpack.c.l.b16 %v1214
    %v1763 = vunpack.c.h.b16 %v1214
    %v1764 = vunpack.c.l.b16 %v1215
    %v1765 = vunpack.c.h.b16 %v1215
    %v1766 = vunpack.c.l.b16 %v1216
    %v1767 = vunpack.c.h.b16 %v1216
    %v1768 = vunpack.c.l.b16 %v1217
    %v1769 = vunpack.c.h.b16 %v1217
    %v1770 = vunpack.c.l.b16 %v1218
    %v1771 = vunpack.c.h.b16 %v1218
    %v1772 = vunpack.c.l.b16 %v1219
    %v1773 = vunpack.c.h.b16 %v1219
    %v1774 = vunpack.c.l.b16 %v1220
    %v1775 = vunpack.c.h.b16 %v1220
    %v1776 = vunpack.c.l.b16 %v1221
    %v1777 = vunpack.c.h.b16 %v1221
    %v1778 = vunpack.c.l.b16 %v1222
    %v1779 = vunpack.c.h.b16 %v1222
    %v1780 = vunpack.c.l.b16 %v1223
    %v1781 = vunpack.c.h.b16 %v1223
    %v1782 = vunpack.c.l.b16 %v1224
    %v1783 = vunpack.c.h.b16 %v1224
    %v1784 = vunpack.c.l.b16 %v1225
    %v1785 = vunpack.c.h.b16 %v1225
    %v1786 = vunpack.c.l.b16 %v1226
    %v1787 = vunpack.c.h.b16 %v1226
    %v1788 = vunpack.c.l.b16 %v1227
    %v1789 = vunpack.c.h.b16 %v1227
    %v1790 = vunpack.c.l.b16 %v1228
    %v1791 = vunpack.c.h.b16 %v1228
    %v1792 = vunpack.c.l.b16 %v1229
    %v1793 = vunpack.c.h.b16 %v1229
    %v1794 = vunpack.c.l.b16 %v1230
    %v1795 = vunpack.c.h.b16 %v1230
    %v1796 = vunpack.c.l.b16 %v1231
    %v1797 = vunpack.c.h.b16 %v1231
    %v1798 = vunpack.c.l.b16 %v1232
    %v1799 = vunpack.c.h.b16 %v1232
    %v1800 = vunpack.c.l.b16 %v1233
    %v1801 = vunpack.c.h.b16 %v1233
    %v1802 = vunpack.c.l.b16 %v1234
    %v1803 = vunpack.c.h.b16 %v1234
    %v1804 = vunpack.c.l.b16 %v1235
    %v1805 = vunpack.c.h.b16 %v1235
    %v1806 = vunpack.c.l.b16 %v1236
    %v1807 = vunpack.c.h.b16 %v1236
    %v1808 = vunpack.c.l.b16 %v1237
    %v1809 = vunpack.c.h.b16 %v1237
    %v1810 = vunpack.c.l.b16 %v1238
    %v1811 = vunpack.c.h.b16 %v1238
    %v1812 = vunpack.c.l.b16 %v1239
    %v1813 = vunpack.c.h.b16 %v1239
    %v1814 = vunpack.c.l.b16 %v1240
    %v1815 = vunpack.c.h.b16 %v1240
    %v1816 = vunpack.c.l.b16 %v1241
    %v1817 = vunpack.c.h.b16 %v1241
    %v1818 = vunpack.c.l.b16 %v1242
    %v1819 = vunpack.c.h.b16 %v1242
    %v1820 = vunpack.c.l.b16 %v1243
    %v1821 = vunpack.c.h.b16 %v1243
    %v1822 = vunpack.c.l.b16 %v1244
    %v1823 = vunpack.c.h.b16 %v1244
    %v1824 = vunpack.c.l.b16 %v1245
    %v1825 = vunpack.c.h.b16 %v1245
    %v1826 = vunpack.c.l.b16 %v1246
    %v1827 = vunpack.c.h.b16 %v1246
    %v1828 = vunpack.c.l.b16 %v1247
    %v1829 = vunpack.c.h.b16 %v1247
    %v1830 = vunpack.c.l.b16 %v1248
    %v1831 = vunpack.c.h.b16 %v1248
    %v1832 = vunpack.c.l.b16 %v1249
    %v1833 = vunpack.c.h.b16 %v1249
    %v1834 = vunpack.c.l.b16 %v1250
    %v1835 = vunpack.c.h.b16 %v1250
    %v1836 = vunpack.c.l.b16 %v1251
    %v1837 = vunpack.c.h.b16 %v1251
    %v1838 = vunpack.c.l.b16 %v1252
    %v1839 = vunpack.c.h.b16 %v1252
    %v1840 = vunpack.c.l.b16 %v1253
    %v1841 = vunpack.c.h.b16 %v1253
    %v1842 = vunpack.c.l.b16 %v1254
    %v1843 = vunpack.c.h.b16 %v1254
    %v1844 = vunpack.c.l.b16 %v1255
    %v1845 = vunpack.c.h.b16 %v1255
    %v1846 = vunpack.c.l.b16 %v1256
    %v1847 = vunpack.c.h.b16 %v1256
    %v1848 = vunpack.c.l.b16 %v1257
    %v1849 = vunpack.c.h.b16 %v1257
    %v1850 = vunpack.c.l.b16 %v1258
    %v1851 = vunpack.c.h.b16 %v1258
    %v1852 = vunpack.c.l.b16 %v1259
    %v1853 = vunpack.c.h.b16 %v1259
    %v1854 = vunpack.c.l.b16 %v1260
    %v1855 = vunpack.c.h.b16 %v1260
    %v1856 = vunpack.c.l.b16 %v1261
    %v1857 = vunpack.c.h.b16 %v1261
    %v1858 = vunpack.c.l.b16 %v1262
    %v1859 = vunpack.c.h.b16 %v1262
    %v1860 = vunpack.c.l.b16 %v1263
    %v1861 = vunpack.c.h.b16 %v1263
    %v1862 = vunpack.c.l.b16 %v1264
    %v1863 = vunpack.c.h.b16 %v1264
    %v1864 = vunpack.c.l.b16 %v1265
    %v1865 = vunpack.c.h.b16 %v1265
    %v1866 = vunpack.c.l.b16 %v1266
    %v1867 = vunpack.c.h.b16 %v1266
    %v1868 = vunpack.c.l.b16 %v1267
    %v1869 = vunpack.c.h.b16 %v1267
    %v1870 = vunpack.c.l.b16 %v1268
    %v1871 = vunpack.c.h.b16 %v1268
    %v1872 = vunpack.c.l.b16 %v1269
    %v1873 = vunpack.c.h.b16 %v1269
    %v1874 = vunpack.c.l.b16 %v1270
    %v1875 = vunpack.c.h.b16 %v1270
    %v1876 = vunpack.c.l.b16 %v1271
    %v1877 = vunpack.c.h.b16 %v1271
    %v1878 = vunpack.c.l.b16 %v1272
    %v1879 = vunpack.c.h.b16 %v1272
    %v1880 = vunpack.c.l.b16 %v1273
    %v1881 = vunpack.c.h.b16 %v1273
    %v1882 = vunpack.c.l.b16 %v1274
    %v1883 = vunpack.c.h.b16 %v1274
    %v1884 = vunpack.c.l.b16 %v1275
    %v1885 = vunpack.c.h.b16 %v1275
    %v1886 = vunpack.c.l.b16 %v1276
    %v1887 = vunpack.c.h.b16 %v1276
    %v1888 = vunpack.c.l.b16 %v1277
    %v1889 = vunpack.c.h.b16 %v1277
    %v1890 = vunpack.c.l.b16 %v1278
    %v1891 = vunpack.c.h.b16 %v1278
    %v1892 = vunpack.c.l.b16 %v1279
    %v1893 = vunpack.c.h.b16 %v1279
    %v1894 = vunpack.c.l.b16 %v1280
    %v1895 = vunpack.c.h.b16 %v1280
    %v1896 = vunpack.c.l.b16 %v1281
    %v1897 = vunpack.c.h.b16 %v1281
    %v1898 = vunpack.c.l.b16 %v1282
    %v1899 = vunpack.c.h.b16 %v1282
    %v1900 = vunpack.c.l.b16 %v1283
    %v1901 = vunpack.c.h.b16 %v1283
    %v1902 = vunpack.c.l.b16 %v1284
    %v1903 = vunpack.c.h.b16 %v1284
    %v1904 = vunpack.c.l.b16 %v1285
    %v1905 = vunpack.c.h.b16 %v1285
    %v1906 = vunpack.c.l.b16 %v1286
    %v1907 = vunpack.c.h.b16 %v1286
    %v1908 = vunpack.c.l.b16 %v1287
    %v1909 = vunpack.c.h.b16 %v1287
    %v1910 = vunpack.c.l.b16 %v1288
    %v1911 = vunpack.c.h.b16 %v1288
    %v1912 = vunpack.c.l.b16 %v1289
    %v1913 = vunpack.c.h.b16 %v1289
    %v1914 = vunpack.c.l.b16 %v1290
    %v1915 = vunpack.c.h.b16 %v1290
    %v1916 = vunpack.c.l.b16 %v1291
    %v1917 = vunpack.c.h.b16 %v1291
    %v1918 = vunpack.c.l.b16 %v1292
    %v1919 = vunpack.c.h.b16 %v1292
    %v1920 = vunpack.c.l.b16 %v1293
    %v1921 = vunpack.c.h.b16 %v1293
    %v1922 = vunpack.c.l.b16 %v1294
    %v1923 = vunpack.c.h.b16 %v1294
    %v1924 = vunpack.c.l.b16 %v1295
    %v1925 = vunpack.c.h.b16 %v1295
    %v1926 = vunpack.c.l.b16 %v1296
    %v1927 = vunpack.c.h.b16 %v1296
    %v1928 = vunpack.c.l.b16 %v1297
    %v1929 = vunpack.c.h.b16 %v1297
    %v1930 = vunpack.c.l.b16 %v1298
    %v1931 = vunpack.c.h.b16 %v1298
    %v1932 = vunpack.c.l.b16 %v1299
    %v1933 = vunpack.c.h.b16 %v1299
    %v1934 = vunpack.c.l.b16 %v1300
    %v1935 = vunpack.c.h.b16 %v1300
    %v1936 = vunpack.c.l.b16 %v1301
    %v1937 = vunpack.c.h.b16 %v1301
    %v1938 = vunpack.c.l.b16 %v1302
    %v1939 = vunpack.c.h.b16 %v1302
    %v1940 = vunpack.c.l.b16 %v1303
    %v1941 = vunpack.c.h.b16 %v1303
    %v1942 = vunpack.c.l.b16 %v1304
    %v1943 = vunpack.c.h.b16 %v1304
    %v1944 = vunpack.c.l.b16 %v1305
    %v1945 = vunpack.c.h.b16 %v1305
    %v1946 = vunpack.c.l.b16 %v1306
    %v1947 = vunpack.c.h.b16 %v1306
    %v1948 = vunpack.c.l.b16 %v1307
    %v1949 = vunpack.c.h.b16 %v1307
    %v1950 = vunpack.c.l.b16 %v1308
    %v1951 = vunpack.c.h.b16 %v1308
    %v1952 = vunpack.c.l.b16 %v1309
    %v1953 = vunpack.c.h.b16 %v1309
    %v1954 = vunpack.c.l.b16 %v1310
    %v1955 = vunpack.c.h.b16 %v1310
    %v1956 = vunpack.c.l.b16 %v1311
    %v1957 = vunpack.c.h.b16 %v1311
    %v1958 = vunpack.c.l.b16 %v1312
    %v1959 = vunpack.c.h.b16 %v1312
    %v1960 = vunpack.c.l.b16 %v1313
    %v1961 = vunpack.c.h.b16 %v1313
    %v1962 = vunpack.c.l.b16 %v1314
    %v1963 = vunpack.c.h.b16 %v1314
    %v1964 = vunpack.c.l.b16 %v1315
    %v1965 = vunpack.c.h.b16 %v1315
    %v1966 = vunpack.c.l.b16 %v1316
    %v1967 = vunpack.c.h.b16 %v1316
    %v1968 = vunpack.c.l.b16 %v1317
    %v1969 = vunpack.c.h.b16 %v1317
    %v1970 = vunpack.c.l.b16 %v1318
    %v1971 = vunpack.c.h.b16 %v1318
    %v1972 = vunpack.c.l.b16 %v1319
    %v1973 = vunpack.c.h.b16 %v1319
    %v1974 = vunpack.c.l.b16 %v1320
    %v1975 = vunpack.c.h.b16 %v1320
    %v1976 = vunpack.c.l.b16 %v1321
    %v1977 = vunpack.c.h.b16 %v1321
    %v1978 = vunpack.c.l.b16 %v1322
    %v1979 = vunpack.c.h.b16 %v1322
    %v1980 = vunpack.c.l.b16 %v1323
    %v1981 = vunpack.c.h.b16 %v1323
    %v1982 = vunpack.c.l.b16 %v1324
    %v1983 = vunpack.c.h.b16 %v1324
    %v1984 = vunpack.c.l.b16 %v1325
    %v1985 = vunpack.c.h.b16 %v1325
    %v1986 = vunpack.c.l.b16 %v1326
    %v1987 = vunpack.c.h.b16 %v1326
    %v1988 = vunpack.c.l.b16 %v1327
    %v1989 = vunpack.c.h.b16 %v1327
    %v1990 = vunpack.c.l.b16 %v1328
    %v1991 = vunpack.c.h.b16 %v1328
    %v1992 = vunpack.c.l.b16 %v1329
    %v1993 = vunpack.c.h.b16 %v1329
    %v1994 = vunpack.c.l.b16 %v1330
    %v1995 = vunpack.c.h.b16 %v1330
    %v1996 = vunpack.c.l.b16 %v1331
    %v1997 = vunpack.c.h.b16 %v1331
    %v1998 = vunpack.c.l.b16 %v1332
    %v1999 = vunpack.c.h.b16 %v1332
    %v2000 = vunpack.c.l.b16 %v1333
    %v2001 = vunpack.c.h.b16 %v1333
    %v2002 = vunpack.c.l.b16 %v1334
    %v2003 = vunpack.c.h.b16 %v1334
    %v2004 = vunpack.c.l.b16 %v1335
    %v2005 = vunpack.c.h.b16 %v1335
    %v2006 = vunpack.c.l.b16 %v1336
    %v2007 = vunpack.c.h.b16 %v1336
    %v2008 = vunpack.c.l.b16 %v1337
    %v2009 = vunpack.c.h.b16 %v1337
    %v2010 = vunpack.c.l.b16 %v1338
    %v2011 = vunpack.c.h.b16 %v1338
    %v2012 = vunpack.c.l.b16 %v1339
    %v2013 = vunpack.c.h.b16 %v1339
    %v2014 = vunpack.c.l.b16 %v1340
    %v2015 = vunpack.c.h.b16 %v1340
    %v2016 = vunpack.c.l.b16 %v1341
    %v2017 = vunpack.c.h.b16 %v1341
    %v2018 = vunpack.c.l.b16 %v1342
    %v2019 = vunpack.c.h.b16 %v1342
    %v2020 = vunpack.c.l.b16 %v1343
    %v2021 = vunpack.c.h.b16 %v1343
    %v2022 = vunpack.c.l.b16 %v1344
    %v2023 = vunpack.c.h.b16 %v1344
    %v2024 = vunpack.c.l.b16 %v1345
    %v2025 = vunpack.c.h.b16 %v1345
    %v2026 = vunpack.c.l.b16 %v1346
    %v2027 = vunpack.c.h.b16 %v1346
    %v2028 = vunpack.c.l.b16 %v1347
    %v2029 = vunpack.c.h.b16 %v1347
    %v2030 = vunpack.c.l.b16 %v1348
    %v2031 = vunpack.c.h.b16 %v1348
    %v2032 = vunpack.c.l.b16 %v1349
    %v2033 = vunpack.c.h.b16 %v1349
    %v2034 = vunpack.c.l.b16 %v1350
    %v2035 = vunpack.c.h.b16 %v1350
    %v2036 = vunpack.c.l.b16 %v1351
    %v2037 = vunpack.c.h.b16 %v1351
    %v2038 = vunpack.c.l.b16 %v1352
    %v2039 = vunpack.c.h.b16 %v1352
    %v2040 = vunpack.c.l.b16 %v1353
    %v2041 = vunpack.c.h.b16 %v1353
    %v2042 = vunpack.c.l.b16 %v1354
    %v2043 = vunpack.c.h.b16 %v1354
    %v2044 = vunpack.c.l.b16 %v1355
    %v2045 = vunpack.c.h.b16 %v1355
    %v2046 = vunpack.c.l.b16 %v1356
    %v2047 = vunpack.c.h.b16 %v1356
    %v2048 = vunpack.c.l.b16 %v1357
    %v2049 = vunpack.c.h.b16 %v1357
    %v2050 = vunpack.c.l.b16 %v1358
    %v2051 = vunpack.c.h.b16 %v1358
    %v2052 = vunpack.c.l.b16 %v1359
    %v2053 = vunpack.c.h.b16 %v1359
    %v2054 = vunpack.c.l.b16 %v1360
    %v2055 = vunpack.c.h.b16 %v1360
    %v2056 = vunpack.c.l.b16 %v1361
    %v2057 = vunpack.c.h.b16 %v1361
    %v2058 = vunpack.c.l.b16 %v1362
    %v2059 = vunpack.c.h.b16 %v1362
    %v2060 = vunpack.c.l.b16 %v1363
    %v2061 = vunpack.c.h.b16 %v1363
    %v2062 = vunpack.c.l.b16 %v1364
    %v2063 = vunpack.c.h.b16 %v1364
    %v2064 = vunpack.c.l.b16 %v1365
    %v2065 = vunpack.c.h.b16 %v1365
    %v2066 = vunpack.c.l.b16 %v1366
    %v2067 = vunpack.c.h.b16 %v1366
    %v2068 = vunpack.c.l.b16 %v1367
    %v2069 = vunpack.c.h.b16 %v1367
    %v2070 = vunpack.c.l.b16 %v1368
    %v2071 = vunpack.c.h.b16 %v1368
    %v2072 = vunpack.c.l.b16 %v1369
    %v2073 = vunpack.c.h.b16 %v1369
    %v2074 = vunpack.c.l.b16 %v1370
    %v2075 = vunpack.c.h.b16 %v1370
    %v2076 = vunpack.c.l.b16 %v1371
    %v2077 = vunpack.c.h.b16 %v1371
    %v2078 = vunpack.c.l.b16 %v1372
    %v2079 = vunpack.c.h.b16 %v1372
    %v2080 = vunpack.c.l.b16 %v1373
    %v2081 = vunpack.c.h.b16 %v1373
    %v2082 = vunpack.c.l.b16 %v1374
    %v2083 = vunpack.c.h.b16 %v1374
    %v2084 = vunpack.c.l.b16 %v1375
    %v2085 = vunpack.c.h.b16 %v1375
    %v2086 = vunpack.c.l.b16 %v1376
    %v2087 = vunpack.c.h.b16 %v1376
    %v2088 = vunpack.c.l.b16 %v1377
    %v2089 = vunpack.c.h.b16 %v1377
    %v2090 = vunpack.c.l.b16 %v1378
    %v2091 = vunpack.c.h.b16 %v1378
    %v2092 = vunpack.c.l.b16 %v1379
    %v2093 = vunpack.c.h.b16 %v1379
    %v2094 = vunpack.c.l.b16 %v1380
    %v2095 = vunpack.c.h.b16 %v1380
    %v2096 = vunpack.c.l.b16 %v1381
    %v2097 = vunpack.c.h.b16 %v1381
    %v2098 = vunpack.c.l.b16 %v1382
    %v2099 = vunpack.c.h.b16 %v1382
    %v2100 = vunpack.c.l.b16 %v1383
    %v2101 = vunpack.c.h.b16 %v1383
    %v2102 = vunpack.c.l.b16 %v1384
    %v2103 = vunpack.c.h.b16 %v1384
    %v2104 = vunpack.c.l.b16 %v1385
    %v2105 = vunpack.c.h.b16 %v1385
    %v2106 = vunpack.c.l.b16 %v1386
    %v2107 = vunpack.c.h.b16 %v1386
    %v2108 = vunpack.c.l.b16 %v1387
    %v2109 = vunpack.c.h.b16 %v1387
    %v2110 = vunpack.c.l.b16 %v1388
    %v2111 = vunpack.c.h.b16 %v1388
    %v2112 = vunpack.c.l.b16 %v1389
    %v2113 = vunpack.c.h.b16 %v1389
    %v2114 = vunpack.c.l.b16 %v1390
    %v2115 = vunpack.c.h.b16 %v1390
    %v2116 = vunpack.c.l.b16 %v1391
    %v2117 = vunpack.c.h.b16 %v1391
    %v2118 = vunpack.c.l.b16 %v1392
    %v2119 = vunpack.c.h.b16 %v1392
    %v2120 = vunpack.c.l.b16 %v1393
    %v2121 = vunpack.c.h.b16 %v1393
    %v2122 = vunpack.c.l.b16 %v1394
    %v2123 = vunpack.c.h.b16 %v1394
    %v2124 = vunpack.c.l.b16 %v1395
    %v2125 = vunpack.c.h.b16 %v1395
    %v2126 = vunpack.c.l.b16 %v1396
    %v2127 = vunpack.c.h.b16 %v1396
    %v2128 = vunpack.c.l.b16 %v1397
    %v2129 = vunpack.c.h.b16 %v1397
    %v2130 = vunpack.c.l.b16 %v1398
    %v2131 = vunpack.c.h.b16 %v1398
    %v2132 = vunpack.c.l.b16 %v1399
    %v2133 = vunpack.c.h.b16 %v1399
    %v2134 = vunpack.c.l.b16 %v1400
    %v2135 = vunpack.c.h.b16 %v1400
    %v2136 = vunpack.c.l.b16 %v1401
    %v2137 = vunpack.c.h.b16 %v1401
    %v2138 = vunpack.c.l.b16 %v1402
    %v2139 = vunpack.c.h.b16 %v1402
    %v2140 = vunpack.c.l.b16 %v1403
    %v2141 = vunpack.c.h.b16 %v1403
    %v2142 = vunpack.c.l.b16 %v1404
    %v2143 = vunpack.c.h.b16 %v1404
    %v2144 = vunpack.c.l.b16 %v1405
    %v2145 = vunpack.c.h.b16 %v1405
    %v2146 = vunpack.c.l.b16 %v1406
    %v2147 = vunpack.c.h.b16 %v1406
    %v2148 = vunpack.c.l.b16 %v1407
    %v2149 = vunpack.c.h.b16 %v1407
    %v2150 = vunpack.c.l.b16 %v1408
    %v2151 = vunpack.c.h.b16 %v1408
    %v2152 = vunpack.c.l.b16 %v1409
    %v2153 = vunpack.c.h.b16 %v1409
    %v2154 = vunpack.c.l.b16 %v1410
    %v2155 = vunpack.c.h.b16 %v1410
    %v2156 = vunpack.c.l.b16 %v1411
    %v2157 = vunpack.c.h.b16 %v1411
    %v2158 = vunpack.c.l.b16 %v1412
    %v2159 = vunpack.c.h.b16 %v1412
    %v2160 = vunpack.c.l.b16 %v1413
    %v2161 = vunpack.c.h.b16 %v1413
    %v2162 = vunpack.c.l.b16 %v1414
    %v2163 = vunpack.c.h.b16 %v1414
    %v2164 = vunpack.c.l.b16 %v1415
    %v2165 = vunpack.c.h.b16 %v1415
    %v2166 = vunpack.c.l.b16 %v1416
    %v2167 = vunpack.c.h.b16 %v1416
    %v2168 = vunpack.c.l.b16 %v1417
    %v2169 = vunpack.c.h.b16 %v1417
    %v2170 = vunpack.c.l.b16 %v1418
    %v2171 = vunpack.c.h.b16 %v1418
    %v2172 = vunpack.c.l.b16 %v1419
    %v2173 = vunpack.c.h.b16 %v1419
    %v2174 = vunpack.c.l.b16 %v1420
    %v2175 = vunpack.c.h.b16 %v1420
    %v2176 = vunpack.c.l.b16 %v1421
    %v2177 = vunpack.c.h.b16 %v1421
    %v2178 = vunpack.c.l.b16 %v1422
    %v2179 = vunpack.c.h.b16 %v1422
    %v2180 = vunpack.c.l.b16 %v1423
    %v2181 = vunpack.c.h.b16 %v1423
    %v2182 = vunpack.c.l.b16 %v1424
    %v2183 = vunpack.c.h.b16 %v1424
    %v2184 = vunpack.c.l.b16 %v1425
    %v2185 = vunpack.c.h.b16 %v1425
    %v2186 = vunpack.c.l.b16 %v1426
    %v2187 = vunpack.c.h.b16 %v1426
    %v2188 = vunpack.c.l.b16 %v1427
    %v2189 = vunpack.c.h.b16 %v1427
    %v2190 = vunpack.c.l.b16 %v1428
    %v2191 = vunpack.c.h.b16 %v1428
    %v2192 = vunpack.c.l.b16 %v1429
    %v2193 = vunpack.c.h.b16 %v1429
    %v2194 = vunpack.c.l.b16 %v1430
    %v2195 = vunpack.c.h.b16 %v1430
    %v2196 = vunpack.c.l.b16 %v1431
    %v2197 = vunpack.c.h.b16 %v1431
    %v2198 = vunpack.c.l.b16 %v1432
    %v2199 = vunpack.c.h.b16 %v1432
    %v2200 = vunpack.c.l.b16 %v1433
    %v2201 = vunpack.c.h.b16 %v1433
    %v2202 = vunpack.c.l.b16 %v1434
    %v2203 = vunpack.c.h.b16 %v1434
    %v2204 = vunpack.c.l.b16 %v1435
    %v2205 = vunpack.c.h.b16 %v1435
    %v2206 = vunpack.c.l.b16 %v1436
    %v2207 = vunpack.c.h.b16 %v1436
    %v2208 = vunpack.c.l.b16 %v1437
    %v2209 = vunpack.c.h.b16 %v1437
    %v2210 = vunpack.c.l.b16 %v1438
    %v2211 = vunpack.c.h.b16 %v1438
    %v2212 = vunpack.c.l.b16 %v1439
    %v2213 = vunpack.c.h.b16 %v1439
    %v2214 = vunpack.c.l.b16 %v1440
    %v2215 = vunpack.c.h.b16 %v1440
    %v2216 = vunpack.c.l.b16 %v1441
    %v2217 = vunpack.c.h.b16 %v1441
    %v2218 = vunpack.c.l.b16 %v1442
    %v2219 = vunpack.c.h.b16 %v1442
    %v2220 = vunpack.c.l.b16 %v1443
    %v2221 = vunpack.c.h.b16 %v1443
    %v2222 = vpack.c.b16 %v1714, %v1710
    %v2223 = vpack.c.b16 %v1715, %v1711
    %v2224 = vpack.c.b16 %v1716, %v1712
    %v2225 = vpack.c.b16 %v1717, %v1713
    %v2226 = vpack.c.b16 %v1722, %v1718
    %v2227 = vpack.c.b16 %v1723, %v1719
    %v2228 = vpack.c.b16 %v1724, %v1720
    %v2229 = vpack.c.b16 %v1725, %v1721
    %v2230 = vpack.c.b16 %v1730, %v1726
    %v2231 = vpack.c.b16 %v1731, %v1727
    %v2232 = vpack.c.b16 %v1732, %v1728
    %v2233 = vpack.c.b16 %v1733, %v1729
    %v2234 = vpack.c.b16 %v1738, %v1734
    %v2235 = vpack.c.b16 %v1739, %v1735
    %v2236 = vpack.c.b16 %v1740, %v1736
    %v2237 = vpack.c.b16 %v1741, %v1737
    %v2238 = vpack.c.b16 %v1746, %v1742
    %v2239 = vpack.c.b16 %v1747, %v1743
    %v2240 = vpack.c.b16 %v1748, %v1744
    %v2241 = vpack.c.b16 %v1749, %v1745
    %v2242 = vpack.c.b16 %v1754, %v1750
    %v2243 = vpack.c.b16 %v1755, %v1751
    %v2244 = vpack.c.b16 %v1756, %v1752
    %v2245 = vpack.c.b16 %v1757, %v1753
    %v2246 = vpack.c.b16 %v1762, %v1758
    %v2247 = vpack.c.b16 %v1763, %v1759
    %v2248 = vpack.c.b16 %v1764, %v1760
    %v2249 = vpack.c.b16 %v1765, %v1761
    %v2250 = vpack.c.b16 %v1770, %v1766
    %v2251 = vpack.c.b16 %v1771, %v1767
    %v2252 = vpack.c.b16 %v1772, %v1768
    %v2253 = vpack.c.b16 %v1773, %v1769
    %v2254 = vpack.c.b16 %v1778, %v1774
    %v2255 = vpack.c.b16 %v1779, %v1775
    %v2256 = vpack.c.b16 %v1780, %v1776
    %v2257 = vpack.c.b16 %v1781, %v1777
    %v2258 = vpack.c.b16 %v1786, %v1782
    %v2259 = vpack.c.b16 %v1787, %v1783
    %v2260 = vpack.c.b16 %v1788, %v1784
    %v2261 = vpack.c.b16 %v1789, %v1785
    %v2262 = vpack.c.b16 %v1794, %v1790
    %v2263 = vpack.c.b16 %v1795, %v1791
    %v2264 = vpack.c.b16 %v1796, %v1792
    %v2265 = vpack.c.b16 %v1797, %v1793
    %v2266 = vpack.c.b16 %v1802, %v1798
    %v2267 = vpack.c.b16 %v1803, %v1799
    %v2268 = vpack.c.b16 %v1804, %v1800
    %v2269 = vpack.c.b16 %v1805, %v1801
    %v2270 = vpack.c.b16 %v1810, %v1806
    %v2271 = vpack.c.b16 %v1811, %v1807
    %v2272 = vpack.c.b16 %v1812, %v1808
    %v2273 = vpack.c.b16 %v1813, %v1809
    %v2274 = vpack.c.b16 %v1818, %v1814
    %v2275 = vpack.c.b16 %v1819, %v1815
    %v2276 = vpack.c.b16 %v1820, %v1816
    %v2277 = vpack.c.b16 %v1821, %v1817
    %v2278 = vpack.c.b16 %v1826, %v1822
    %v2279 = vpack.c.b16 %v1827, %v1823
    %v2280 = vpack.c.b16 %v1828, %v1824
    %v2281 = vpack.c.b16 %v1829, %v1825
    %v2282 = vpack.c.b16 %v1834, %v1830
    %v2283 = vpack.c.b16 %v1835, %v1831
    %v2284 = vpack.c.b16 %v1836, %v1832
    %v2285 = vpack.c.b16 %v1837, %v1833
    %v2286 = vpack.c.b16 %v1842, %v1838
    %v2287 = vpack.c.b16 %v1843, %v1839
    %v2288 = vpack.c.b16 %v1844, %v1840
    %v2289 = vpack.c.b16 %v1845, %v1841
    %v2290 = vpack.c.b16 %v1850, %v1846
    %v2291 = vpack.c.b16 %v1851, %v1847
    %v2292 = vpack.c.b16 %v1852, %v1848
    %v2293 = vpack.c.b16 %v1853, %v1849
    %v2294 = vpack.c.b16 %v1858, %v1854
    %v2295 = vpack.c.b16 %v1859, %v1855
    %v2296 = vpack.c.b16 %v1860, %v1856
    %v2297 = vpack.c.b16 %v1861, %v1857
    %v2298 = vpack.c.b16 %v1866, %v1862
    %v2299 = vpack.c.b16 %v1867, %v1863
    %v2300 = vpack.c.b16 %v1868, %v1864
    %v2301 = vpack.c.b16 %v1869, %v1865
    %v2302 = vpack.c.b16 %v1874, %v1870
    %v2303 = vpack.c.b16 %v1875, %v1871
    %v2304 = vpack.c.b16 %v1876, %v1872
    %v2305 = vpack.c.b16 %v1877, %v1873
    %v2306 = vpack.c.b16 %v1882, %v1878
    %v2307 = vpack.c.b16 %v1883, %v1879
    %v2308 = vpack.c.b16 %v1884, %v1880
    %v2309 = vpack.c.b16 %v1885, %v1881
    %v2310 = vpack.c.b16 %v1890, %v1886
    %v2311 = vpack.c.b16 %v1891, %v1887
    %v2312 = vpack.c.b16 %v1892, %v1888
    %v2313 = vpack.c.b16 %v1893, %v1889
    %v2314 = vpack.c.b16 %v1898, %v1894
    %v2315 = vpack.c.b16 %v1899, %v1895
    %v2316 = vpack.c.b16 %v1900, %v1896
    %v2317 = vpack.c.b16 %v1901, %v1897
    %v2318 = vpack.c.b16 %v1906, %v1902
    %v2319 = vpack.c.b16 %v1907, %v1903
    %v2320 = vpack.c.b16 %v1908, %v1904
    %v2321 = vpack.c.b16 %v1909, %v1905
    %v2322 = vpack.c.b16 %v1914, %v1910
    %v2323 = vpack.c.b16 %v1915, %v1911
    %v2324 = vpack.c.b16 %v1916, %v1912
    %v2325 = vpack.c.b16 %v1917, %v1913
    %v2326 = vpack.c.b16 %v1922, %v1918
    %v2327 = vpack.c.b16 %v1923, %v1919
    %v2328 = vpack.c.b16 %v1924, %v1920
    %v2329 = vpack.c.b16 %v1925, %v1921
    %v2330 = vpack.c.b16 %v1930, %v1926
    %v2331 = vpack.c.b16 %v1931, %v1927
    %v2332 = vpack.c.b16 %v1932, %v1928
    %v2333 = vpack.c.b16 %v1933, %v1929
    %v2334 = vpack.c.b16 %v1938, %v1934
    %v2335 = vpack.c.b16 %v1939, %v1935
    %v2336 = vpack.c.b16 %v1940, %v1936
    %v2337 = vpack.c.b16 %v1941, %v1937
    %v2338 = vpack.c.b16 %v1946, %v1942
    %v2339 = vpack.c.b16 %v1947, %v1943
    %v2340 = vpack.c.b16 %v1948, %v1944
    %v2341 = vpack.c.b16 %v1949, %v1945
    %v2342 = vpack.c.b16 %v1954, %v1950
    %v2343 = vpack.c.b16 %v1955, %v1951
    %v2344 = vpack.c.b16 %v1956, %v1952
    %v2345 = vpack.c.b16 %v1957, %v1953
    %v2346 = vpack.c.b16 %v1962, %v1958
    %v2347 = vpack.c.b16 %v1963, %v1959
    %v2348 = vpack.c.b16 %v1964, %v1960
    %v2349 = vpack.c.b16 %v1965, %v1961
    %v2350 = vpack.c.b16 %v1970, %v1966
    %v2351 = vpack.c.b16 %v1971, %v1967
    %v2352 = vpack.c.b16 %v1972, %v1968
    %v2353 = vpack.c.b16 %v1973, %v1969
    %v2354 = vpack.c.b16 %v1978, %v1974
    %v2355 = vpack.c.b16 %v1979, %v1975
    %v2356 = vpack.c.b16 %v1980, %v1976
    %v2357 = vpack.c.b16 %v1981, %v1977
    %v2358 = vpack.c.b16 %v1986, %v1982
    %v2359 = vpack.c.b16 %v1987, %v1983
    %v2360 = vpack.c.b16 %v1988, %v1984
    %v2361 = vpack.c.b16 %v1989, %v1985
    %v2362 = vpack.c.b16 %v1994, %v1990
    %v2363 = vpack.c.b16 %v1995, %v1991
    %v2364 = vpack.c.b16 %v1996, %v1992
    %v2365 = vpack.c.b16 %v1997, %v1993
    %v2366 = vpack.c.b16 %v2002, %v1998
    %v2367 = vpack.c.b16 %v2003, %v1999
    %v2368 = vpack.c.b16 %v2004, %v2000
    %v2369 = vpack.c.b16 %v2005, %v2001
    %v2370 = vpack.c.b16 %v2010, %v2006
    %v2371 = vpack.c.b16 %v2011, %v2007
    %v2372 = vpack.c.b16 %v2012, %v2008
    %v2373 = vpack.c.b16 %v2013, %v2009
    %v2374 = vpack.c.b16 %v2018, %v2014
    %v2375 = vpack.c.b16 %v2019, %v2015
    %v2376 = vpack.c.b16 %v2020, %v2016
    %v2377 = vpack.c.b16 %v2021, %v2017
    %v2378 = vpack.c.b16 %v2026, %v2022
    %v2379 = vpack.c.b16 %v2027, %v2023
    %v2380 = vpack.c.b16 %v2028, %v2024
    %v2381 = vpack.c.b16 %v2029, %v2025
    %v2382 = vpack.c.b16 %v2034, %v2030
    %v2383 = vpack.c.b16 %v2035, %v2031
    %v2384 = vpack.c.b16 %v2036, %v2032
    %v2385 = vpack.c.b16 %v2037, %v2033
    %v2386 = vpack.c.b16 %v2042, %v2038
    %v2387 = vpack.c.b16 %v2043, %v2039
    %v2388 = vpack.c.b16 %v2044, %v2040
    %v2389 = vpack.c.b16 %v2045, %v2041
    %v2390 = vpack.c.b16 %v2050, %v2046
    %v2391 = vpack.c.b16 %v2051, %v2047
    %v2392 = vpack.c.b16 %v2052, %v2048
    %v2393 = vpack.c.b16 %v2053, %v2049
    %v2394 = vpack.c.b16 %v2058, %v2054
    %v2395 = vpack.c.b16 %v2059, %v2055
    %v2396 = vpack.c.b16 %v2060, %v2056
    %v2397 = vpack.c.b16 %v2061, %v2057
    %v2398 = vpack.c.b16 %v2066, %v2062
    %v2399 = vpack.c.b16 %v2067, %v2063
    %v2400 = vpack.c.b16 %v2068, %v2064
    %v2401 = vpack.c.b16 %v2069, %v2065
    %v2402 = vpack.c.b16 %v2074, %v2070
    %v2403 = vpack.c.b16 %v2075, %v2071
    %v2404 = vpack.c.b16 %v2076, %v2072
    %v2405 = vpack.c.b16 %v2077, %v2073
    %v2406 = vpack.c.b16 %v2082, %v2078
    %v2407 = vpack.c.b16 %v2083, %v2079
    %v2408 = vpack.c.b16 %v2084, %v2080
    %v2409 = vpack.c.b16 %v2085, %v2081
    %v2410 = vpack.c.b16 %v2090, %v2086
    %v2411 = vpack.c.b16 %v2091, %v2087
    %v2412 = vpack.c.b16 %v2092, %v2088
    %v2413 = vpack.c.b16 %v2093, %v2089
    %v2414 = vpack.c.b16 %v2098, %v2094
    %v2415 = vpack.c.b16 %v2099, %v2095
    %v2416 = vpack.c.b16 %v2100, %v2096
    %v2417 = vpack.c.b16 %v2101, %v2097
    %v2418 = vpack.c.b16 %v2106, %v2102
    %v2419 = vpack.c.b16 %v2107, %v2103
    %v2420 = vpack.c.b16 %v2108, %v2104
    %v2421 = vpack.c.b16 %v2109, %v2105
    %v2422 = vpack.c.b16 %v2114, %v2110
    %v2423 = vpack.c.b16 %v2115, %v2111
    %v2424 = vpack.c.b16 %v2116, %v2112
    %v2425 = vpack.c.b16 %v2117, %v2113
    %v2426 = vpack.c.b16 %v2122, %v2118
    %v2427 = vpack.c.b16 %v2123, %v2119
    %v2428 = vpack.c.b16 %v2124, %v2120
    %v2429 = vpack.c.b16 %v2125, %v2121
    %v2430 = vpack.c.b16 %v2130, %v2126
    %v2431 = vpack.c.b16 %v2131, %v2127
    %v2432 = vpack.c.b16 %v2132, %v2128
    %v2433 = vpack.c.b16 %v2133, %v2129
    %v2434 = vpack.c.b16 %v2138, %v2134
    %v2435 = vpack.c.b16 %v2139, %v2135
    %v2436 = vpack.c.b16 %v2140, %v2136
    %v2437 = vpack.c.b16 %v2141, %v2137
    %v2438 = vpack.c.b16 %v2146, %v2142
    %v2439 = vpack.c.b16 %v2147, %v2143
    %v2440 = vpack.c.b16 %v2148, %v2144
    %v2441 = vpack.c.b16 %v2149, %v2145
    %v2442 = vpack.c.b16 %v2154, %v2150
    %v2443 = vpack.c.b16 %v2155, %v2151
    %v2444 = vpack.c.b16 %v2156, %v2152
    %v2445 = vpack.c.b16 %v2157, %v2153
    %v2446 = vpack.c.b16 %v2162, %v2158
    %v2447 = vpack.c.b16 %v2163, %v2159
    %v2448 = vpack.c.b16 %v2164, %v2160
    %v2449 = vpack.c.b16 %v2165, %v2161
    %v2450 = vpack.c.b16 %v2170, %v2166
    %v2451 = vpack.c.b16 %v2171, %v2167
    %v2452 = vpack.c.b16 %v2172, %v2168
    %v2453 = vpack.c.b16 %v2173, %v2169
    %v2454 = vpack.c.b16 %v2178, %v2174
    %v2455 = vpack.c.b16 %v2179, %v2175
    %v2456 = vpack.c.b16 %v2180, %v2176
    %v2457 = vpack.c.b16 %v2181, %v2177
    %v2458 = vpack.c.b16 %v2186, %v2182
    %v2459 = vpack.c.b16 %v2187, %v2183
    %v2460 = vpack.c.b16 %v2188, %v2184
    %v2461 = vpack.c.b16 %v2189, %v2185
    %v2462 = vpack.c.b16 %v2194, %v2190
    %v2463 = vpack.c.b16 %v2195, %v2191
    %v2464 = vpack.c.b16 %v2196, %v2192
    %v2465 = vpack.c.b16 %v2197, %v2193
    %v2466 = vpack.c.b16 %v2202, %v2198
    %v2467 = vpack.c.b16 %v2203, %v2199
    %v2468 = vpack.c.b16 %v2204, %v2200
    %v2469 = vpack.c.b16 %v2205, %v2201
    %v2470 = vpack.c.b16 %v2210, %v2206
    %v2471 = vpack.c.b16 %v2211, %v2207
    %v2472 = vpack.c.b16 %v2212, %v2208
    %v2473 = vpack.c.b16 %v2213, %v2209
    %v2474 = vpack.c.b16 %v2218, %v2214
    %v2475 = vpack.c.b16 %v2219, %v2215
    %v2476 = vpack.c.b16 %v2220, %v2216
    %v2477 = vpack.c.b16 %v2221, %v2217
    %2734 = vmatpush.bf16.msra.mxu0 %v2250
    %2735 = vmatpush.bf16.msra.mxu0 %v2246
    %2736 = vmatpush.bf16.msra.mxu0 %v2242
    %2737 = vmatpush.bf16.msra.mxu0 %v2238
    %2738 = vmatpush.bf16.msra.mxu0 %v2234
    %2739 = vmatpush.bf16.msra.mxu0 %v2230
    %2740 = vmatpush.bf16.msra.mxu0 %v2226
    %2741 = vmatpush.bf16.msra.mxu0 %v2222
    %2742 = vmatmul.bf16.gmra.mxu0 %v1180
    %v2743 = vpop.f32.mrf.mxu0
    %v2744 = vadd.f32 %v1446, %v2743
    %v2745 = vpop.f32.mrf.mxu0
    %2746 = vdwg.mxu0
    %2747 = vmatpush.bf16.msra.mxu0 %v2282
    %2748 = vmatpush.bf16.msra.mxu0 %v2278
    %2749 = vmatpush.bf16.msra.mxu0 %v2274
    %2750 = vmatpush.bf16.msra.mxu0 %v2270
    %2751 = vmatpush.bf16.msra.mxu0 %v2266
    %2752 = vmatpush.bf16.msra.mxu0 %v2262
    %2753 = vmatpush.bf16.msra.mxu0 %v2258
    %2754 = vmatpush.bf16.msra.mxu0 %v2254
    %2755 = vmatmul.bf16.gmra.mxu0 %v1181
    %v2756 = vpop.f32.mrf.mxu0
    %v2757 = vadd.f32 %v2744, %v2756
    %v2758 = vpop.f32.mrf.mxu0
    %2759 = vdwg.mxu0
    %2760 = vmatpush.bf16.msra.mxu0 %v2314
    %2761 = vmatpush.bf16.msra.mxu0 %v2310
    %2762 = vmatpush.bf16.msra.mxu0 %v2306
    %2763 = vmatpush.bf16.msra.mxu0 %v2302
    %2764 = vmatpush.bf16.msra.mxu0 %v2298
    %2765 = vmatpush.bf16.msra.mxu0 %v2294
    %2766 = vmatpush.bf16.msra.mxu0 %v2290
    %2767 = vmatpush.bf16.msra.mxu0 %v2286
    %2768 = vmatmul.bf16.gmra.mxu0 %v1182
    %v2769 = vpop.f32.mrf.mxu0
    %v2770 = vadd.f32 %v2757, %v2769
    %v2771 = vpop.f32.mrf.mxu0
    %2772 = vdwg.mxu0
    %2773 = vmatpush.bf16.msra.mxu0 %v2346
    %2774 = vmatpush.bf16.msra.mxu0 %v2342
    %2775 = vmatpush.bf16.msra.mxu0 %v2338
    %2776 = vmatpush.bf16.msra.mxu0 %v2334
    %2777 = vmatpush.bf16.msra.mxu0 %v2330
    %2778 = vmatpush.bf16.msra.mxu0 %v2326
    %2779 = vmatpush.bf16.msra.mxu0 %v2322
    %2780 = vmatpush.bf16.msra.mxu0 %v2318
    %2781 = vmatmul.bf16.gmra.mxu0 %v1183
    %v2782 = vpop.f32.mrf.mxu0
    %v2783 = vadd.f32 %v2770, %v2782
    %v2784 = vpop.f32.mrf.mxu0
    %2785 = vdwg.mxu0
    %2786 = vmatpush.bf16.msra.mxu0 %v2378
    %2787 = vmatpush.bf16.msra.mxu0 %v2374
    %2788 = vmatpush.bf16.msra.mxu0 %v2370
    %2789 = vmatpush.bf16.msra.mxu0 %v2366
    %2790 = vmatpush.bf16.msra.mxu0 %v2362
    %2791 = vmatpush.bf16.msra.mxu0 %v2358
    %2792 = vmatpush.bf16.msra.mxu0 %v2354
    %2793 = vmatpush.bf16.msra.mxu0 %v2350
    %2794 = vmatmul.bf16.gmra.mxu0 %v1184
    %v2795 = vpop.f32.mrf.mxu0
    %v2796 = vadd.f32 %v2783, %v2795
    %v2797 = vpop.f32.mrf.mxu0
    %2798 = vdwg.mxu0
    %2799 = vmatpush.bf16.msra.mxu0 %v2410
    %2800 = vmatpush.bf16.msra.mxu0 %v2406
    %2801 = vmatpush.bf16.msra.mxu0 %v2402
    %2802 = vmatpush.bf16.msra.mxu0 %v2398
    %2803 = vmatpush.bf16.msra.mxu0 %v2394
    %2804 = vmatpush.bf16.msra.mxu0 %v2390
    %2805 = vmatpush.bf16.msra.mxu0 %v2386
    %2806 = vmatpush.bf16.msra.mxu0 %v2382
    %2807 = vmatmul.bf16.gmra.mxu0 %v1185
    %v2808 = vpop.f32.mrf.mxu0
    %v2809 = vadd.f32 %v2796, %v2808
    %v2810 = vpop.f32.mrf.mxu0
    %2811 = vdwg.mxu0
    %2812 = vmatpush.bf16.msra.mxu0 %v2442
    %2813 = vmatpush.bf16.msra.mxu0 %v2438
    %2814 = vmatpush.bf16.msra.mxu0 %v2434
    %2815 = vmatpush.bf16.msra.mxu0 %v2430
    %2816 = vmatpush.bf16.msra.mxu0 %v2426
    %2817 = vmatpush.bf16.msra.mxu0 %v2422
    %2818 = vmatpush.bf16.msra.mxu0 %v2418
    %2819 = vmatpush.bf16.msra.mxu0 %v2414
    %2820 = vmatmul.bf16.gmra.mxu0 %v1186
    %v2821 = vpop.f32.mrf.mxu0
    %v2822 = vadd.f32 %v2809, %v2821
    %v2823 = vpop.f32.mrf.mxu0
    %2824 = vdwg.mxu0
    %2825 = vmatpush.bf16.msra.mxu0 %v2474
    %2826 = vmatpush.bf16.msra.mxu0 %v2470
    %2827 = vmatpush.bf16.msra.mxu0 %v2466
    %2828 = vmatpush.bf16.msra.mxu0 %v2462
    %2829 = vmatpush.bf16.msra.mxu0 %v2458
    %2830 = vmatpush.bf16.msra.mxu0 %v2454
    %2831 = vmatpush.bf16.msra.mxu0 %v2450
    %2832 = vmatpush.bf16.msra.mxu0 %v2446
    %2833 = vmatmul.bf16.gmra.mxu0 %v1187
    %v2834 = vpop.f32.mrf.mxu0
    %v2835 = vadd.f32 %v2822, %v2834
    %v2836 = vpop.f32.mrf.mxu0
    %2837 = vdwg.mxu0
    %2838 = vmatpush.bf16.msra.mxu0 %v2251
    %2839 = vmatpush.bf16.msra.mxu0 %v2247
    %2840 = vmatpush.bf16.msra.mxu0 %v2243
    %2841 = vmatpush.bf16.msra.mxu0 %v2239
    %2842 = vmatpush.bf16.msra.mxu0 %v2235
    %2843 = vmatpush.bf16.msra.mxu0 %v2231
    %2844 = vmatpush.bf16.msra.mxu0 %v2227
    %2845 = vmatpush.bf16.msra.mxu0 %v2223
    %2846 = vmatmul.bf16.gmra.mxu0 %v1180
    %v2847 = vpop.f32.mrf.mxu0
    %v2848 = vadd.f32 %v1447, %v2847
    %v2849 = vpop.f32.mrf.mxu0
    %2850 = vdwg.mxu0
    %2851 = vmatpush.bf16.msra.mxu0 %v2283
    %2852 = vmatpush.bf16.msra.mxu0 %v2279
    %2853 = vmatpush.bf16.msra.mxu0 %v2275
    %2854 = vmatpush.bf16.msra.mxu0 %v2271
    %2855 = vmatpush.bf16.msra.mxu0 %v2267
    %2856 = vmatpush.bf16.msra.mxu0 %v2263
    %2857 = vmatpush.bf16.msra.mxu0 %v2259
    %2858 = vmatpush.bf16.msra.mxu0 %v2255
    %2859 = vmatmul.bf16.gmra.mxu0 %v1181
    %v2860 = vpop.f32.mrf.mxu0
    %v2861 = vadd.f32 %v2848, %v2860
    %v2862 = vpop.f32.mrf.mxu0
    %2863 = vdwg.mxu0
    %2864 = vmatpush.bf16.msra.mxu0 %v2315
    %2865 = vmatpush.bf16.msra.mxu0 %v2311
    %2866 = vmatpush.bf16.msra.mxu0 %v2307
    %2867 = vmatpush.bf16.msra.mxu0 %v2303
    %2868 = vmatpush.bf16.msra.mxu0 %v2299
    %2869 = vmatpush.bf16.msra.mxu0 %v2295
    %2870 = vmatpush.bf16.msra.mxu0 %v2291
    %2871 = vmatpush.bf16.msra.mxu0 %v2287
    %2872 = vmatmul.bf16.gmra.mxu0 %v1182
    %v2873 = vpop.f32.mrf.mxu0
    %v2874 = vadd.f32 %v2861, %v2873
    %v2875 = vpop.f32.mrf.mxu0
    %2876 = vdwg.mxu0
    %2877 = vmatpush.bf16.msra.mxu0 %v2347
    %2878 = vmatpush.bf16.msra.mxu0 %v2343
    %2879 = vmatpush.bf16.msra.mxu0 %v2339
    %2880 = vmatpush.bf16.msra.mxu0 %v2335
    %2881 = vmatpush.bf16.msra.mxu0 %v2331
    %2882 = vmatpush.bf16.msra.mxu0 %v2327
    %2883 = vmatpush.bf16.msra.mxu0 %v2323
    %2884 = vmatpush.bf16.msra.mxu0 %v2319
    %2885 = vmatmul.bf16.gmra.mxu0 %v1183
    %v2886 = vpop.f32.mrf.mxu0
    %v2887 = vadd.f32 %v2874, %v2886
    %v2888 = vpop.f32.mrf.mxu0
    %2889 = vdwg.mxu0
    %2890 = vmatpush.bf16.msra.mxu0 %v2379
    %2891 = vmatpush.bf16.msra.mxu0 %v2375
    %2892 = vmatpush.bf16.msra.mxu0 %v2371
    %2893 = vmatpush.bf16.msra.mxu0 %v2367
    %2894 = vmatpush.bf16.msra.mxu0 %v2363
    %2895 = vmatpush.bf16.msra.mxu0 %v2359
    %2896 = vmatpush.bf16.msra.mxu0 %v2355
    %2897 = vmatpush.bf16.msra.mxu0 %v2351
    %2898 = vmatmul.bf16.gmra.mxu0 %v1184
    %v2899 = vpop.f32.mrf.mxu0
    %v2900 = vadd.f32 %v2887, %v2899
    %v2901 = vpop.f32.mrf.mxu0
    %2902 = vdwg.mxu0
    %2903 = vmatpush.bf16.msra.mxu0 %v2411
    %2904 = vmatpush.bf16.msra.mxu0 %v2407
    %2905 = vmatpush.bf16.msra.mxu0 %v2403
    %2906 = vmatpush.bf16.msra.mxu0 %v2399
    %2907 = vmatpush.bf16.msra.mxu0 %v2395
    %2908 = vmatpush.bf16.msra.mxu0 %v2391
    %2909 = vmatpush.bf16.msra.mxu0 %v2387
    %2910 = vmatpush.bf16.msra.mxu0 %v2383
    %2911 = vmatmul.bf16.gmra.mxu0 %v1185
    %v2912 = vpop.f32.mrf.mxu0
    %v2913 = vadd.f32 %v2900, %v2912
    %v2914 = vpop.f32.mrf.mxu0
    %2915 = vdwg.mxu0
    %2916 = vmatpush.bf16.msra.mxu0 %v2443
    %2917 = vmatpush.bf16.msra.mxu0 %v2439
    %2918 = vmatpush.bf16.msra.mxu0 %v2435
    %2919 = vmatpush.bf16.msra.mxu0 %v2431
    %2920 = vmatpush.bf16.msra.mxu0 %v2427
    %2921 = vmatpush.bf16.msra.mxu0 %v2423
    %2922 = vmatpush.bf16.msra.mxu0 %v2419
    %2923 = vmatpush.bf16.msra.mxu0 %v2415
    %2924 = vmatmul.bf16.gmra.mxu0 %v1186
    %v2925 = vpop.f32.mrf.mxu0
    %v2926 = vadd.f32 %v2913, %v2925
    %v2927 = vpop.f32.mrf.mxu0
    %2928 = vdwg.mxu0
    %2929 = vmatpush.bf16.msra.mxu0 %v2475
    %2930 = vmatpush.bf16.msra.mxu0 %v2471
    %2931 = vmatpush.bf16.msra.mxu0 %v2467
    %2932 = vmatpush.bf16.msra.mxu0 %v2463
    %2933 = vmatpush.bf16.msra.mxu0 %v2459
    %2934 = vmatpush.bf16.msra.mxu0 %v2455
    %2935 = vmatpush.bf16.msra.mxu0 %v2451
    %2936 = vmatpush.bf16.msra.mxu0 %v2447
    %2937 = vmatmul.bf16.gmra.mxu0 %v1187
    %v2938 = vpop.f32.mrf.mxu0
    %v2939 = vadd.f32 %v2926, %v2938
    %v2940 = vpop.f32.mrf.mxu0
    %2941 = vdwg.mxu0
    %2942 = vmatpush.bf16.msra.mxu0 %v2252
    %2943 = vmatpush.bf16.msra.mxu0 %v2248
    %2944 = vmatpush.bf16.msra.mxu0 %v2244
    %2945 = vmatpush.bf16.msra.mxu0 %v2240
    %2946 = vmatpush.bf16.msra.mxu0 %v2236
    %2947 = vmatpush.bf16.msra.mxu0 %v2232
    %2948 = vmatpush.bf16.msra.mxu0 %v2228
    %2949 = vmatpush.bf16.msra.mxu0 %v2224
    %2950 = vmatmul.bf16.gmra.mxu0 %v1180
    %v2951 = vpop.f32.mrf.mxu0
    %v2952 = vadd.f32 %v1448, %v2951
    %v2953 = vpop.f32.mrf.mxu0
    %2954 = vdwg.mxu0
    %2955 = vmatpush.bf16.msra.mxu0 %v2284
    %2956 = vmatpush.bf16.msra.mxu0 %v2280
    %2957 = vmatpush.bf16.msra.mxu0 %v2276
    %2958 = vmatpush.bf16.msra.mxu0 %v2272
    %2959 = vmatpush.bf16.msra.mxu0 %v2268
    %2960 = vmatpush.bf16.msra.mxu0 %v2264
    %2961 = vmatpush.bf16.msra.mxu0 %v2260
    %2962 = vmatpush.bf16.msra.mxu0 %v2256
    %2963 = vmatmul.bf16.gmra.mxu0 %v1181
    %v2964 = vpop.f32.mrf.mxu0
    %v2965 = vadd.f32 %v2952, %v2964
    %v2966 = vpop.f32.mrf.mxu0
    %2967 = vdwg.mxu0
    %2968 = vmatpush.bf16.msra.mxu0 %v2316
    %2969 = vmatpush.bf16.msra.mxu0 %v2312
    %2970 = vmatpush.bf16.msra.mxu0 %v2308
    %2971 = vmatpush.bf16.msra.mxu0 %v2304
    %2972 = vmatpush.bf16.msra.mxu0 %v2300
    %2973 = vmatpush.bf16.msra.mxu0 %v2296
    %2974 = vmatpush.bf16.msra.mxu0 %v2292
    %2975 = vmatpush.bf16.msra.mxu0 %v2288
    %2976 = vmatmul.bf16.gmra.mxu0 %v1182
    %v2977 = vpop.f32.mrf.mxu0
    %v2978 = vadd.f32 %v2965, %v2977
    %v2979 = vpop.f32.mrf.mxu0
    %2980 = vdwg.mxu0
    %2981 = vmatpush.bf16.msra.mxu0 %v2348
    %2982 = vmatpush.bf16.msra.mxu0 %v2344
    %2983 = vmatpush.bf16.msra.mxu0 %v2340
    %2984 = vmatpush.bf16.msra.mxu0 %v2336
    %2985 = vmatpush.bf16.msra.mxu0 %v2332
    %2986 = vmatpush.bf16.msra.mxu0 %v2328
    %2987 = vmatpush.bf16.msra.mxu0 %v2324
    %2988 = vmatpush.bf16.msra.mxu0 %v2320
    %2989 = vmatmul.bf16.gmra.mxu0 %v1183
    %v2990 = vpop.f32.mrf.mxu0
    %v2991 = vadd.f32 %v2978, %v2990
    %v2992 = vpop.f32.mrf.mxu0
    %2993 = vdwg.mxu0
    %2994 = vmatpush.bf16.msra.mxu0 %v2380
    %2995 = vmatpush.bf16.msra.mxu0 %v2376
    %2996 = vmatpush.bf16.msra.mxu0 %v2372
    %2997 = vmatpush.bf16.msra.mxu0 %v2368
    %2998 = vmatpush.bf16.msra.mxu0 %v2364
    %2999 = vmatpush.bf16.msra.mxu0 %v2360
    %3000 = vmatpush.bf16.msra.mxu0 %v2356
    %3001 = vmatpush.bf16.msra.mxu0 %v2352
    %3002 = vmatmul.bf16.gmra.mxu0 %v1184
    %v3003 = vpop.f32.mrf.mxu0
    %v3004 = vadd.f32 %v2991, %v3003
    %v3005 = vpop.f32.mrf.mxu0
    %3006 = vdwg.mxu0
    %3007 = vmatpush.bf16.msra.mxu0 %v2412
    %3008 = vmatpush.bf16.msra.mxu0 %v2408
    %3009 = vmatpush.bf16.msra.mxu0 %v2404
    %3010 = vmatpush.bf16.msra.mxu0 %v2400
    %3011 = vmatpush.bf16.msra.mxu0 %v2396
    %3012 = vmatpush.bf16.msra.mxu0 %v2392
    %3013 = vmatpush.bf16.msra.mxu0 %v2388
    %3014 = vmatpush.bf16.msra.mxu0 %v2384
    %3015 = vmatmul.bf16.gmra.mxu0 %v1185
    %v3016 = vpop.f32.mrf.mxu0
    %v3017 = vadd.f32 %v3004, %v3016
    %v3018 = vpop.f32.mrf.mxu0
    %3019 = vdwg.mxu0
    %3020 = vmatpush.bf16.msra.mxu0 %v2444
    %3021 = vmatpush.bf16.msra.mxu0 %v2440
    %3022 = vmatpush.bf16.msra.mxu0 %v2436
    %3023 = vmatpush.bf16.msra.mxu0 %v2432
    %3024 = vmatpush.bf16.msra.mxu0 %v2428
    %3025 = vmatpush.bf16.msra.mxu0 %v2424
    %3026 = vmatpush.bf16.msra.mxu0 %v2420
    %3027 = vmatpush.bf16.msra.mxu0 %v2416
    %3028 = vmatmul.bf16.gmra.mxu0 %v1186
    %v3029 = vpop.f32.mrf.mxu0
    %v3030 = vadd.f32 %v3017, %v3029
    %v3031 = vpop.f32.mrf.mxu0
    %3032 = vdwg.mxu0
    %3033 = vmatpush.bf16.msra.mxu0 %v2476
    %3034 = vmatpush.bf16.msra.mxu0 %v2472
    %3035 = vmatpush.bf16.msra.mxu0 %v2468
    %3036 = vmatpush.bf16.msra.mxu0 %v2464
    %3037 = vmatpush.bf16.msra.mxu0 %v2460
    %3038 = vmatpush.bf16.msra.mxu0 %v2456
    %3039 = vmatpush.bf16.msra.mxu0 %v2452
    %3040 = vmatpush.bf16.msra.mxu0 %v2448
    %3041 = vmatmul.bf16.gmra.mxu0 %v1187
    %v3042 = vpop.f32.mrf.mxu0
    %v3043 = vadd.f32 %v3030, %v3042
    %v3044 = vpop.f32.mrf.mxu0
    %3045 = vdwg.mxu0
    %3046 = vmatpush.bf16.msra.mxu0 %v2253
    %3047 = vmatpush.bf16.msra.mxu0 %v2249
    %3048 = vmatpush.bf16.msra.mxu0 %v2245
    %3049 = vmatpush.bf16.msra.mxu0 %v2241
    %3050 = vmatpush.bf16.msra.mxu0 %v2237
    %3051 = vmatpush.bf16.msra.mxu0 %v2233
    %3052 = vmatpush.bf16.msra.mxu0 %v2229
    %3053 = vmatpush.bf16.msra.mxu0 %v2225
    %3054 = vmatmul.bf16.gmra.mxu0 %v1180
    %v3055 = vpop.f32.mrf.mxu0
    %v3056 = vadd.f32 %v1449, %v3055
    %v3057 = vpop.f32.mrf.mxu0
    %3058 = vdwg.mxu0
    %3059 = vmatpush.bf16.msra.mxu0 %v2285
    %3060 = vmatpush.bf16.msra.mxu0 %v2281
    %3061 = vmatpush.bf16.msra.mxu0 %v2277
    %3062 = vmatpush.bf16.msra.mxu0 %v2273
    %3063 = vmatpush.bf16.msra.mxu0 %v2269
    %3064 = vmatpush.bf16.msra.mxu0 %v2265
    %3065 = vmatpush.bf16.msra.mxu0 %v2261
    %3066 = vmatpush.bf16.msra.mxu0 %v2257
    %3067 = vmatmul.bf16.gmra.mxu0 %v1181
    %v3068 = vpop.f32.mrf.mxu0
    %v3069 = vadd.f32 %v3056, %v3068
    %v3070 = vpop.f32.mrf.mxu0
    %3071 = vdwg.mxu0
    %3072 = vmatpush.bf16.msra.mxu0 %v2317
    %3073 = vmatpush.bf16.msra.mxu0 %v2313
    %3074 = vmatpush.bf16.msra.mxu0 %v2309
    %3075 = vmatpush.bf16.msra.mxu0 %v2305
    %3076 = vmatpush.bf16.msra.mxu0 %v2301
    %3077 = vmatpush.bf16.msra.mxu0 %v2297
    %3078 = vmatpush.bf16.msra.mxu0 %v2293
    %3079 = vmatpush.bf16.msra.mxu0 %v2289
    %3080 = vmatmul.bf16.gmra.mxu0 %v1182
    %v3081 = vpop.f32.mrf.mxu0
    %v3082 = vadd.f32 %v3069, %v3081
    %v3083 = vpop.f32.mrf.mxu0
    %3084 = vdwg.mxu0
    %3085 = vmatpush.bf16.msra.mxu0 %v2349
    %3086 = vmatpush.bf16.msra.mxu0 %v2345
    %3087 = vmatpush.bf16.msra.mxu0 %v2341
    %3088 = vmatpush.bf16.msra.mxu0 %v2337
    %3089 = vmatpush.bf16.msra.mxu0 %v2333
    %3090 = vmatpush.bf16.msra.mxu0 %v2329
    %3091 = vmatpush.bf16.msra.mxu0 %v2325
    %3092 = vmatpush.bf16.msra.mxu0 %v2321
    %3093 = vmatmul.bf16.gmra.mxu0 %v1183
    %v3094 = vpop.f32.mrf.mxu0
    %v3095 = vadd.f32 %v3082, %v3094
    %v3096 = vpop.f32.mrf.mxu0
    %3097 = vdwg.mxu0
    %3098 = vmatpush.bf16.msra.mxu0 %v2381
    %3099 = vmatpush.bf16.msra.mxu0 %v2377
    %3100 = vmatpush.bf16.msra.mxu0 %v2373
    %3101 = vmatpush.bf16.msra.mxu0 %v2369
    %3102 = vmatpush.bf16.msra.mxu0 %v2365
    %3103 = vmatpush.bf16.msra.mxu0 %v2361
    %3104 = vmatpush.bf16.msra.mxu0 %v2357
    %3105 = vmatpush.bf16.msra.mxu0 %v2353
    %3106 = vmatmul.bf16.gmra.mxu0 %v1184
    %v3107 = vpop.f32.mrf.mxu0
    %v3108 = vadd.f32 %v3095, %v3107
    %v3109 = vpop.f32.mrf.mxu0
    %3110 = vdwg.mxu0
    %3111 = vmatpush.bf16.msra.mxu0 %v2413
    %3112 = vmatpush.bf16.msra.mxu0 %v2409
    %3113 = vmatpush.bf16.msra.mxu0 %v2405
    %3114 = vmatpush.bf16.msra.mxu0 %v2401
    %3115 = vmatpush.bf16.msra.mxu0 %v2397
    %3116 = vmatpush.bf16.msra.mxu0 %v2393
    %3117 = vmatpush.bf16.msra.mxu0 %v2389
    %3118 = vmatpush.bf16.msra.mxu0 %v2385
    %3119 = vmatmul.bf16.gmra.mxu0 %v1185
    %v3120 = vpop.f32.mrf.mxu0
    %v3121 = vadd.f32 %v3108, %v3120
    %v3122 = vpop.f32.mrf.mxu0
    %3123 = vdwg.mxu0
    %3124 = vmatpush.bf16.msra.mxu0 %v2445
    %3125 = vmatpush.bf16.msra.mxu0 %v2441
    %3126 = vmatpush.bf16.msra.mxu0 %v2437
    %3127 = vmatpush.bf16.msra.mxu0 %v2433
    %3128 = vmatpush.bf16.msra.mxu0 %v2429
    %3129 = vmatpush.bf16.msra.mxu0 %v2425
    %3130 = vmatpush.bf16.msra.mxu0 %v2421
    %3131 = vmatpush.bf16.msra.mxu0 %v2417
    %3132 = vmatmul.bf16.gmra.mxu0 %v1186
    %v3133 = vpop.f32.mrf.mxu0
    %v3134 = vadd.f32 %v3121, %v3133
    %v3135 = vpop.f32.mrf.mxu0
    %3136 = vdwg.mxu0
    %3137 = vmatpush.bf16.msra.mxu0 %v2477
    %3138 = vmatpush.bf16.msra.mxu0 %v2473
    %3139 = vmatpush.bf16.msra.mxu0 %v2469
    %3140 = vmatpush.bf16.msra.mxu0 %v2465
    %3141 = vmatpush.bf16.msra.mxu0 %v2461
    %3142 = vmatpush.bf16.msra.mxu0 %v2457
    %3143 = vmatpush.bf16.msra.mxu0 %v2453
    %3144 = vmatpush.bf16.msra.mxu0 %v2449
    %3145 = vmatmul.bf16.gmra.mxu0 %v1187
    %v3146 = vpop.f32.mrf.mxu0
    %v3147 = vadd.f32 %v3134, %v3146
    %v3148 = vpop.f32.mrf.mxu0
    %3149 = vdwg.mxu0
    %v3150 = vmax.f32 %v2835, 0.0
    %v3151 = vmax.f32 %v2939, 0.0
    %v3152 = vmax.f32 %v3043, 0.0
    %v3153 = vmax.f32 %v3147, 0.0
    %v3154 = vpack.c.bf16 %v3150, %v3150
    %v3155 = vpack.c.bf16 %v3151, %v3151
    %v3156 = vpack.c.bf16 %v3152, %v3152
    %v3157 = vpack.c.bf16 %v3153, %v3153
    %v3158 = vld [vmem:[#allocation8] sm:$0xff]
    %v3159 = vld [vmem:[#allocation8 + $0x8] sm:$0xff]
    %v3160 = vld [vmem:[#allocation8 + $0x10] sm:$0xff]
    %v3161 = vld [vmem:[#allocation8 + $0x18] sm:$0xff]
    %v3162 = vld [vmem:[#allocation8 + $0x20] sm:$0xff]
    %v3163 = vld [vmem:[#allocation8 + $0x28] sm:$0xff]
    %v3164 = vld [vmem:[#allocation8 + $0x30] sm:$0xff]
    %v3165 = vld [vmem:[#allocation8 + $0x38] sm:$0xff]
    %v3166 = vld [vmem:[#allocation8 + $0x40] sm:$0xff]
    %v3167 = vld [vmem:[#allocation8 + $0x48] sm:$0xff]
    %v3168 = vld [vmem:[#allocation8 + $0x50] sm:$0xff]
    %v3169 = vld [vmem:[#allocation8 + $0x58] sm:$0xff]
    %v3170 = vld [vmem:[#allocation8 + $0x60] sm:$0xff]
    %v3171 = vld [vmem:[#allocation8 + $0x68] sm:$0xff]
    %v3172 = vld [vmem:[#allocation8 + $0x70] sm:$0xff]
    %v3173 = vld [vmem:[#allocation8 + $0x78] sm:$0xff]
    %v3174 = vld [vmem:[#allocation8 + $0x80] sm:$0xff]
    %v3175 = vld [vmem:[#allocation8 + $0x88] sm:$0xff]
    %v3176 = vld [vmem:[#allocation8 + $0x90] sm:$0xff]
    %v3177 = vld [vmem:[#allocation8 + $0x98] sm:$0xff]
    %v3178 = vld [vmem:[#allocation8 + $0xa0] sm:$0xff]
    %v3179 = vld [vmem:[#allocation8 + $0xa8] sm:$0xff]
    %v3180 = vld [vmem:[#allocation8 + $0xb0] sm:$0xff]
    %v3181 = vld [vmem:[#allocation8 + $0xb8] sm:$0xff]
    %v3182 = vld [vmem:[#allocation8 + $0xc0] sm:$0xff]
    %v3183 = vld [vmem:[#allocation8 + $0xc8] sm:$0xff]
    %v3184 = vld [vmem:[#allocation8 + $0xd0] sm:$0xff]
    %v3185 = vld [vmem:[#allocation8 + $0xd8] sm:$0xff]
    %v3186 = vld [vmem:[#allocation8 + $0xe0] sm:$0xff]
    %v3187 = vld [vmem:[#allocation8 + $0xe8] sm:$0xff]
    %v3188 = vld [vmem:[#allocation8 + $0xf0] sm:$0xff]
    %v3189 = vld [vmem:[#allocation8 + $0xf8] sm:$0xff]
    %v3190 = vld [vmem:[#allocation8 + $0x100] sm:$0xff]
    %v3191 = vld [vmem:[#allocation8 + $0x108] sm:$0xff]
    %v3192 = vld [vmem:[#allocation8 + $0x110] sm:$0xff]
    %v3193 = vld [vmem:[#allocation8 + $0x118] sm:$0xff]
    %v3194 = vld [vmem:[#allocation8 + $0x120] sm:$0xff]
    %v3195 = vld [vmem:[#allocation8 + $0x128] sm:$0xff]
    %v3196 = vld [vmem:[#allocation8 + $0x130] sm:$0xff]
    %v3197 = vld [vmem:[#allocation8 + $0x138] sm:$0xff]
    %v3198 = vld [vmem:[#allocation8 + $0x140] sm:$0xff]
    %v3199 = vld [vmem:[#allocation8 + $0x148] sm:$0xff]
    %v3200 = vld [vmem:[#allocation8 + $0x150] sm:$0xff]
    %v3201 = vld [vmem:[#allocation8 + $0x158] sm:$0xff]
    %v3202 = vld [vmem:[#allocation8 + $0x160] sm:$0xff]
    %v3203 = vld [vmem:[#allocation8 + $0x168] sm:$0xff]
    %v3204 = vld [vmem:[#allocation8 + $0x170] sm:$0xff]
    %v3205 = vld [vmem:[#allocation8 + $0x178] sm:$0xff]
    %v3206 = vld [vmem:[#allocation8 + $0x180] sm:$0xff]
    %v3207 = vld [vmem:[#allocation8 + $0x188] sm:$0xff]
    %v3208 = vld [vmem:[#allocation8 + $0x190] sm:$0xff]
    %v3209 = vld [vmem:[#allocation8 + $0x198] sm:$0xff]
    %v3210 = vld [vmem:[#allocation8 + $0x1a0] sm:$0xff]
    %v3211 = vld [vmem:[#allocation8 + $0x1a8] sm:$0xff]
    %v3212 = vld [vmem:[#allocation8 + $0x1b0] sm:$0xff]
    %v3213 = vld [vmem:[#allocation8 + $0x1b8] sm:$0xff]
    %v3214 = vld [vmem:[#allocation8 + $0x1c0] sm:$0xff]
    %v3215 = vld [vmem:[#allocation8 + $0x1c8] sm:$0xff]
    %v3216 = vld [vmem:[#allocation8 + $0x1d0] sm:$0xff]
    %v3217 = vld [vmem:[#allocation8 + $0x1d8] sm:$0xff]
    %v3218 = vld [vmem:[#allocation8 + $0x1e0] sm:$0xff]
    %v3219 = vld [vmem:[#allocation8 + $0x1e8] sm:$0xff]
    %v3220 = vld [vmem:[#allocation8 + $0x1f0] sm:$0xff]
    %v3221 = vld [vmem:[#allocation8 + $0x1f8] sm:$0xff]
    %v3222 = vld [vmem:[%s7] sm:$0x3]
    %v3224 = vperm.slane %v3222, 0
    %v3225 = vperm.slane %v3222, 1
    %v3292 = vunpack.c.l.b16 %v3158
    %v3293 = vunpack.c.h.b16 %v3158
    %v3294 = vunpack.c.l.b16 %v3159
    %v3295 = vunpack.c.h.b16 %v3159
    %v3296 = vunpack.c.l.b16 %v3160
    %v3297 = vunpack.c.h.b16 %v3160
    %v3298 = vunpack.c.l.b16 %v3161
    %v3299 = vunpack.c.h.b16 %v3161
    %v3300 = vunpack.c.l.b16 %v3162
    %v3301 = vunpack.c.h.b16 %v3162
    %v3302 = vunpack.c.l.b16 %v3163
    %v3303 = vunpack.c.h.b16 %v3163
    %v3304 = vunpack.c.l.b16 %v3164
    %v3305 = vunpack.c.h.b16 %v3164
    %v3306 = vunpack.c.l.b16 %v3165
    %v3307 = vunpack.c.h.b16 %v3165
    %v3308 = vunpack.c.l.b16 %v3166
    %v3309 = vunpack.c.h.b16 %v3166
    %v3310 = vunpack.c.l.b16 %v3167
    %v3311 = vunpack.c.h.b16 %v3167
    %v3312 = vunpack.c.l.b16 %v3168
    %v3313 = vunpack.c.h.b16 %v3168
    %v3314 = vunpack.c.l.b16 %v3169
    %v3315 = vunpack.c.h.b16 %v3169
    %v3316 = vunpack.c.l.b16 %v3170
    %v3317 = vunpack.c.h.b16 %v3170
    %v3318 = vunpack.c.l.b16 %v3171
    %v3319 = vunpack.c.h.b16 %v3171
    %v3320 = vunpack.c.l.b16 %v3172
    %v3321 = vunpack.c.h.b16 %v3172
    %v3322 = vunpack.c.l.b16 %v3173
    %v3323 = vunpack.c.h.b16 %v3173
    %v3324 = vunpack.c.l.b16 %v3174
    %v3325 = vunpack.c.h.b16 %v3174
    %v3326 = vunpack.c.l.b16 %v3175
    %v3327 = vunpack.c.h.b16 %v3175
    %v3328 = vunpack.c.l.b16 %v3176
    %v3329 = vunpack.c.h.b16 %v3176
    %v3330 = vunpack.c.l.b16 %v3177
    %v3331 = vunpack.c.h.b16 %v3177
    %v3332 = vunpack.c.l.b16 %v3178
    %v3333 = vunpack.c.h.b16 %v3178
    %v3334 = vunpack.c.l.b16 %v3179
    %v3335 = vunpack.c.h.b16 %v3179
    %v3336 = vunpack.c.l.b16 %v3180
    %v3337 = vunpack.c.h.b16 %v3180
    %v3338 = vunpack.c.l.b16 %v3181
    %v3339 = vunpack.c.h.b16 %v3181
    %v3340 = vunpack.c.l.b16 %v3182
    %v3341 = vunpack.c.h.b16 %v3182
    %v3342 = vunpack.c.l.b16 %v3183
    %v3343 = vunpack.c.h.b16 %v3183
    %v3344 = vunpack.c.l.b16 %v3184
    %v3345 = vunpack.c.h.b16 %v3184
    %v3346 = vunpack.c.l.b16 %v3185
    %v3347 = vunpack.c.h.b16 %v3185
    %v3348 = vunpack.c.l.b16 %v3186
    %v3349 = vunpack.c.h.b16 %v3186
    %v3350 = vunpack.c.l.b16 %v3187
    %v3351 = vunpack.c.h.b16 %v3187
    %v3352 = vunpack.c.l.b16 %v3188
    %v3353 = vunpack.c.h.b16 %v3188
    %v3354 = vunpack.c.l.b16 %v3189
    %v3355 = vunpack.c.h.b16 %v3189
    %v3356 = vunpack.c.l.b16 %v3190
    %v3357 = vunpack.c.h.b16 %v3190
    %v3358 = vunpack.c.l.b16 %v3191
    %v3359 = vunpack.c.h.b16 %v3191
    %v3360 = vunpack.c.l.b16 %v3192
    %v3361 = vunpack.c.h.b16 %v3192
    %v3362 = vunpack.c.l.b16 %v3193
    %v3363 = vunpack.c.h.b16 %v3193
    %v3364 = vunpack.c.l.b16 %v3194
    %v3365 = vunpack.c.h.b16 %v3194
    %v3366 = vunpack.c.l.b16 %v3195
    %v3367 = vunpack.c.h.b16 %v3195
    %v3368 = vunpack.c.l.b16 %v3196
    %v3369 = vunpack.c.h.b16 %v3196
    %v3370 = vunpack.c.l.b16 %v3197
    %v3371 = vunpack.c.h.b16 %v3197
    %v3372 = vunpack.c.l.b16 %v3198
    %v3373 = vunpack.c.h.b16 %v3198
    %v3374 = vunpack.c.l.b16 %v3199
    %v3375 = vunpack.c.h.b16 %v3199
    %v3376 = vunpack.c.l.b16 %v3200
    %v3377 = vunpack.c.h.b16 %v3200
    %v3378 = vunpack.c.l.b16 %v3201
    %v3379 = vunpack.c.h.b16 %v3201
    %v3380 = vunpack.c.l.b16 %v3202
    %v3381 = vunpack.c.h.b16 %v3202
    %v3382 = vunpack.c.l.b16 %v3203
    %v3383 = vunpack.c.h.b16 %v3203
    %v3384 = vunpack.c.l.b16 %v3204
    %v3385 = vunpack.c.h.b16 %v3204
    %v3386 = vunpack.c.l.b16 %v3205
    %v3387 = vunpack.c.h.b16 %v3205
    %v3388 = vunpack.c.l.b16 %v3206
    %v3389 = vunpack.c.h.b16 %v3206
    %v3390 = vunpack.c.l.b16 %v3207
    %v3391 = vunpack.c.h.b16 %v3207
    %v3392 = vunpack.c.l.b16 %v3208
    %v3393 = vunpack.c.h.b16 %v3208
    %v3394 = vunpack.c.l.b16 %v3209
    %v3395 = vunpack.c.h.b16 %v3209
    %v3396 = vunpack.c.l.b16 %v3210
    %v3397 = vunpack.c.h.b16 %v3210
    %v3398 = vunpack.c.l.b16 %v3211
    %v3399 = vunpack.c.h.b16 %v3211
    %v3400 = vunpack.c.l.b16 %v3212
    %v3401 = vunpack.c.h.b16 %v3212
    %v3402 = vunpack.c.l.b16 %v3213
    %v3403 = vunpack.c.h.b16 %v3213
    %v3404 = vunpack.c.l.b16 %v3214
    %v3405 = vunpack.c.h.b16 %v3214
    %v3406 = vunpack.c.l.b16 %v3215
    %v3407 = vunpack.c.h.b16 %v3215
    %v3408 = vunpack.c.l.b16 %v3216
    %v3409 = vunpack.c.h.b16 %v3216
    %v3410 = vunpack.c.l.b16 %v3217
    %v3411 = vunpack.c.h.b16 %v3217
    %v3412 = vunpack.c.l.b16 %v3218
    %v3413 = vunpack.c.h.b16 %v3218
    %v3414 = vunpack.c.l.b16 %v3219
    %v3415 = vunpack.c.h.b16 %v3219
    %v3416 = vunpack.c.l.b16 %v3220
    %v3417 = vunpack.c.h.b16 %v3220
    %v3418 = vunpack.c.l.b16 %v3221
    %v3419 = vunpack.c.h.b16 %v3221
    %v3420 = vpack.c.b16 %v3294, %v3292
    %v3421 = vpack.c.b16 %v3295, %v3293
    %v3422 = vpack.c.b16 %v3298, %v3296
    %v3423 = vpack.c.b16 %v3299, %v3297
    %v3424 = vpack.c.b16 %v3302, %v3300
    %v3425 = vpack.c.b16 %v3303, %v3301
    %v3426 = vpack.c.b16 %v3306, %v3304
    %v3427 = vpack.c.b16 %v3307, %v3305
    %v3428 = vpack.c.b16 %v3310, %v3308
    %v3429 = vpack.c.b16 %v3311, %v3309
    %v3430 = vpack.c.b16 %v3314, %v3312
    %v3431 = vpack.c.b16 %v3315, %v3313
    %v3432 = vpack.c.b16 %v3318, %v3316
    %v3433 = vpack.c.b16 %v3319, %v3317
    %v3434 = vpack.c.b16 %v3322, %v3320
    %v3435 = vpack.c.b16 %v3323, %v3321
    %v3436 = vpack.c.b16 %v3326, %v3324
    %v3437 = vpack.c.b16 %v3327, %v3325
    %v3438 = vpack.c.b16 %v3330, %v3328
    %v3439 = vpack.c.b16 %v3331, %v3329
    %v3440 = vpack.c.b16 %v3334, %v3332
    %v3441 = vpack.c.b16 %v3335, %v3333
    %v3442 = vpack.c.b16 %v3338, %v3336
    %v3443 = vpack.c.b16 %v3339, %v3337
    %v3444 = vpack.c.b16 %v3342, %v3340
    %v3445 = vpack.c.b16 %v3343, %v3341
    %v3446 = vpack.c.b16 %v3346, %v3344
    %v3447 = vpack.c.b16 %v3347, %v3345
    %v3448 = vpack.c.b16 %v3350, %v3348
    %v3449 = vpack.c.b16 %v3351, %v3349
    %v3450 = vpack.c.b16 %v3354, %v3352
    %v3451 = vpack.c.b16 %v3355, %v3353
    %v3452 = vpack.c.b16 %v3358, %v3356
    %v3453 = vpack.c.b16 %v3359, %v3357
    %v3454 = vpack.c.b16 %v3362, %v3360
    %v3455 = vpack.c.b16 %v3363, %v3361
    %v3456 = vpack.c.b16 %v3366, %v3364
    %v3457 = vpack.c.b16 %v3367, %v3365
    %v3458 = vpack.c.b16 %v3370, %v3368
    %v3459 = vpack.c.b16 %v3371, %v3369
    %v3460 = vpack.c.b16 %v3374, %v3372
    %v3461 = vpack.c.b16 %v3375, %v3373
    %v3462 = vpack.c.b16 %v3378, %v3376
    %v3463 = vpack.c.b16 %v3379, %v3377
    %v3464 = vpack.c.b16 %v3382, %v3380
    %v3465 = vpack.c.b16 %v3383, %v3381
    %v3466 = vpack.c.b16 %v3386, %v3384
    %v3467 = vpack.c.b16 %v3387, %v3385
    %v3468 = vpack.c.b16 %v3390, %v3388
    %v3469 = vpack.c.b16 %v3391, %v3389
    %v3470 = vpack.c.b16 %v3394, %v3392
    %v3471 = vpack.c.b16 %v3395, %v3393
    %v3472 = vpack.c.b16 %v3398, %v3396
    %v3473 = vpack.c.b16 %v3399, %v3397
    %v3474 = vpack.c.b16 %v3402, %v3400
    %v3475 = vpack.c.b16 %v3403, %v3401
    %v3476 = vpack.c.b16 %v3406, %v3404
    %v3477 = vpack.c.b16 %v3407, %v3405
    %v3478 = vpack.c.b16 %v3410, %v3408
    %v3479 = vpack.c.b16 %v3411, %v3409
    %v3480 = vpack.c.b16 %v3414, %v3412
    %v3481 = vpack.c.b16 %v3415, %v3413
    %v3482 = vpack.c.b16 %v3418, %v3416
    %v3483 = vpack.c.b16 %v3419, %v3417
    %3548 = vmatpush.bf16.msra.mxu0 %v3434
    %3549 = vmatpush.bf16.msra.mxu0 %v3432
    %3550 = vmatpush.bf16.msra.mxu0 %v3430
    %3551 = vmatpush.bf16.msra.mxu0 %v3428
    %3552 = vmatpush.bf16.msra.mxu0 %v3426
    %3553 = vmatpush.bf16.msra.mxu0 %v3424
    %3554 = vmatpush.bf16.msra.mxu0 %v3422
    %3555 = vmatpush.bf16.msra.mxu0 %v3420
    %3556 = vmatmul.bf16.gmra.mxu0 %v3154
    %v3557 = vpop.f32.mrf.mxu0
    %v3558 = vadd.f32 %v3224, %v3557
    %v3559 = vpop.f32.mrf.mxu0
    %3560 = vdwg.mxu0
    %3561 = vmatpush.bf16.msra.mxu0 %v3450
    %3562 = vmatpush.bf16.msra.mxu0 %v3448
    %3563 = vmatpush.bf16.msra.mxu0 %v3446
    %3564 = vmatpush.bf16.msra.mxu0 %v3444
    %3565 = vmatpush.bf16.msra.mxu0 %v3442
    %3566 = vmatpush.bf16.msra.mxu0 %v3440
    %3567 = vmatpush.bf16.msra.mxu0 %v3438
    %3568 = vmatpush.bf16.msra.mxu0 %v3436
    %3569 = vmatmul.bf16.gmra.mxu0 %v3155
    %v3570 = vpop.f32.mrf.mxu0
    %v3571 = vadd.f32 %v3558, %v3570
    %v3572 = vpop.f32.mrf.mxu0
    %3573 = vdwg.mxu0
    %3574 = vmatpush.bf16.msra.mxu0 %v3466
    %3575 = vmatpush.bf16.msra.mxu0 %v3464
    %3576 = vmatpush.bf16.msra.mxu0 %v3462
    %3577 = vmatpush.bf16.msra.mxu0 %v3460
    %3578 = vmatpush.bf16.msra.mxu0 %v3458
    %3579 = vmatpush.bf16.msra.mxu0 %v3456
    %3580 = vmatpush.bf16.msra.mxu0 %v3454
    %3581 = vmatpush.bf16.msra.mxu0 %v3452
    %3582 = vmatmul.bf16.gmra.mxu0 %v3156
    %v3583 = vpop.f32.mrf.mxu0
    %v3584 = vadd.f32 %v3571, %v3583
    %v3585 = vpop.f32.mrf.mxu0
    %3586 = vdwg.mxu0
    %3587 = vmatpush.bf16.msra.mxu0 %v3482
    %3588 = vmatpush.bf16.msra.mxu0 %v3480
    %3589 = vmatpush.bf16.msra.mxu0 %v3478
    %3590 = vmatpush.bf16.msra.mxu0 %v3476
    %3591 = vmatpush.bf16.msra.mxu0 %v3474
    %3592 = vmatpush.bf16.msra.mxu0 %v3472
    %3593 = vmatpush.bf16.msra.mxu0 %v3470
    %3594 = vmatpush.bf16.msra.mxu0 %v3468
    %3595 = vmatmul.bf16.gmra.mxu0 %v3157
    %v3596 = vpop.f32.mrf.mxu0
    %v3597 = vadd.f32 %v3584, %v3596
    %v3598 = vpop.f32.mrf.mxu0
    %3599 = vdwg.mxu0
    %3600 = vmatpush.bf16.msra.mxu0 %v3435
    %3601 = vmatpush.bf16.msra.mxu0 %v3433
    %3602 = vmatpush.bf16.msra.mxu0 %v3431
    %3603 = vmatpush.bf16.msra.mxu0 %v3429
    %3604 = vmatpush.bf16.msra.mxu0 %v3427
    %3605 = vmatpush.bf16.msra.mxu0 %v3425
    %3606 = vmatpush.bf16.msra.mxu0 %v3423
    %3607 = vmatpush.bf16.msra.mxu0 %v3421
    %3608 = vmatmul.bf16.gmra.mxu0 %v3154
    %v3609 = vpop.f32.mrf.mxu0
    %v3610 = vadd.f32 %v3225, %v3609
    %v3611 = vpop.f32.mrf.mxu0
    %3612 = vdwg.mxu0
    %3613 = vmatpush.bf16.msra.mxu0 %v3451
    %3614 = vmatpush.bf16.msra.mxu0 %v3449
    %3615 = vmatpush.bf16.msra.mxu0 %v3447
    %3616 = vmatpush.bf16.msra.mxu0 %v3445
    %3617 = vmatpush.bf16.msra.mxu0 %v3443
    %3618 = vmatpush.bf16.msra.mxu0 %v3441
    %3619 = vmatpush.bf16.msra.mxu0 %v3439
    %3620 = vmatpush.bf16.msra.mxu0 %v3437
    %3621 = vmatmul.bf16.gmra.mxu0 %v3155
    %v3622 = vpop.f32.mrf.mxu0
    %v3623 = vadd.f32 %v3610, %v3622
    %v3624 = vpop.f32.mrf.mxu0
    %3625 = vdwg.mxu0
    %3626 = vmatpush.bf16.msra.mxu0 %v3467
    %3627 = vmatpush.bf16.msra.mxu0 %v3465
    %3628 = vmatpush.bf16.msra.mxu0 %v3463
    %3629 = vmatpush.bf16.msra.mxu0 %v3461
    %3630 = vmatpush.bf16.msra.mxu0 %v3459
    %3631 = vmatpush.bf16.msra.mxu0 %v3457
    %3632 = vmatpush.bf16.msra.mxu0 %v3455
    %3633 = vmatpush.bf16.msra.mxu0 %v3453
    %3634 = vmatmul.bf16.gmra.mxu0 %v3156
    %v3635 = vpop.f32.mrf.mxu0
    %v3636 = vadd.f32 %v3623, %v3635
    %v3637 = vpop.f32.mrf.mxu0
    %3638 = vdwg.mxu0
    %3639 = vmatpush.bf16.msra.mxu0 %v3483
    %3640 = vmatpush.bf16.msra.mxu0 %v3481
    %3641 = vmatpush.bf16.msra.mxu0 %v3479
    %3642 = vmatpush.bf16.msra.mxu0 %v3477
    %3643 = vmatpush.bf16.msra.mxu0 %v3475
    %3644 = vmatpush.bf16.msra.mxu0 %v3473
    %3645 = vmatpush.bf16.msra.mxu0 %v3471
    %3646 = vmatpush.bf16.msra.mxu0 %v3469
    %3647 = vmatmul.bf16.gmra.mxu0 %v3157
    %v3648 = vpop.f32.mrf.mxu0
    %v3649 = vadd.f32 %v3636, %v3648
    %v3650 = vpop.f32.mrf.mxu0
    %3651 = vdwg.mxu0
    %v3652 = vmax.f32 %v3597, 0.0
    %v3653 = vmax.f32 %v3649, 0.0
    %v3654 = vpack.c.bf16 %v3652, %v3652
    %v3655 = vpack.c.bf16 %v3653, %v3653
    %v3656 = vld [vmem:[#allocation10] sm:$0xf]
    %v3657 = vld [vmem:[#allocation10 + $0x4] sm:$0xf]
    %v3658 = vld [vmem:[#allocation10 + $0x8] sm:$0xf]
    %v3659 = vld [vmem:[#allocation10 + $0xc] sm:$0xf]
    %v3660 = vld [vmem:[#allocation10 + $0x10] sm:$0xf]
    %v3661 = vld [vmem:[#allocation10 + $0x14] sm:$0xf]
    %v3662 = vld [vmem:[#allocation10 + $0x18] sm:$0xf]
    %v3663 = vld [vmem:[#allocation10 + $0x1c] sm:$0xf]
    %v3664 = vld [vmem:[#allocation10 + $0x20] sm:$0xf]
    %v3665 = vld [vmem:[#allocation10 + $0x24] sm:$0xf]
    %v3666 = vld [vmem:[#allocation10 + $0x28] sm:$0xf]
    %v3667 = vld [vmem:[#allocation10 + $0x2c] sm:$0xf]
    %v3668 = vld [vmem:[#allocation10 + $0x30] sm:$0xf]
    %v3669 = vld [vmem:[#allocation10 + $0x34] sm:$0xf]
    %v3670 = vld [vmem:[#allocation10 + $0x38] sm:$0xf]
    %v3671 = vld [vmem:[#allocation10 + $0x3c] sm:$0xf]
    %v3672 = vld [vmem:[#allocation10 + $0x40] sm:$0xf]
    %v3673 = vld [vmem:[#allocation10 + $0x44] sm:$0xf]
    %v3674 = vld [vmem:[#allocation10 + $0x48] sm:$0xf]
    %v3675 = vld [vmem:[#allocation10 + $0x4c] sm:$0xf]
    %v3676 = vld [vmem:[#allocation10 + $0x50] sm:$0xf]
    %v3677 = vld [vmem:[#allocation10 + $0x54] sm:$0xf]
    %v3678 = vld [vmem:[#allocation10 + $0x58] sm:$0xf]
    %v3679 = vld [vmem:[#allocation10 + $0x5c] sm:$0xf]
    %v3680 = vld [vmem:[#allocation10 + $0x60] sm:$0xf]
    %v3681 = vld [vmem:[#allocation10 + $0x64] sm:$0xf]
    %v3682 = vld [vmem:[#allocation10 + $0x68] sm:$0xf]
    %v3683 = vld [vmem:[#allocation10 + $0x6c] sm:$0xf]
    %v3684 = vld [vmem:[#allocation10 + $0x70] sm:$0xf]
    %v3685 = vld [vmem:[#allocation10 + $0x74] sm:$0xf]
    %v3686 = vld [vmem:[#allocation10 + $0x78] sm:$0xf]
    %v3687 = vld [vmem:[#allocation10 + $0x7c] sm:$0xf]
    %v3688 = vld [vmem:[%s8] sm:$0x1]
    %v3690 = vperm.slane %v3688, 0
    %v3724 = vunpack.c.l.b16 %v3656
    %v3725 = vunpack.c.l.b16 %v3657
    %v3726 = vunpack.c.l.b16 %v3658
    %v3727 = vunpack.c.l.b16 %v3659
    %v3728 = vunpack.c.l.b16 %v3660
    %v3729 = vunpack.c.l.b16 %v3661
    %v3730 = vunpack.c.l.b16 %v3662
    %v3731 = vunpack.c.l.b16 %v3663
    %v3732 = vunpack.c.l.b16 %v3664
    %v3733 = vunpack.c.l.b16 %v3665
    %v3734 = vunpack.c.l.b16 %v3666
    %v3735 = vunpack.c.l.b16 %v3667
    %v3736 = vunpack.c.l.b16 %v3668
    %v3737 = vunpack.c.l.b16 %v3669
    %v3738 = vunpack.c.l.b16 %v3670
    %v3739 = vunpack.c.l.b16 %v3671
    %v3740 = vunpack.c.l.b16 %v3672
    %v3741 = vunpack.c.l.b16 %v3673
    %v3742 = vunpack.c.l.b16 %v3674
    %v3743 = vunpack.c.l.b16 %v3675
    %v3744 = vunpack.c.l.b16 %v3676
    %v3745 = vunpack.c.l.b16 %v3677
    %v3746 = vunpack.c.l.b16 %v3678
    %v3747 = vunpack.c.l.b16 %v3679
    %v3748 = vunpack.c.l.b16 %v3680
    %v3749 = vunpack.c.l.b16 %v3681
    %v3750 = vunpack.c.l.b16 %v3682
    %v3751 = vunpack.c.l.b16 %v3683
    %v3752 = vunpack.c.l.b16 %v3684
    %v3753 = vunpack.c.l.b16 %v3685
    %v3754 = vunpack.c.l.b16 %v3686
    %v3755 = vunpack.c.l.b16 %v3687
    %v3756 = vpack.c.b16 %v3725, %v3724
    %v3757 = vpack.c.b16 %v3727, %v3726
    %v3758 = vpack.c.b16 %v3729, %v3728
    %v3759 = vpack.c.b16 %v3731, %v3730
    %v3760 = vpack.c.b16 %v3733, %v3732
    %v3761 = vpack.c.b16 %v3735, %v3734
    %v3762 = vpack.c.b16 %v3737, %v3736
    %v3763 = vpack.c.b16 %v3739, %v3738
    %v3764 = vpack.c.b16 %v3741, %v3740
    %v3765 = vpack.c.b16 %v3743, %v3742
    %v3766 = vpack.c.b16 %v3745, %v3744
    %v3767 = vpack.c.b16 %v3747, %v3746
    %v3768 = vpack.c.b16 %v3749, %v3748
    %v3769 = vpack.c.b16 %v3751, %v3750
    %v3770 = vpack.c.b16 %v3753, %v3752
    %v3771 = vpack.c.b16 %v3755, %v3754
    %3788 = vmatpush.bf16.msra.mxu0 %v3763
    %3789 = vmatpush.bf16.msra.mxu0 %v3762
    %3790 = vmatpush.bf16.msra.mxu0 %v3761
    %3791 = vmatpush.bf16.msra.mxu0 %v3760
    %3792 = vmatpush.bf16.msra.mxu0 %v3759
    %3793 = vmatpush.bf16.msra.mxu0 %v3758
    %3794 = vmatpush.bf16.msra.mxu0 %v3757
    %3795 = vmatpush.bf16.msra.mxu0 %v3756
    %3796 = vmatmul.bf16.gmra.mxu0 %v3654
    %v3797 = vpop.f32.mrf.mxu0
    %v3798 = vadd.f32 %v3690, %v3797
    %v3799 = vpop.f32.mrf.mxu0
    %3800 = vdwg.mxu0
    %3801 = vmatpush.bf16.msra.mxu0 %v3771
    %3802 = vmatpush.bf16.msra.mxu0 %v3770
    %3803 = vmatpush.bf16.msra.mxu0 %v3769
    %3804 = vmatpush.bf16.msra.mxu0 %v3768
    %3805 = vmatpush.bf16.msra.mxu0 %v3767
    %3806 = vmatpush.bf16.msra.mxu0 %v3766
    %3807 = vmatpush.bf16.msra.mxu0 %v3765
    %3808 = vmatpush.bf16.msra.mxu0 %v3764
    %3809 = vmatmul.bf16.gmra.mxu0 %v3655
    %v3810 = vpop.f32.mrf.mxu0
    %v3811 = vadd.f32 %v3798, %v3810
    %v3812 = vpop.f32.mrf.mxu0
    %3813 = vdwg.mxu0
    %3814 = vst [vmem:[#allocation18] sm:$0xff] %v3811
    %v3815 = vpack.c.bf16 %v3811, %v3811
    %v3816 = vld [vmem:[#allocation14] sm:$0xf]
    %v3817 = vld [vmem:[#allocation14 + $0x4] sm:$0xf]
    %v3818 = vld [vmem:[#allocation14 + $0x8] sm:$0xf]
    %v3819 = vld [vmem:[#allocation14 + $0xc] sm:$0xf]
    %v3820 = vld [vmem:[#allocation14 + $0x10] sm:$0xf]
    %v3821 = vld [vmem:[#allocation14 + $0x14] sm:$0xf]
    %v3822 = vld [vmem:[#allocation14 + $0x18] sm:$0xf]
    %v3823 = vld [vmem:[#allocation14 + $0x1c] sm:$0xf]
    %v3824 = vld [vmem:[#allocation14 + $0x20] sm:$0xf]
    %v3825 = vld [vmem:[#allocation14 + $0x24] sm:$0xf]
    %v3826 = vld [vmem:[#allocation14 + $0x28] sm:$0xf]
    %v3827 = vld [vmem:[#allocation14 + $0x2c] sm:$0xf]
    %v3828 = vld [vmem:[#allocation14 + $0x30] sm:$0xf]
    %v3829 = vld [vmem:[#allocation14 + $0x34] sm:$0xf]
    %v3830 = vld [vmem:[#allocation14 + $0x38] sm:$0xf]
    %v3831 = vld [vmem:[#allocation14 + $0x3c] sm:$0xf]
    %v3832 = vld [vmem:[#allocation16] sm:$0x1]
    %v3834 = vperm.slane %v3832, 0
    %v3852 = vunpack.c.l.b16 %v3816
    %v3853 = vunpack.c.l.b16 %v3817
    %v3854 = vunpack.c.l.b16 %v3818
    %v3855 = vunpack.c.l.b16 %v3819
    %v3856 = vunpack.c.l.b16 %v3820
    %v3857 = vunpack.c.l.b16 %v3821
    %v3858 = vunpack.c.l.b16 %v3822
    %v3859 = vunpack.c.l.b16 %v3823
    %v3860 = vunpack.c.l.b16 %v3824
    %v3861 = vunpack.c.l.b16 %v3825
    %v3862 = vunpack.c.l.b16 %v3826
    %v3863 = vunpack.c.l.b16 %v3827
    %v3864 = vunpack.c.l.b16 %v3828
    %v3865 = vunpack.c.l.b16 %v3829
    %v3866 = vunpack.c.l.b16 %v3830
    %v3867 = vunpack.c.l.b16 %v3831
    %v3868 = vpack.c.b16 %v3853, %v3852
    %v3869 = vpack.c.b16 %v3855, %v3854
    %v3870 = vpack.c.b16 %v3857, %v3856
    %v3871 = vpack.c.b16 %v3859, %v3858
    %v3872 = vpack.c.b16 %v3861, %v3860
    %v3873 = vpack.c.b16 %v3863, %v3862
    %v3874 = vpack.c.b16 %v3865, %v3864
    %v3875 = vpack.c.b16 %v3867, %v3866
    %3884 = vmatpush.bf16.msra.mxu0 %v3875
    %3885 = vmatpush.bf16.msra.mxu0 %v3874
    %3886 = vmatpush.bf16.msra.mxu0 %v3873
    %3887 = vmatpush.bf16.msra.mxu0 %v3872
    %3888 = vmatpush.bf16.msra.mxu0 %v3871
    %3889 = vmatpush.bf16.msra.mxu0 %v3870
    %3890 = vmatpush.bf16.msra.mxu0 %v3869
    %3891 = vmatpush.bf16.msra.mxu0 %v3868
    %3892 = vmatmul.bf16.gmra.mxu0 %v3815
    %v3893 = vpop.f32.mrf.mxu0
    %v3894 = vadd.f32 %v3834, %v3893
    %v3895 = vpop.f32.mrf.mxu0
    %3896 = vdwg.mxu0
    %3897 = vst [vmem:[#allocation17] sm:$0xff] %v3894
    // Predicated region
    $region82: #{mlp_forward.1} parent=1 // pred_check
      _
    $region83: #{mlp_forward.1} parent=1 // pred_check_branch
      %3899 = sbr.rel (0) target = $region85
    $region84: #{mlp_forward.1} parent=1 // pred_region
      %3901 = vsyncadd [#allocation4], 0
      %s3903 = sshll.u32 [#allocation17], 4
      %s3904 = int_to_ptr.vmem [resolvable:$true] %s3903
      %s3905 = sshll.u32 %s11, 4
      %s3906 = int_to_ptr.hbm [resolvable:$true] %s3905
      %3908 = dma.vmem_to_hbm [thread:$0]  %s3904, 128, %s3906, [#allocation4]
    $region85: #{mlp_forward.1} parent=1 // pred_fallthru
      _
    // Predicated region
    $region86: #{mlp_forward.1} parent=1 // pred_check
      _
    $region87: #{mlp_forward.1} parent=1 // pred_check_branch
      %3910 = sbr.rel (0) target = $region89
    $region88: #{mlp_forward.1} parent=1 // pred_region
      %3912 = vsyncadd [#allocation19], 0
      %s3914 = sshll.u32 [#allocation18], 4
      %s3915 = int_to_ptr.vmem [resolvable:$true] %s3914
      %s3916 = sshll.u32 %s12, 4
      %s3917 = int_to_ptr.hbm [resolvable:$true] %s3916
      %3919 = dma.vmem_to_hbm [thread:$0]  %s3915, 128, %s3917, [#allocation19]
    $region89: #{mlp_forward.1} parent=1 // pred_fallthru
      _
    // Predicated region
    $region90: #{mlp_forward.1} parent=1 // pred_check
      _
    $region91: #{mlp_forward.1} parent=1 // pred_check_branch
      %3921 = sbr.rel (0) target = $region93
    $region92: #{mlp_forward.1} parent=1 // pred_region
      %3923 = dma.done [#allocation4], 128
    $region93: #{mlp_forward.1} parent=1 // pred_fallthru
      _
    // Predicated region
    $region94: #{mlp_forward.1} parent=1 // pred_check
      _
    $region95: #{mlp_forward.1} parent=1 // pred_check_branch
      %3925 = sbr.rel (0) target = $region97
    $region96: #{mlp_forward.1} parent=1 // pred_region
      %3927 = dma.done [#allocation19], 128
    $region97: #{mlp_forward.1} parent=1 // pred_fallthru
      _
    %3928 = vsyncpa [#allocation3], 1
    %3929 = vsyncpa [#allocation6], 1
    %3930 = vsyncpa [#allocation9], 1
    %3931 = vsyncpa [#allocation12], 1
    %3932 = vsyncpa [#allocation15], 1
    %3933 = vsyncpa [#allocation4], 1
    %3934 = vsyncpa [#allocation19], 1

</llo_original>
